<compile_context>
chip_gen: v5e
topology: v5e:2x2
jax: 0.10.0
libtpu: 0.0.40
codegen_flags: <defaults>
</compile_context>

<pallas_src>
import jax
import jax.numpy as jnp
from jax.experimental import pallas as pl
from jax.experimental.pallas import tpu as pltpu

F_IMG = 784                 # flattened image features
H1, H2, H3 = 1024, 512, 256
MAX_B_TILE = 256            # batch tile (rows per grid step)


def _round_up(n, m):
    return (n + m - 1) // m * m


def _leaky_relu(x, slope=0.2):
    # slope < 1 => leaky relu == max(x, slope * x); one mul + one max on the VPU.
    return jnp.maximum(x, slope * x)


def disc_mlp_kernel(x_ref, lb_ref, w1_ref, w2_ref, b2_ref,
                    w3_ref, b3_ref, w4_ref, b4_ref, o_ref):
    # Layer 1: (Bt, 784)bf16 @ (784, 1024)bf16 -> f32 acc; label-table row
    # (which already contains b1) added as a per-row bias.
    h = jnp.dot(x_ref[...], w1_ref[...], preferred_element_type=jnp.float32)
    h = _leaky_relu(h + lb_ref[...].astype(jnp.float32))

    # Layer 2: (Bt, 1024) @ (1024, 512)
    h = jnp.dot(h.astype(jnp.bfloat16), w2_ref[...],
                preferred_element_type=jnp.float32)
    h = _leaky_relu(h + b2_ref[...])

    # Layer 3: (Bt, 512) @ (512, 256)
    h = jnp.dot(h.astype(jnp.bfloat16), w3_ref[...],
                preferred_element_type=jnp.float32)
    h = _leaky_relu(h + b3_ref[...])

    # Layer 4 (256 -> 1) as multiply + lane (XLU) reduction, then Sigmoid.
    logits = jnp.sum(h * w4_ref[...], axis=-1, keepdims=True) + b4_ref[...]
    o_ref[...] = 1.0 / (1.0 + jnp.exp(-logits))


def prepare_params(params):
    """One-time parameter prep: bf16 weights + folded label/bias table."""
    w1 = params["w1"]                                    # (794, 1024) f32
    # table[l] = emb[l] @ W1[784:794, :] + b1   -> per-row additive bias.
    table = jnp.dot(params["emb"], w1[F_IMG:, :]) + params["b1"].reshape(1, H1)
    return {
        "w1a": w1[:F_IMG, :].astype(jnp.bfloat16),       # (784, 1024)
        "table": table.astype(jnp.float32),              # (10, 1024) f32 (tiny)
        "w2": params["w2"].astype(jnp.bfloat16),         # (1024, 512)
        "b2": params["b2"].reshape(1, H2).astype(jnp.float32),
        "w3": params["w3"].astype(jnp.bfloat16),         # (512, 256)
        "b3": params["b3"].reshape(1, H3).astype(jnp.float32),
        "w4": params["w4"].reshape(1, H3).astype(jnp.float32),   # (1, 256)
        "b4": params["b4"].reshape(1, 1).astype(jnp.float32),
    }


@jax.jit
def discriminator_forward(x, labels, prepared):
    """x: (B, 1, 28, 28) float32, labels: (B,) int32 in [0, 10) -> (B,) probs."""
    B = x.shape[0]
    x_flat = x.reshape(B, F_IMG).astype(jnp.bfloat16)
    lb = jnp.take(prepared["table"], labels, axis=0)          # (B, 1024) f32

    # Batch padding / tiling (static shapes under jit).
    b_pad = _round_up(B, 8)
    b_tile = min(b_pad, MAX_B_TILE)
    b_pad = _round_up(b_pad, b_tile)
    if b_pad != B:
        x_flat = jnp.pad(x_flat, ((0, b_pad - B), (0, 0)))
        lb = jnp.pad(lb, ((0, b_pad - B), (0, 0)))
    grid = (b_pad // b_tile,)

    # Per-row inputs step along the batch grid axis; weights stay VMEM-resident.
    row_spec = lambda cols: pl.BlockSpec((b_tile, cols), lambda i: (i, 0))
    const_spec = lambda shape: pl.BlockSpec(shape, lambda i: (0, 0))

    flops = 2 * b_pad * (F_IMG * H1 + H1 * H2 + H2 * H3 + H3 * 1)
    w_bytes = 2 * (F_IMG * H1 + H1 * H2 + H2 * H3) + 4 * (H2 + H3 + H3 + 1)
    io_bytes = b_pad * (2 * F_IMG + 4 * H1 + 4)
    cost = pl.CostEstimate(flops=flops, transcendentals=b_pad,
                           bytes_accessed=w_bytes + io_bytes)

    out_padded = pl.pallas_call(
        disc_mlp_kernel,
        out_shape=jax.ShapeDtypeStruct((b_pad, 1), jnp.float32),
        grid=grid,
        in_specs=[
            row_spec(F_IMG),           # x  (b_tile, 784) bf16
            row_spec(H1),              # lb (b_tile, 1024) f32 (includes b1)
            const_spec((F_IMG, H1)),   # w1a
            const_spec((H1, H2)),      # w2
            const_spec((1, H2)),       # b2
            const_spec((H2, H3)),      # w3
            const_spec((1, H3)),       # b3
            const_spec((1, H3)),       # w4 (row vector)
            const_spec((1, 1)),        # b4
        ],
        out_specs=pl.BlockSpec((b_tile, 1), lambda i: (i, 0)),
        compiler_params=pltpu.CompilerParams(
            dimension_semantics=("parallel",)),
        cost_estimate=cost,
    )(
        x_flat, lb,
        prepared["w1a"],
        prepared["w2"], prepared["b2"],
        prepared["w3"], prepared["b3"],
        prepared["w4"], prepared["b4"],
    )

    return out_padded[:B, 0]


def init_params(key):
    """Deterministic parameter init mirroring PyTorch module shapes."""
    ks = jax.random.split(key, 9)

    def linear(kw, kb, fan_in, fan_out):
        bound = 1.0 / jnp.sqrt(fan_in)
        w = jax.random.uniform(kw, (fan_in, fan_out), jnp.float32, -bound, bound)
        b = jax.random.uniform(kb, (fan_out,), jnp.float32, -bound, bound)
        return w, b

    emb = jax.random.normal(ks[0], (10, 10), jnp.float32)   # nn.Embedding(10, 10)
    w1, b1 = linear(ks[1], ks[2], 794, H1)
    w2, b2 = linear(ks[3], ks[4], H1, H2)
    w3, b3 = linear(ks[5], ks[6], H2, H3)
    w4, b4 = linear(ks[7], ks[8], H3, 1)
    return {"emb": emb, "w1": w1, "b1": b1, "w2": w2, "b2": b2,
            "w3": w3, "b3": b3, "w4": w4, "b4": b4}


if __name__ == "__main__":
    key = jax.random.PRNGKey(0)
    k_params, k_x, k_lab = jax.random.split(key, 3)

    params = init_params(k_params)
    prepared = prepare_params(params)            # one-time weight prep

    B = 2
    x = jax.random.normal(k_x, (B, 1, 28, 28), jnp.float32)
    labels = jax.random.randint(k_lab, (B,), 0, 10, jnp.int32)

    out = discriminator_forward(x, labels, prepared)
    out = jax.block_until_ready(out)

    assert out.shape == (B,), out.shape
    assert bool(jnp.all(jnp.isfinite(out)))
    assert bool(jnp.all((out >= 0.0) & (out <= 1.0)))
    print("KERNEL_OK")
</pallas_src>

<mosaic_0001>
module attributes {stable_mosaic.version = 11 : i64} {
  func.func @disc_mlp_kernel(%arg0: i32, %arg1: memref<8x784xbf16, #tpu.memory_space<vmem>>, %arg2: memref<8x1024xf32, #tpu.memory_space<vmem>>, %arg3: memref<784x1024xbf16, #tpu.memory_space<vmem>>, %arg4: memref<1024x512xbf16, #tpu.memory_space<vmem>>, %arg5: memref<1x512xf32, #tpu.memory_space<vmem>>, %arg6: memref<512x256xbf16, #tpu.memory_space<vmem>>, %arg7: memref<1x256xf32, #tpu.memory_space<vmem>>, %arg8: memref<1x256xf32, #tpu.memory_space<vmem>>, %arg9: memref<1x1xf32, #tpu.memory_space<vmem>>, %arg10: memref<8x1xf32, #tpu.memory_space<vmem>>) attributes {dimension_semantics = [#tpu.dimension_semantics<parallel>], iteration_bounds = array<i64: 1>, scalar_prefetch = 0 : i64, scratch_operands = 0 : i64, tpu.core_type = #tpu.core_type<tc>, window_params = [{transform_indices = @transform_0, window_bounds = array<i64: 8, 784>}, {transform_indices = @transform_1, window_bounds = array<i64: 8, 1024>}, {pipeline_mode = #tpu.pipeline_mode<synchronous>, transform_indices = @transform_2, window_bounds = array<i64: 784, 1024>}, {pipeline_mode = #tpu.pipeline_mode<synchronous>, transform_indices = @transform_3, window_bounds = array<i64: 1024, 512>}, {pipeline_mode = #tpu.pipeline_mode<synchronous>, transform_indices = @transform_4, window_bounds = array<i64: 1, 512>}, {pipeline_mode = #tpu.pipeline_mode<synchronous>, transform_indices = @transform_5, window_bounds = array<i64: 512, 256>}, {pipeline_mode = #tpu.pipeline_mode<synchronous>, transform_indices = @transform_6, window_bounds = array<i64: 1, 256>}, {pipeline_mode = #tpu.pipeline_mode<synchronous>, transform_indices = @transform_7, window_bounds = array<i64: 1, 256>}, {pipeline_mode = #tpu.pipeline_mode<synchronous>, transform_indices = @transform_8, window_bounds = array<i64: 1, 1>}, {transform_indices = @transform_9, window_bounds = array<i64: 8, 1>}]} {
    %c0 = arith.constant 0 : index
    %c0_0 = arith.constant 0 : index
    %0 = vector.load %arg1[%c0, %c0_0] : memref<8x784xbf16, #tpu.memory_space<vmem>>, vector<8x784xbf16>
    %c0_1 = arith.constant 0 : index
    %c0_2 = arith.constant 0 : index
    %1 = vector.load %arg3[%c0_1, %c0_2] : memref<784x1024xbf16, #tpu.memory_space<vmem>>, vector<784x1024xbf16>
    %cst = arith.constant dense<0.000000e+00> : vector<8x1024xf32>
    %2 = tpu.matmul %0, %1, %cst {dimension_numbers = #tpu.dot_dimension_numbers<[1], [0], [0], [1], [0, 0, 1, 1], [], []>} : vector<8x784xbf16>, vector<784x1024xbf16>, vector<8x1024xf32> -> vector<8x1024xf32>
    %c0_3 = arith.constant 0 : index
    %c0_4 = arith.constant 0 : index
    %3 = vector.load %arg2[%c0_3, %c0_4] : memref<8x1024xf32, #tpu.memory_space<vmem>>, vector<8x1024xf32>
    %4 = arith.addf %2, %3 : vector<8x1024xf32>
    %cst_5 = arith.constant 2.000000e-01 : f32
    %5 = vector.broadcast %cst_5 : f32 to vector<8x1024xf32>
    %6 = arith.mulf %5, %4 : vector<8x1024xf32>
    %7 = arith.maximumf %4, %6 : vector<8x1024xf32>
    %8 = arith.truncf %7 : vector<8x1024xf32> to vector<8x1024xbf16>
    %c0_6 = arith.constant 0 : index
    %c0_7 = arith.constant 0 : index
    %9 = vector.load %arg4[%c0_6, %c0_7] : memref<1024x512xbf16, #tpu.memory_space<vmem>>, vector<1024x512xbf16>
    %cst_8 = arith.constant dense<0.000000e+00> : vector<8x512xf32>
    %10 = tpu.matmul %8, %9, %cst_8 {dimension_numbers = #tpu.dot_dimension_numbers<[1], [0], [0], [1], [0, 0, 1, 1], [], []>} : vector<8x1024xbf16>, vector<1024x512xbf16>, vector<8x512xf32> -> vector<8x512xf32>
    %c0_9 = arith.constant 0 : index
    %c0_10 = arith.constant 0 : index
    %11 = vector.load %arg5[%c0_9, %c0_10] : memref<1x512xf32, #tpu.memory_space<vmem>>, vector<1x512xf32>
    %12 = vector.broadcast %11 : vector<1x512xf32> to vector<8x512xf32>
    %13 = arith.addf %10, %12 : vector<8x512xf32>
    %cst_11 = arith.constant 2.000000e-01 : f32
    %14 = vector.broadcast %cst_11 : f32 to vector<8x512xf32>
    %15 = arith.mulf %14, %13 : vector<8x512xf32>
    %16 = arith.maximumf %13, %15 : vector<8x512xf32>
    %17 = arith.truncf %16 : vector<8x512xf32> to vector<8x512xbf16>
    %c0_12 = arith.constant 0 : index
    %c0_13 = arith.constant 0 : index
    %18 = vector.load %arg6[%c0_12, %c0_13] : memref<512x256xbf16, #tpu.memory_space<vmem>>, vector<512x256xbf16>
    %cst_14 = arith.constant dense<0.000000e+00> : vector<8x256xf32>
    %19 = tpu.matmul %17, %18, %cst_14 {dimension_numbers = #tpu.dot_dimension_numbers<[1], [0], [0], [1], [0, 0, 1, 1], [], []>} : vector<8x512xbf16>, vector<512x256xbf16>, vector<8x256xf32> -> vector<8x256xf32>
    %c0_15 = arith.constant 0 : index
    %c0_16 = arith.constant 0 : index
    %20 = vector.load %arg7[%c0_15, %c0_16] : memref<1x256xf32, #tpu.memory_space<vmem>>, vector<1x256xf32>
    %21 = vector.broadcast %20 : vector<1x256xf32> to vector<8x256xf32>
    %22 = arith.addf %19, %21 : vector<8x256xf32>
    %cst_17 = arith.constant 2.000000e-01 : f32
    %23 = vector.broadcast %cst_17 : f32 to vector<8x256xf32>
    %24 = arith.mulf %23, %22 : vector<8x256xf32>
    %25 = arith.maximumf %22, %24 : vector<8x256xf32>
    %c0_18 = arith.constant 0 : index
    %c0_19 = arith.constant 0 : index
    %26 = vector.load %arg8[%c0_18, %c0_19] : memref<1x256xf32, #tpu.memory_space<vmem>>, vector<1x256xf32>
    %27 = vector.broadcast %26 : vector<1x256xf32> to vector<8x256xf32>
    %28 = arith.mulf %25, %27 : vector<8x256xf32>
    %cst_20 = arith.constant dense<0.000000e+00> : vector<8xf32>
    %29 = vector.multi_reduction <add>, %28, %cst_20 [1] : vector<8x256xf32> to vector<8xf32>
    %30 = vector.shape_cast %29 : vector<8xf32> to vector<8x1xf32>
    %c0_21 = arith.constant 0 : index
    %c0_22 = arith.constant 0 : index
    %31 = vector.load %arg9[%c0_21, %c0_22] : memref<1x1xf32, #tpu.memory_space<vmem>>, vector<1x1xf32>
    %32 = vector.broadcast %31 : vector<1x1xf32> to vector<8x1xf32>
    %33 = arith.addf %30, %32 : vector<8x1xf32>
    %cst_23 = arith.constant 0.000000e+00 : f32
    %34 = vector.broadcast %cst_23 : f32 to vector<8x1xf32>
    %35 = arith.subf %34, %33 : vector<8x1xf32>
    %36 = math.exp %35 : vector<8x1xf32>
    %cst_24 = arith.constant 1.000000e+00 : f32
    %37 = vector.broadcast %cst_24 : f32 to vector<8x1xf32>
    %38 = arith.addf %37, %36 : vector<8x1xf32>
    %cst_25 = arith.constant 1.000000e+00 : f32
    %39 = vector.broadcast %cst_25 : f32 to vector<8x1xf32>
    %40 = arith.divf %39, %38 : vector<8x1xf32>
    %c0_26 = arith.constant 0 : index
    %c0_27 = arith.constant 0 : index
    %41 = vector.load %arg10[%c0_26, %c0_27] : memref<8x1xf32, #tpu.memory_space<vmem>>, vector<8x1xf32>
    tpu.vector_store %arg10[%c0_26, %c0_27], %40 {strides = array<i32>} : memref<8x1xf32, #tpu.memory_space<vmem>>, vector<8x1xf32>,
    return
  }
  func.func @transform_0(%arg0: i32) -> (i32, i32) {
    %c0_i32 = arith.constant 0 : i32
    %c0_i32_0 = arith.constant 0 : i32
    return %arg0, %c0_i32 : i32, i32
  }
  func.func @transform_1(%arg0: i32) -> (i32, i32) {
    %c0_i32 = arith.constant 0 : i32
    %c0_i32_0 = arith.constant 0 : i32
    return %arg0, %c0_i32 : i32, i32
  }
  func.func @transform_2(%arg0: i32) -> (i32, i32) {
    %c0_i32 = arith.constant 0 : i32
    %c0_i32_0 = arith.constant 0 : i32
    %c0_i32_1 = arith.constant 0 : i32
    return %c0_i32, %c0_i32_0 : i32, i32
  }
  func.func @transform_3(%arg0: i32) -> (i32, i32) {
    %c0_i32 = arith.constant 0 : i32
    %c0_i32_0 = arith.constant 0 : i32
    %c0_i32_1 = arith.constant 0 : i32
    return %c0_i32, %c0_i32_0 : i32, i32
  }
  func.func @transform_4(%arg0: i32) -> (i32, i32) {
    %c0_i32 = arith.constant 0 : i32
    %c0_i32_0 = arith.constant 0 : i32
    %c0_i32_1 = arith.constant 0 : i32
    return %c0_i32, %c0_i32_0 : i32, i32
  }
  func.func @transform_5(%arg0: i32) -> (i32, i32) {
    %c0_i32 = arith.constant 0 : i32
    %c0_i32_0 = arith.constant 0 : i32
    %c0_i32_1 = arith.constant 0 : i32
    return %c0_i32, %c0_i32_0 : i32, i32
  }
  func.func @transform_6(%arg0: i32) -> (i32, i32) {
    %c0_i32 = arith.constant 0 : i32
    %c0_i32_0 = arith.constant 0 : i32
    %c0_i32_1 = arith.constant 0 : i32
    return %c0_i32, %c0_i32_0 : i32, i32
  }
  func.func @transform_7(%arg0: i32) -> (i32, i32) {
    %c0_i32 = arith.constant 0 : i32
    %c0_i32_0 = arith.constant 0 : i32
    %c0_i32_1 = arith.constant 0 : i32
    return %c0_i32, %c0_i32_0 : i32, i32
  }
  func.func @transform_8(%arg0: i32) -> (i32, i32) {
    %c0_i32 = arith.constant 0 : i32
    %c0_i32_0 = arith.constant 0 : i32
    %c0_i32_1 = arith.constant 0 : i32
    return %c0_i32, %c0_i32_0 : i32, i32
  }
  func.func @transform_9(%arg0: i32) -> (i32, i32) {
    %c0_i32 = arith.constant 0 : i32
    %c0_i32_0 = arith.constant 0 : i32
    return %arg0, %c0_i32 : i32, i32
  }
}

</mosaic_0001>

<llo_original>
// kernel: discriminator_forward.1
$region0: #{discriminator_forward.1}
  #allocation0 [shape = 'u32[]', space=smem, size = 0x4, offset = 0x4, fixed_abs, tag = 'smem constant byte address 0x4 - core index']
  #allocation1 [shape = 'u32[72,128]{1,0:T(1,128)}', space=vmem, size = 0x9000, scoped, tag = 'internal scratch']
  #allocation2 [shape = 'f32[1,1]{1,0:T(1,128)S(1)}', space=vmem, size = 0x200, scoped, tag = 'scoped memory for discriminator_forward.1']
  %s0 = inlined_call_operand.vmem [shape: bf16[8,784], index: 0, kind: input, shape index: {}]
  %s1 = inlined_call_operand.vmem [shape: f32[8,1024], index: 1, kind: input, shape index: {}]
  %s2 = inlined_call_operand.hbm [shape: bf16[784,1024], index: 2, kind: input, shape index: {}]
  %s3 = inlined_call_operand.hbm [shape: bf16[1024,512], index: 3, kind: input, shape index: {}]
  %s4 = inlined_call_operand.hbm [shape: f32[1,512], index: 4, kind: input, shape index: {}]
  %s5 = inlined_call_operand.hbm [shape: bf16[512,256], index: 5, kind: input, shape index: {}]
  %s6 = inlined_call_operand.hbm [shape: f32[1,256], index: 6, kind: input, shape index: {}]
  %s7 = inlined_call_operand.hbm [shape: f32[1,256], index: 7, kind: input, shape index: {}]
  %s8 = inlined_call_operand.<no memory space> [shape: f32[1,1], index: 8, kind: input, shape index: {}]
  %s9 = inlined_call_operand.vmem [shape: f32[8,1], index: 9, kind: output, shape index: {}]
  %s10 = sld [smem:[#allocation0]]
  $region70: #{discriminator_forward.1} parent=0
    _
  %s12 = ssub.s32 1, %s10
  %s13 = scalar_select 0, %s12, %s10
  %v14 = vstv %s8
  %15 = vst [vmem:[#allocation2] sm:$0x1] %v14
  $region1: #{discriminator_forward.1} parent=0
    #allocation3 [shape = 'u8[1605632]{0}', space=vmem, size = 0x188000, scoped, tag = 'input window, operand 2, single buffered']
    #allocation4 [shape = 's32[1]{0}', space=sflag, size = 0x4, scoped, tag = 'scoped memory for discriminator_forward.1']
    #allocation5 [shape = 'u8[1048576]{0}', space=vmem, size = 0x100000, scoped, tag = 'input window, operand 3, single buffered']
    #allocation6 [shape = 's32[1]{0}', space=sflag, size = 0x4, scoped, tag = 'scoped memory for discriminator_forward.1']
    #allocation7 [shape = 'u8[2048]{0}', space=vmem, size = 0x800, scoped, tag = 'input window, operand 4, single buffered']
    #allocation8 [shape = 'u8[262144]{0}', space=vmem, size = 0x40000, scoped, tag = 'input window, operand 5, single buffered']
    #allocation9 [shape = 's32[1]{0}', space=sflag, size = 0x4, scoped, tag = 'scoped memory for discriminator_forward.1']
    #allocation10 [shape = 'u8[1024]{0}', space=vmem, size = 0x400, scoped, tag = 'input window, operand 6, single buffered']
    #allocation11 [shape = 'u8[1024]{0}', space=vmem, size = 0x400, scoped, tag = 'input window, operand 7, single buffered']
    #allocation12 [shape = 's32[1]{0}', space=sflag, size = 0x4, scoped, tag = 'scoped memory for discriminator_forward.1']
    %16 = vsyncpa [#allocation4], 0
    %17 = vsyncpa [#allocation6], 0
    %18 = vsyncpa [#allocation9], 0
    %19 = vsyncpa [#allocation12], 0
    // Predicated region
    $region2: #{discriminator_forward.1} parent=1 // pred_check
      _
    $region3: #{discriminator_forward.1} parent=1 // pred_check_branch
      %21 = sbr.rel (0) target = $region5
    $region4: #{discriminator_forward.1} parent=1 // pred_region
      _
    $region5: #{discriminator_forward.1} parent=1 // pred_fallthru
      _
    // Predicated region
    $region6: #{discriminator_forward.1} parent=1 // pred_check
      _
    $region7: #{discriminator_forward.1} parent=1 // pred_check_branch
      %23 = sbr.rel (0) target = $region9
    $region8: #{discriminator_forward.1} parent=1 // pred_region
      _
    $region9: #{discriminator_forward.1} parent=1 // pred_fallthru
      _
    // Predicated region
    $region10: #{discriminator_forward.1} parent=1 // pred_check
      _
    $region11: #{discriminator_forward.1} parent=1 // pred_check_branch
      %25 = sbr.rel (0) target = $region13
    $region12: #{discriminator_forward.1} parent=1 // pred_region
      %27 = vsyncadd [#allocation4], 0
      %s28 = sshll.u32 %s2, 4
      %s29 = int_to_ptr.hbm [resolvable:$true] %s28
      %s30 = sshll.u32 [#allocation3], 4
      %s31 = int_to_ptr.vmem [resolvable:$true] %s30
      %36 = dma.hbm_to_vmem [thread:$0]  %s29, 50176, %s31, [#allocation4], 512, 512, 32
    $region13: #{discriminator_forward.1} parent=1 // pred_fallthru
      _
    // Predicated region
    $region14: #{discriminator_forward.1} parent=1 // pred_check
      _
    $region15: #{discriminator_forward.1} parent=1 // pred_check_branch
      %38 = sbr.rel (0) target = $region17
    $region16: #{discriminator_forward.1} parent=1 // pred_region
      %40 = vsyncadd [#allocation6], 0
      %s41 = sshll.u32 %s3, 4
      %s42 = int_to_ptr.hbm [resolvable:$true] %s41
      %s43 = sshll.u32 [#allocation5], 4
      %s44 = int_to_ptr.vmem [resolvable:$true] %s43
      %49 = dma.hbm_to_vmem [thread:$0]  %s42, 32768, %s44, [#allocation6], 256, 256, 16
    $region17: #{discriminator_forward.1} parent=1 // pred_fallthru
      _
    // Predicated region
    $region18: #{discriminator_forward.1} parent=1 // pred_check
      _
    $region19: #{discriminator_forward.1} parent=1 // pred_check_branch
      %51 = sbr.rel (0) target = $region21
    $region20: #{discriminator_forward.1} parent=1 // pred_region
      %53 = vsyncadd [#allocation6], 0
      %s55 = sshll.u32 %s4, 4
      %s56 = int_to_ptr.hbm [resolvable:$true] %s55
      %s57 = sshll.u32 [#allocation7], 4
      %s58 = int_to_ptr.vmem [resolvable:$true] %s57
      %60 = dma.hbm_to_vmem [thread:$0]  %s56, 64, %s58, [#allocation6]
    $region21: #{discriminator_forward.1} parent=1 // pred_fallthru
      _
    // Predicated region
    $region22: #{discriminator_forward.1} parent=1 // pred_check
      _
    $region23: #{discriminator_forward.1} parent=1 // pred_check_branch
      %62 = sbr.rel (0) target = $region25
    $region24: #{discriminator_forward.1} parent=1 // pred_region
      %64 = vsyncadd [#allocation9], 0
      %s65 = sshll.u32 %s5, 4
      %s66 = int_to_ptr.hbm [resolvable:$true] %s65
      %s67 = sshll.u32 [#allocation8], 4
      %s68 = int_to_ptr.vmem [resolvable:$true] %s67
      %73 = dma.hbm_to_vmem [thread:$0]  %s66, 8192, %s68, [#allocation9], 128, 128, 8
    $region25: #{discriminator_forward.1} parent=1 // pred_fallthru
      _
    // Predicated region
    $region26: #{discriminator_forward.1} parent=1 // pred_check
      _
    $region27: #{discriminator_forward.1} parent=1 // pred_check_branch
      %75 = sbr.rel (0) target = $region29
    $region28: #{discriminator_forward.1} parent=1 // pred_region
      %77 = vsyncadd [#allocation9], 0
      %s79 = sshll.u32 %s6, 4
      %s80 = int_to_ptr.hbm [resolvable:$true] %s79
      %s81 = sshll.u32 [#allocation10], 4
      %s82 = int_to_ptr.vmem [resolvable:$true] %s81
      %84 = dma.hbm_to_vmem [thread:$0]  %s80, 32, %s82, [#allocation9]
    $region29: #{discriminator_forward.1} parent=1 // pred_fallthru
      _
    // Predicated region
    $region30: #{discriminator_forward.1} parent=1 // pred_check
      _
    $region31: #{discriminator_forward.1} parent=1 // pred_check_branch
      %86 = sbr.rel (0) target = $region33
    $region32: #{discriminator_forward.1} parent=1 // pred_region
      %88 = vsyncadd [#allocation12], 0
      %s90 = sshll.u32 %s7, 4
      %s91 = int_to_ptr.hbm [resolvable:$true] %s90
      %s92 = sshll.u32 [#allocation11], 4
      %s93 = int_to_ptr.vmem [resolvable:$true] %s92
      %95 = dma.hbm_to_vmem [thread:$0]  %s91, 32, %s93, [#allocation12]
    $region33: #{discriminator_forward.1} parent=1 // pred_fallthru
      _
    // Predicated region
    $region34: #{discriminator_forward.1} parent=1 // pred_check
      _
    $region35: #{discriminator_forward.1} parent=1 // pred_check_branch
      %97 = sbr.rel (0) target = $region37
    $region36: #{discriminator_forward.1} parent=1 // pred_region
      _
    $region37: #{discriminator_forward.1} parent=1 // pred_fallthru
      _
    // Predicated region
    $region38: #{discriminator_forward.1} parent=1 // pred_check
      _
    $region39: #{discriminator_forward.1} parent=1 // pred_check_branch
      %99 = sbr.rel (0) target = $region41
    $region40: #{discriminator_forward.1} parent=1 // pred_region
      %101 = dma.done [#allocation4], 50176
    $region41: #{discriminator_forward.1} parent=1 // pred_fallthru
      _
    // Predicated region
    $region42: #{discriminator_forward.1} parent=1 // pred_check
      _
    $region43: #{discriminator_forward.1} parent=1 // pred_check_branch
      %103 = sbr.rel (0) target = $region45
    $region44: #{discriminator_forward.1} parent=1 // pred_region
      %105 = dma.done [#allocation6], 32768
    $region45: #{discriminator_forward.1} parent=1 // pred_fallthru
      _
    // Predicated region
    $region46: #{discriminator_forward.1} parent=1 // pred_check
      _
    $region47: #{discriminator_forward.1} parent=1 // pred_check_branch
      %107 = sbr.rel (0) target = $region49
    $region48: #{discriminator_forward.1} parent=1 // pred_region
      %109 = dma.done [#allocation6], 64
    $region49: #{discriminator_forward.1} parent=1 // pred_fallthru
      _
    // Predicated region
    $region50: #{discriminator_forward.1} parent=1 // pred_check
      _
    $region51: #{discriminator_forward.1} parent=1 // pred_check_branch
      %111 = sbr.rel (0) target = $region53
    $region52: #{discriminator_forward.1} parent=1 // pred_region
      %113 = dma.done [#allocation9], 8192
    $region53: #{discriminator_forward.1} parent=1 // pred_fallthru
      _
    // Predicated region
    $region54: #{discriminator_forward.1} parent=1 // pred_check
      _
    $region55: #{discriminator_forward.1} parent=1 // pred_check_branch
      %115 = sbr.rel (0) target = $region57
    $region56: #{discriminator_forward.1} parent=1 // pred_region
      %117 = dma.done [#allocation9], 32
    $region57: #{discriminator_forward.1} parent=1 // pred_fallthru
      _
    // Predicated region
    $region58: #{discriminator_forward.1} parent=1 // pred_check
      _
    $region59: #{discriminator_forward.1} parent=1 // pred_check_branch
      %119 = sbr.rel (0) target = $region61
    $region60: #{discriminator_forward.1} parent=1 // pred_region
      %121 = dma.done [#allocation12], 32
    $region61: #{discriminator_forward.1} parent=1 // pred_fallthru
      _
    %v123 = vld [vmem:[%s0] sm:$0xff]
    %v124 = vld [vmem:[%s0 + $0x8] sm:$0xff]
    %v125 = vld [vmem:[%s0 + $0x10] sm:$0xff]
    %v126 = vld [vmem:[%s0 + $0x18] sm:$0xf]
    %v127 = vld [vmem:[#allocation3] sm:$0xff]
    %v128 = vld [vmem:[#allocation3 + $0x8] sm:$0xff]
    %v129 = vld [vmem:[#allocation3 + $0x10] sm:$0xff]
    %v130 = vld [vmem:[#allocation3 + $0x18] sm:$0xff]
    %v131 = vld [vmem:[#allocation3 + $0x20] sm:$0xff]
    %v132 = vld [vmem:[#allocation3 + $0x28] sm:$0xff]
    %v133 = vld [vmem:[#allocation3 + $0x30] sm:$0xff]
    %v134 = vld [vmem:[#allocation3 + $0x38] sm:$0xff]
    %v135 = vld [vmem:[#allocation3 + $0x40] sm:$0xff]
    %v136 = vld [vmem:[#allocation3 + $0x48] sm:$0xff]
    %v137 = vld [vmem:[#allocation3 + $0x50] sm:$0xff]
    %v138 = vld [vmem:[#allocation3 + $0x58] sm:$0xff]
    %v139 = vld [vmem:[#allocation3 + $0x60] sm:$0xff]
    %v140 = vld [vmem:[#allocation3 + $0x68] sm:$0xff]
    %v141 = vld [vmem:[#allocation3 + $0x70] sm:$0xff]
    %v142 = vld [vmem:[#allocation3 + $0x78] sm:$0xff]
    %v143 = vld [vmem:[#allocation3 + $0x80] sm:$0xff]
    %v144 = vld [vmem:[#allocation3 + $0x88] sm:$0xff]
    %v145 = vld [vmem:[#allocation3 + $0x90] sm:$0xff]
    %v146 = vld [vmem:[#allocation3 + $0x98] sm:$0xff]
    %v147 = vld [vmem:[#allocation3 + $0xa0] sm:$0xff]
    %v148 = vld [vmem:[#allocation3 + $0xa8] sm:$0xff]
    %v149 = vld [vmem:[#allocation3 + $0xb0] sm:$0xff]
    %v150 = vld [vmem:[#allocation3 + $0xb8] sm:$0xff]
    %v151 = vld [vmem:[#allocation3 + $0xc0] sm:$0xff]
    %v152 = vld [vmem:[#allocation3 + $0xc8] sm:$0xff]
    %v153 = vld [vmem:[#allocation3 + $0xd0] sm:$0xff]
    %v154 = vld [vmem:[#allocation3 + $0xd8] sm:$0xff]
    %v155 = vld [vmem:[#allocation3 + $0xe0] sm:$0xff]
    %v156 = vld [vmem:[#allocation3 + $0xe8] sm:$0xff]
    %v157 = vld [vmem:[#allocation3 + $0xf0] sm:$0xff]
    %v158 = vld [vmem:[#allocation3 + $0xf8] sm:$0xff]
    %v159 = vld [vmem:[#allocation3 + $0x100] sm:$0xff]
    %v160 = vld [vmem:[#allocation3 + $0x108] sm:$0xff]
    %v161 = vld [vmem:[#allocation3 + $0x110] sm:$0xff]
    %v162 = vld [vmem:[#allocation3 + $0x118] sm:$0xff]
    %v163 = vld [vmem:[#allocation3 + $0x120] sm:$0xff]
    %v164 = vld [vmem:[#allocation3 + $0x128] sm:$0xff]
    %v165 = vld [vmem:[#allocation3 + $0x130] sm:$0xff]
    %v166 = vld [vmem:[#allocation3 + $0x138] sm:$0xff]
    %v167 = vld [vmem:[#allocation3 + $0x140] sm:$0xff]
    %v168 = vld [vmem:[#allocation3 + $0x148] sm:$0xff]
    %v169 = vld [vmem:[#allocation3 + $0x150] sm:$0xff]
    %v170 = vld [vmem:[#allocation3 + $0x158] sm:$0xff]
    %v171 = vld [vmem:[#allocation3 + $0x160] sm:$0xff]
    %v172 = vld [vmem:[#allocation3 + $0x168] sm:$0xff]
    %v173 = vld [vmem:[#allocation3 + $0x170] sm:$0xff]
    %v174 = vld [vmem:[#allocation3 + $0x178] sm:$0xff]
    %v175 = vld [vmem:[#allocation3 + $0x180] sm:$0xff]
    %v176 = vld [vmem:[#allocation3 + $0x188] sm:$0xff]
    %v177 = vld [vmem:[#allocation3 + $0x190] sm:$0xff]
    %v178 = vld [vmem:[#allocation3 + $0x198] sm:$0xff]
    %v179 = vld [vmem:[#allocation3 + $0x1a0] sm:$0xff]
    %v180 = vld [vmem:[#allocation3 + $0x1a8] sm:$0xff]
    %v181 = vld [vmem:[#allocation3 + $0x1b0] sm:$0xff]
    %v182 = vld [vmem:[#allocation3 + $0x1b8] sm:$0xff]
    %v183 = vld [vmem:[#allocation3 + $0x1c0] sm:$0xff]
    %v184 = vld [vmem:[#allocation3 + $0x1c8] sm:$0xff]
    %v185 = vld [vmem:[#allocation3 + $0x1d0] sm:$0xff]
    %v186 = vld [vmem:[#allocation3 + $0x1d8] sm:$0xff]
    %v187 = vld [vmem:[#allocation3 + $0x1e0] sm:$0xff]
    %v188 = vld [vmem:[#allocation3 + $0x1e8] sm:$0xff]
    %v189 = vld [vmem:[#allocation3 + $0x1f0] sm:$0xff]
    %v190 = vld [vmem:[#allocation3 + $0x1f8] sm:$0xff]
    %v191 = vld [vmem:[#allocation3 + $0x200] sm:$0xff]
    %v192 = vld [vmem:[#allocation3 + $0x208] sm:$0xff]
    %v193 = vld [vmem:[#allocation3 + $0x210] sm:$0xff]
    %v194 = vld [vmem:[#allocation3 + $0x218] sm:$0xff]
    %v195 = vld [vmem:[#allocation3 + $0x220] sm:$0xff]
    %v196 = vld [vmem:[#allocation3 + $0x228] sm:$0xff]
    %v197 = vld [vmem:[#allocation3 + $0x230] sm:$0xff]
    %v198 = vld [vmem:[#allocation3 + $0x238] sm:$0xff]
    %v199 = vld [vmem:[#allocation3 + $0x240] sm:$0xff]
    %v200 = vld [vmem:[#allocation3 + $0x248] sm:$0xff]
    %v201 = vld [vmem:[#allocation3 + $0x250] sm:$0xff]
    %v202 = vld [vmem:[#allocation3 + $0x258] sm:$0xff]
    %v203 = vld [vmem:[#allocation3 + $0x260] sm:$0xff]
    %v204 = vld [vmem:[#allocation3 + $0x268] sm:$0xff]
    %v205 = vld [vmem:[#allocation3 + $0x270] sm:$0xff]
    %v206 = vld [vmem:[#allocation3 + $0x278] sm:$0xff]
    %v207 = vld [vmem:[#allocation3 + $0x280] sm:$0xff]
    %v208 = vld [vmem:[#allocation3 + $0x288] sm:$0xff]
    %v209 = vld [vmem:[#allocation3 + $0x290] sm:$0xff]
    %v210 = vld [vmem:[#allocation3 + $0x298] sm:$0xff]
    %v211 = vld [vmem:[#allocation3 + $0x2a0] sm:$0xff]
    %v212 = vld [vmem:[#allocation3 + $0x2a8] sm:$0xff]
    %v213 = vld [vmem:[#allocation3 + $0x2b0] sm:$0xff]
    %v214 = vld [vmem:[#allocation3 + $0x2b8] sm:$0xff]
    %v215 = vld [vmem:[#allocation3 + $0x2c0] sm:$0xff]
    %v216 = vld [vmem:[#allocation3 + $0x2c8] sm:$0xff]
    %v217 = vld [vmem:[#allocation3 + $0x2d0] sm:$0xff]
    %v218 = vld [vmem:[#allocation3 + $0x2d8] sm:$0xff]
    %v219 = vld [vmem:[#allocation3 + $0x2e0] sm:$0xff]
    %v220 = vld [vmem:[#allocation3 + $0x2e8] sm:$0xff]
    %v221 = vld [vmem:[#allocation3 + $0x2f0] sm:$0xff]
    %v222 = vld [vmem:[#allocation3 + $0x2f8] sm:$0xff]
    %v223 = vld [vmem:[#allocation3 + $0x300] sm:$0xff]
    %v224 = vld [vmem:[#allocation3 + $0x308] sm:$0xff]
    %v225 = vld [vmem:[#allocation3 + $0x310] sm:$0xff]
    %v226 = vld [vmem:[#allocation3 + $0x318] sm:$0xff]
    %v227 = vld [vmem:[#allocation3 + $0x320] sm:$0xff]
    %v228 = vld [vmem:[#allocation3 + $0x328] sm:$0xff]
    %v229 = vld [vmem:[#allocation3 + $0x330] sm:$0xff]
    %v230 = vld [vmem:[#allocation3 + $0x338] sm:$0xff]
    %v231 = vld [vmem:[#allocation3 + $0x340] sm:$0xff]
    %v232 = vld [vmem:[#allocation3 + $0x348] sm:$0xff]
    %v233 = vld [vmem:[#allocation3 + $0x350] sm:$0xff]
    %v234 = vld [vmem:[#allocation3 + $0x358] sm:$0xff]
    %v235 = vld [vmem:[#allocation3 + $0x360] sm:$0xff]
    %v236 = vld [vmem:[#allocation3 + $0x368] sm:$0xff]
    %v237 = vld [vmem:[#allocation3 + $0x370] sm:$0xff]
    %v238 = vld [vmem:[#allocation3 + $0x378] sm:$0xff]
    %v239 = vld [vmem:[#allocation3 + $0x380] sm:$0xff]
    %v240 = vld [vmem:[#allocation3 + $0x388] sm:$0xff]
    %v241 = vld [vmem:[#allocation3 + $0x390] sm:$0xff]
    %v242 = vld [vmem:[#allocation3 + $0x398] sm:$0xff]
    %v243 = vld [vmem:[#allocation3 + $0x3a0] sm:$0xff]
    %v244 = vld [vmem:[#allocation3 + $0x3a8] sm:$0xff]
    %v245 = vld [vmem:[#allocation3 + $0x3b0] sm:$0xff]
    %v246 = vld [vmem:[#allocation3 + $0x3b8] sm:$0xff]
    %v247 = vld [vmem:[#allocation3 + $0x3c0] sm:$0xff]
    %v248 = vld [vmem:[#allocation3 + $0x3c8] sm:$0xff]
    %v249 = vld [vmem:[#allocation3 + $0x3d0] sm:$0xff]
    %v250 = vld [vmem:[#allocation3 + $0x3d8] sm:$0xff]
    %v251 = vld [vmem:[#allocation3 + $0x3e0] sm:$0xff]
    %v252 = vld [vmem:[#allocation3 + $0x3e8] sm:$0xff]
    %v253 = vld [vmem:[#allocation3 + $0x3f0] sm:$0xff]
    %v254 = vld [vmem:[#allocation3 + $0x3f8] sm:$0xff]
    %v255 = vld [vmem:[#allocation3 + $0x400] sm:$0xff]
    %v256 = vld [vmem:[#allocation3 + $0x408] sm:$0xff]
    %v257 = vld [vmem:[#allocation3 + $0x410] sm:$0xff]
    %v258 = vld [vmem:[#allocation3 + $0x418] sm:$0xff]
    %v259 = vld [vmem:[#allocation3 + $0x420] sm:$0xff]
    %v260 = vld [vmem:[#allocation3 + $0x428] sm:$0xff]
    %v261 = vld [vmem:[#allocation3 + $0x430] sm:$0xff]
    %v262 = vld [vmem:[#allocation3 + $0x438] sm:$0xff]
    %v263 = vld [vmem:[#allocation3 + $0x440] sm:$0xff]
    %v264 = vld [vmem:[#allocation3 + $0x448] sm:$0xff]
    %v265 = vld [vmem:[#allocation3 + $0x450] sm:$0xff]
    %v266 = vld [vmem:[#allocation3 + $0x458] sm:$0xff]
    %v267 = vld [vmem:[#allocation3 + $0x460] sm:$0xff]
    %v268 = vld [vmem:[#allocation3 + $0x468] sm:$0xff]
    %v269 = vld [vmem:[#allocation3 + $0x470] sm:$0xff]
    %v270 = vld [vmem:[#allocation3 + $0x478] sm:$0xff]
    %v271 = vld [vmem:[#allocation3 + $0x480] sm:$0xff]
    %v272 = vld [vmem:[#allocation3 + $0x488] sm:$0xff]
    %v273 = vld [vmem:[#allocation3 + $0x490] sm:$0xff]
    %v274 = vld [vmem:[#allocation3 + $0x498] sm:$0xff]
    %v275 = vld [vmem:[#allocation3 + $0x4a0] sm:$0xff]
    %v276 = vld [vmem:[#allocation3 + $0x4a8] sm:$0xff]
    %v277 = vld [vmem:[#allocation3 + $0x4b0] sm:$0xff]
    %v278 = vld [vmem:[#allocation3 + $0x4b8] sm:$0xff]
    %v279 = vld [vmem:[#allocation3 + $0x4c0] sm:$0xff]
    %v280 = vld [vmem:[#allocation3 + $0x4c8] sm:$0xff]
    %v281 = vld [vmem:[#allocation3 + $0x4d0] sm:$0xff]
    %v282 = vld [vmem:[#allocation3 + $0x4d8] sm:$0xff]
    %v283 = vld [vmem:[#allocation3 + $0x4e0] sm:$0xff]
    %v284 = vld [vmem:[#allocation3 + $0x4e8] sm:$0xff]
    %v285 = vld [vmem:[#allocation3 + $0x4f0] sm:$0xff]
    %v286 = vld [vmem:[#allocation3 + $0x4f8] sm:$0xff]
    %v287 = vld [vmem:[#allocation3 + $0x500] sm:$0xff]
    %v288 = vld [vmem:[#allocation3 + $0x508] sm:$0xff]
    %v289 = vld [vmem:[#allocation3 + $0x510] sm:$0xff]
    %v290 = vld [vmem:[#allocation3 + $0x518] sm:$0xff]
    %v291 = vld [vmem:[#allocation3 + $0x520] sm:$0xff]
    %v292 = vld [vmem:[#allocation3 + $0x528] sm:$0xff]
    %v293 = vld [vmem:[#allocation3 + $0x530] sm:$0xff]
    %v294 = vld [vmem:[#allocation3 + $0x538] sm:$0xff]
    %v295 = vld [vmem:[#allocation3 + $0x540] sm:$0xff]
    %v296 = vld [vmem:[#allocation3 + $0x548] sm:$0xff]
    %v297 = vld [vmem:[#allocation3 + $0x550] sm:$0xff]
    %v298 = vld [vmem:[#allocation3 + $0x558] sm:$0xff]
    %v299 = vld [vmem:[#allocation3 + $0x560] sm:$0xff]
    %v300 = vld [vmem:[#allocation3 + $0x568] sm:$0xff]
    %v301 = vld [vmem:[#allocation3 + $0x570] sm:$0xff]
    %v302 = vld [vmem:[#allocation3 + $0x578] sm:$0xff]
    %v303 = vld [vmem:[#allocation3 + $0x580] sm:$0xff]
    %v304 = vld [vmem:[#allocation3 + $0x588] sm:$0xff]
    %v305 = vld [vmem:[#allocation3 + $0x590] sm:$0xff]
    %v306 = vld [vmem:[#allocation3 + $0x598] sm:$0xff]
    %v307 = vld [vmem:[#allocation3 + $0x5a0] sm:$0xff]
    %v308 = vld [vmem:[#allocation3 + $0x5a8] sm:$0xff]
    %v309 = vld [vmem:[#allocation3 + $0x5b0] sm:$0xff]
    %v310 = vld [vmem:[#allocation3 + $0x5b8] sm:$0xff]
    %v311 = vld [vmem:[#allocation3 + $0x5c0] sm:$0xff]
    %v312 = vld [vmem:[#allocation3 + $0x5c8] sm:$0xff]
    %v313 = vld [vmem:[#allocation3 + $0x5d0] sm:$0xff]
    %v314 = vld [vmem:[#allocation3 + $0x5d8] sm:$0xff]
    %v315 = vld [vmem:[#allocation3 + $0x5e0] sm:$0xff]
    %v316 = vld [vmem:[#allocation3 + $0x5e8] sm:$0xff]
    %v317 = vld [vmem:[#allocation3 + $0x5f0] sm:$0xff]
    %v318 = vld [vmem:[#allocation3 + $0x5f8] sm:$0xff]
    %v319 = vld [vmem:[#allocation3 + $0x600] sm:$0xff]
    %v320 = vld [vmem:[#allocation3 + $0x608] sm:$0xff]
    %v321 = vld [vmem:[#allocation3 + $0x610] sm:$0xff]
    %v322 = vld [vmem:[#allocation3 + $0x618] sm:$0xff]
    %v323 = vld [vmem:[#allocation3 + $0x620] sm:$0xff]
    %v324 = vld [vmem:[#allocation3 + $0x628] sm:$0xff]
    %v325 = vld [vmem:[#allocation3 + $0x630] sm:$0xff]
    %v326 = vld [vmem:[#allocation3 + $0x638] sm:$0xff]
    %v327 = vld [vmem:[#allocation3 + $0x640] sm:$0xff]
    %v328 = vld [vmem:[#allocation3 + $0x648] sm:$0xff]
    %v329 = vld [vmem:[#allocation3 + $0x650] sm:$0xff]
    %v330 = vld [vmem:[#allocation3 + $0x658] sm:$0xff]
    %v331 = vld [vmem:[#allocation3 + $0x660] sm:$0xff]
    %v332 = vld [vmem:[#allocation3 + $0x668] sm:$0xff]
    %v333 = vld [vmem:[#allocation3 + $0x670] sm:$0xff]
    %v334 = vld [vmem:[#allocation3 + $0x678] sm:$0xff]
    %v335 = vld [vmem:[#allocation3 + $0x680] sm:$0xff]
    %v336 = vld [vmem:[#allocation3 + $0x688] sm:$0xff]
    %v337 = vld [vmem:[#allocation3 + $0x690] sm:$0xff]
    %v338 = vld [vmem:[#allocation3 + $0x698] sm:$0xff]
    %v339 = vld [vmem:[#allocation3 + $0x6a0] sm:$0xff]
    %v340 = vld [vmem:[#allocation3 + $0x6a8] sm:$0xff]
    %v341 = vld [vmem:[#allocation3 + $0x6b0] sm:$0xff]
    %v342 = vld [vmem:[#allocation3 + $0x6b8] sm:$0xff]
    %v343 = vld [vmem:[#allocation3 + $0x6c0] sm:$0xff]
    %v344 = vld [vmem:[#allocation3 + $0x6c8] sm:$0xff]
    %v345 = vld [vmem:[#allocation3 + $0x6d0] sm:$0xff]
    %v346 = vld [vmem:[#allocation3 + $0x6d8] sm:$0xff]
    %v347 = vld [vmem:[#allocation3 + $0x6e0] sm:$0xff]
    %v348 = vld [vmem:[#allocation3 + $0x6e8] sm:$0xff]
    %v349 = vld [vmem:[#allocation3 + $0x6f0] sm:$0xff]
    %v350 = vld [vmem:[#allocation3 + $0x6f8] sm:$0xff]
    %v351 = vld [vmem:[#allocation3 + $0x700] sm:$0xff]
    %v352 = vld [vmem:[#allocation3 + $0x708] sm:$0xff]
    %v353 = vld [vmem:[#allocation3 + $0x710] sm:$0xff]
    %v354 = vld [vmem:[#allocation3 + $0x718] sm:$0xff]
    %v355 = vld [vmem:[#allocation3 + $0x720] sm:$0xff]
    %v356 = vld [vmem:[#allocation3 + $0x728] sm:$0xff]
    %v357 = vld [vmem:[#allocation3 + $0x730] sm:$0xff]
    %v358 = vld [vmem:[#allocation3 + $0x738] sm:$0xff]
    %v359 = vld [vmem:[#allocation3 + $0x740] sm:$0xff]
    %v360 = vld [vmem:[#allocation3 + $0x748] sm:$0xff]
    %v361 = vld [vmem:[#allocation3 + $0x750] sm:$0xff]
    %v362 = vld [vmem:[#allocation3 + $0x758] sm:$0xff]
    %v363 = vld [vmem:[#allocation3 + $0x760] sm:$0xff]
    %v364 = vld [vmem:[#allocation3 + $0x768] sm:$0xff]
    %v365 = vld [vmem:[#allocation3 + $0x770] sm:$0xff]
    %v366 = vld [vmem:[#allocation3 + $0x778] sm:$0xff]
    %v367 = vld [vmem:[#allocation3 + $0x780] sm:$0xff]
    %v368 = vld [vmem:[#allocation3 + $0x788] sm:$0xff]
    %v369 = vld [vmem:[#allocation3 + $0x790] sm:$0xff]
    %v370 = vld [vmem:[#allocation3 + $0x798] sm:$0xff]
    %v371 = vld [vmem:[#allocation3 + $0x7a0] sm:$0xff]
    %v372 = vld [vmem:[#allocation3 + $0x7a8] sm:$0xff]
    %v373 = vld [vmem:[#allocation3 + $0x7b0] sm:$0xff]
    %v374 = vld [vmem:[#allocation3 + $0x7b8] sm:$0xff]
    %v375 = vld [vmem:[#allocation3 + $0x7c0] sm:$0xff]
    %v376 = vld [vmem:[#allocation3 + $0x7c8] sm:$0xff]
    %v377 = vld [vmem:[#allocation3 + $0x7d0] sm:$0xff]
    %v378 = vld [vmem:[#allocation3 + $0x7d8] sm:$0xff]
    %v379 = vld [vmem:[#allocation3 + $0x7e0] sm:$0xff]
    %v380 = vld [vmem:[#allocation3 + $0x7e8] sm:$0xff]
    %v381 = vld [vmem:[#allocation3 + $0x7f0] sm:$0xff]
    %v382 = vld [vmem:[#allocation3 + $0x7f8] sm:$0xff]
    %v383 = vld [vmem:[#allocation3 + $0x800] sm:$0xff]
    %v384 = vld [vmem:[#allocation3 + $0x808] sm:$0xff]
    %v385 = vld [vmem:[#allocation3 + $0x810] sm:$0xff]
    %v386 = vld [vmem:[#allocation3 + $0x818] sm:$0xff]
    %v387 = vld [vmem:[#allocation3 + $0x820] sm:$0xff]
    %v388 = vld [vmem:[#allocation3 + $0x828] sm:$0xff]
    %v389 = vld [vmem:[#allocation3 + $0x830] sm:$0xff]
    %v390 = vld [vmem:[#allocation3 + $0x838] sm:$0xff]
    %v391 = vld [vmem:[#allocation3 + $0x840] sm:$0xff]
    %v392 = vld [vmem:[#allocation3 + $0x848] sm:$0xff]
    %v393 = vld [vmem:[#allocation3 + $0x850] sm:$0xff]
    %v394 = vld [vmem:[#allocation3 + $0x858] sm:$0xff]
    %v395 = vld [vmem:[#allocation3 + $0x860] sm:$0xff]
    %v396 = vld [vmem:[#allocation3 + $0x868] sm:$0xff]
    %v397 = vld [vmem:[#allocation3 + $0x870] sm:$0xff]
    %v398 = vld [vmem:[#allocation3 + $0x878] sm:$0xff]
    %v399 = vld [vmem:[#allocation3 + $0x880] sm:$0xff]
    %v400 = vld [vmem:[#allocation3 + $0x888] sm:$0xff]
    %v401 = vld [vmem:[#allocation3 + $0x890] sm:$0xff]
    %v402 = vld [vmem:[#allocation3 + $0x898] sm:$0xff]
    %v403 = vld [vmem:[#allocation3 + $0x8a0] sm:$0xff]
    %v404 = vld [vmem:[#allocation3 + $0x8a8] sm:$0xff]
    %v405 = vld [vmem:[#allocation3 + $0x8b0] sm:$0xff]
    %v406 = vld [vmem:[#allocation3 + $0x8b8] sm:$0xff]
    %v407 = vld [vmem:[#allocation3 + $0x8c0] sm:$0xff]
    %v408 = vld [vmem:[#allocation3 + $0x8c8] sm:$0xff]
    %v409 = vld [vmem:[#allocation3 + $0x8d0] sm:$0xff]
    %v410 = vld [vmem:[#allocation3 + $0x8d8] sm:$0xff]
    %v411 = vld [vmem:[#allocation3 + $0x8e0] sm:$0xff]
    %v412 = vld [vmem:[#allocation3 + $0x8e8] sm:$0xff]
    %v413 = vld [vmem:[#allocation3 + $0x8f0] sm:$0xff]
    %v414 = vld [vmem:[#allocation3 + $0x8f8] sm:$0xff]
    %v415 = vld [vmem:[#allocation3 + $0x900] sm:$0xff]
    %v416 = vld [vmem:[#allocation3 + $0x908] sm:$0xff]
    %v417 = vld [vmem:[#allocation3 + $0x910] sm:$0xff]
    %v418 = vld [vmem:[#allocation3 + $0x918] sm:$0xff]
    %v419 = vld [vmem:[#allocation3 + $0x920] sm:$0xff]
    %v420 = vld [vmem:[#allocation3 + $0x928] sm:$0xff]
    %v421 = vld [vmem:[#allocation3 + $0x930] sm:$0xff]
    %v422 = vld [vmem:[#allocation3 + $0x938] sm:$0xff]
    %v423 = vld [vmem:[#allocation3 + $0x940] sm:$0xff]
    %v424 = vld [vmem:[#allocation3 + $0x948] sm:$0xff]
    %v425 = vld [vmem:[#allocation3 + $0x950] sm:$0xff]
    %v426 = vld [vmem:[#allocation3 + $0x958] sm:$0xff]
    %v427 = vld [vmem:[#allocation3 + $0x960] sm:$0xff]
    %v428 = vld [vmem:[#allocation3 + $0x968] sm:$0xff]
    %v429 = vld [vmem:[#allocation3 + $0x970] sm:$0xff]
    %v430 = vld [vmem:[#allocation3 + $0x978] sm:$0xff]
    %v431 = vld [vmem:[#allocation3 + $0x980] sm:$0xff]
    %v432 = vld [vmem:[#allocation3 + $0x988] sm:$0xff]
    %v433 = vld [vmem:[#allocation3 + $0x990] sm:$0xff]
    %v434 = vld [vmem:[#allocation3 + $0x998] sm:$0xff]
    %v435 = vld [vmem:[#allocation3 + $0x9a0] sm:$0xff]
    %v436 = vld [vmem:[#allocation3 + $0x9a8] sm:$0xff]
    %v437 = vld [vmem:[#allocation3 + $0x9b0] sm:$0xff]
    %v438 = vld [vmem:[#allocation3 + $0x9b8] sm:$0xff]
    %v439 = vld [vmem:[#allocation3 + $0x9c0] sm:$0xff]
    %v440 = vld [vmem:[#allocation3 + $0x9c8] sm:$0xff]
    %v441 = vld [vmem:[#allocation3 + $0x9d0] sm:$0xff]
    %v442 = vld [vmem:[#allocation3 + $0x9d8] sm:$0xff]
    %v443 = vld [vmem:[#allocation3 + $0x9e0] sm:$0xff]
    %v444 = vld [vmem:[#allocation3 + $0x9e8] sm:$0xff]
    %v445 = vld [vmem:[#allocation3 + $0x9f0] sm:$0xff]
    %v446 = vld [vmem:[#allocation3 + $0x9f8] sm:$0xff]
    %v447 = vld [vmem:[#allocation3 + $0xa00] sm:$0xff]
    %v448 = vld [vmem:[#allocation3 + $0xa08] sm:$0xff]
    %v449 = vld [vmem:[#allocation3 + $0xa10] sm:$0xff]
    %v450 = vld [vmem:[#allocation3 + $0xa18] sm:$0xff]
    %v451 = vld [vmem:[#allocation3 + $0xa20] sm:$0xff]
    %v452 = vld [vmem:[#allocation3 + $0xa28] sm:$0xff]
    %v453 = vld [vmem:[#allocation3 + $0xa30] sm:$0xff]
    %v454 = vld [vmem:[#allocation3 + $0xa38] sm:$0xff]
    %v455 = vld [vmem:[#allocation3 + $0xa40] sm:$0xff]
    %v456 = vld [vmem:[#allocation3 + $0xa48] sm:$0xff]
    %v457 = vld [vmem:[#allocation3 + $0xa50] sm:$0xff]
    %v458 = vld [vmem:[#allocation3 + $0xa58] sm:$0xff]
    %v459 = vld [vmem:[#allocation3 + $0xa60] sm:$0xff]
    %v460 = vld [vmem:[#allocation3 + $0xa68] sm:$0xff]
    %v461 = vld [vmem:[#allocation3 + $0xa70] sm:$0xff]
    %v462 = vld [vmem:[#allocation3 + $0xa78] sm:$0xff]
    %v463 = vld [vmem:[#allocation3 + $0xa80] sm:$0xff]
    %v464 = vld [vmem:[#allocation3 + $0xa88] sm:$0xff]
    %v465 = vld [vmem:[#allocation3 + $0xa90] sm:$0xff]
    %v466 = vld [vmem:[#allocation3 + $0xa98] sm:$0xff]
    %v467 = vld [vmem:[#allocation3 + $0xaa0] sm:$0xff]
    %v468 = vld [vmem:[#allocation3 + $0xaa8] sm:$0xff]
    %v469 = vld [vmem:[#allocation3 + $0xab0] sm:$0xff]
    %v470 = vld [vmem:[#allocation3 + $0xab8] sm:$0xff]
    %v471 = vld [vmem:[#allocation3 + $0xac0] sm:$0xff]
    %v472 = vld [vmem:[#allocation3 + $0xac8] sm:$0xff]
    %v473 = vld [vmem:[#allocation3 + $0xad0] sm:$0xff]
    %v474 = vld [vmem:[#allocation3 + $0xad8] sm:$0xff]
    %v475 = vld [vmem:[#allocation3 + $0xae0] sm:$0xff]
    %v476 = vld [vmem:[#allocation3 + $0xae8] sm:$0xff]
    %v477 = vld [vmem:[#allocation3 + $0xaf0] sm:$0xff]
    %v478 = vld [vmem:[#allocation3 + $0xaf8] sm:$0xff]
    %v479 = vld [vmem:[#allocation3 + $0xb00] sm:$0xff]
    %v480 = vld [vmem:[#allocation3 + $0xb08] sm:$0xff]
    %v481 = vld [vmem:[#allocation3 + $0xb10] sm:$0xff]
    %v482 = vld [vmem:[#allocation3 + $0xb18] sm:$0xff]
    %v483 = vld [vmem:[#allocation3 + $0xb20] sm:$0xff]
    %v484 = vld [vmem:[#allocation3 + $0xb28] sm:$0xff]
    %v485 = vld [vmem:[#allocation3 + $0xb30] sm:$0xff]
    %v486 = vld [vmem:[#allocation3 + $0xb38] sm:$0xff]
    %v487 = vld [vmem:[#allocation3 + $0xb40] sm:$0xff]
    %v488 = vld [vmem:[#allocation3 + $0xb48] sm:$0xff]
    %v489 = vld [vmem:[#allocation3 + $0xb50] sm:$0xff]
    %v490 = vld [vmem:[#allocation3 + $0xb58] sm:$0xff]
    %v491 = vld [vmem:[#allocation3 + $0xb60] sm:$0xff]
    %v492 = vld [vmem:[#allocation3 + $0xb68] sm:$0xff]
    %v493 = vld [vmem:[#allocation3 + $0xb70] sm:$0xff]
    %v494 = vld [vmem:[#allocation3 + $0xb78] sm:$0xff]
    %v495 = vld [vmem:[#allocation3 + $0xb80] sm:$0xff]
    %v496 = vld [vmem:[#allocation3 + $0xb88] sm:$0xff]
    %v497 = vld [vmem:[#allocation3 + $0xb90] sm:$0xff]
    %v498 = vld [vmem:[#allocation3 + $0xb98] sm:$0xff]
    %v499 = vld [vmem:[#allocation3 + $0xba0] sm:$0xff]
    %v500 = vld [vmem:[#allocation3 + $0xba8] sm:$0xff]
    %v501 = vld [vmem:[#allocation3 + $0xbb0] sm:$0xff]
    %v502 = vld [vmem:[#allocation3 + $0xbb8] sm:$0xff]
    %v503 = vld [vmem:[#allocation3 + $0xbc0] sm:$0xff]
    %v504 = vld [vmem:[#allocation3 + $0xbc8] sm:$0xff]
    %v505 = vld [vmem:[#allocation3 + $0xbd0] sm:$0xff]
    %v506 = vld [vmem:[#allocation3 + $0xbd8] sm:$0xff]
    %v507 = vld [vmem:[#allocation3 + $0xbe0] sm:$0xff]
    %v508 = vld [vmem:[#allocation3 + $0xbe8] sm:$0xff]
    %v509 = vld [vmem:[#allocation3 + $0xbf0] sm:$0xff]
    %v510 = vld [vmem:[#allocation3 + $0xbf8] sm:$0xff]
    %v511 = vld [vmem:[#allocation3 + $0xc00] sm:$0xff]
    %v512 = vld [vmem:[#allocation3 + $0xc08] sm:$0xff]
    %v513 = vld [vmem:[#allocation3 + $0xc10] sm:$0xff]
    %v514 = vld [vmem:[#allocation3 + $0xc18] sm:$0xff]
    %v515 = vld [vmem:[#allocation3 + $0xc20] sm:$0xff]
    %v516 = vld [vmem:[#allocation3 + $0xc28] sm:$0xff]
    %v517 = vld [vmem:[#allocation3 + $0xc30] sm:$0xff]
    %v518 = vld [vmem:[#allocation3 + $0xc38] sm:$0xff]
    %v519 = vld [vmem:[%s1] sm:$0xff]
    %v520 = vld [vmem:[%s1 + $0x8] sm:$0xff]
    %v521 = vld [vmem:[%s1 + $0x10] sm:$0xff]
    %v522 = vld [vmem:[%s1 + $0x18] sm:$0xff]
    %v523 = vld [vmem:[%s1 + $0x20] sm:$0xff]
    %v524 = vld [vmem:[%s1 + $0x28] sm:$0xff]
    %v525 = vld [vmem:[%s1 + $0x30] sm:$0xff]
    %v526 = vld [vmem:[%s1 + $0x38] sm:$0xff]
    %v531 = vunpack.c.l.b16 %v123
    %v532 = vunpack.c.h.b16 %v123
    %v533 = vunpack.c.l.b16 %v124
    %v534 = vunpack.c.h.b16 %v124
    %v535 = vunpack.c.l.b16 %v125
    %v536 = vunpack.c.h.b16 %v125
    %v537 = vunpack.c.l.b16 %v126
    %v538 = vpack.c.b16 %v531, %v531
    %v539 = vpack.c.b16 %v532, %v532
    %v540 = vpack.c.b16 %v533, %v533
    %v541 = vpack.c.b16 %v534, %v534
    %v542 = vpack.c.b16 %v535, %v535
    %v543 = vpack.c.b16 %v536, %v536
    %v544 = vpack.c.b16 %v537, %v537
    %v943 = vunpack.c.l.b16 %v127
    %v944 = vunpack.c.h.b16 %v127
    %v945 = vunpack.c.l.b16 %v128
    %v946 = vunpack.c.h.b16 %v128
    %v947 = vunpack.c.l.b16 %v129
    %v948 = vunpack.c.h.b16 %v129
    %v949 = vunpack.c.l.b16 %v130
    %v950 = vunpack.c.h.b16 %v130
    %v951 = vunpack.c.l.b16 %v131
    %v952 = vunpack.c.h.b16 %v131
    %v953 = vunpack.c.l.b16 %v132
    %v954 = vunpack.c.h.b16 %v132
    %v955 = vunpack.c.l.b16 %v133
    %v956 = vunpack.c.h.b16 %v133
    %v957 = vunpack.c.l.b16 %v134
    %v958 = vunpack.c.h.b16 %v134
    %v959 = vunpack.c.l.b16 %v135
    %v960 = vunpack.c.h.b16 %v135
    %v961 = vunpack.c.l.b16 %v136
    %v962 = vunpack.c.h.b16 %v136
    %v963 = vunpack.c.l.b16 %v137
    %v964 = vunpack.c.h.b16 %v137
    %v965 = vunpack.c.l.b16 %v138
    %v966 = vunpack.c.h.b16 %v138
    %v967 = vunpack.c.l.b16 %v139
    %v968 = vunpack.c.h.b16 %v139
    %v969 = vunpack.c.l.b16 %v140
    %v970 = vunpack.c.h.b16 %v140
    %v971 = vunpack.c.l.b16 %v141
    %v972 = vunpack.c.h.b16 %v141
    %v973 = vunpack.c.l.b16 %v142
    %v974 = vunpack.c.h.b16 %v142
    %v975 = vunpack.c.l.b16 %v143
    %v976 = vunpack.c.h.b16 %v143
    %v977 = vunpack.c.l.b16 %v144
    %v978 = vunpack.c.h.b16 %v144
    %v979 = vunpack.c.l.b16 %v145
    %v980 = vunpack.c.h.b16 %v145
    %v981 = vunpack.c.l.b16 %v146
    %v982 = vunpack.c.h.b16 %v146
    %v983 = vunpack.c.l.b16 %v147
    %v984 = vunpack.c.h.b16 %v147
    %v985 = vunpack.c.l.b16 %v148
    %v986 = vunpack.c.h.b16 %v148
    %v987 = vunpack.c.l.b16 %v149
    %v988 = vunpack.c.h.b16 %v149
    %v989 = vunpack.c.l.b16 %v150
    %v990 = vunpack.c.h.b16 %v150
    %v991 = vunpack.c.l.b16 %v151
    %v992 = vunpack.c.h.b16 %v151
    %v993 = vunpack.c.l.b16 %v152
    %v994 = vunpack.c.h.b16 %v152
    %v995 = vunpack.c.l.b16 %v153
    %v996 = vunpack.c.h.b16 %v153
    %v997 = vunpack.c.l.b16 %v154
    %v998 = vunpack.c.h.b16 %v154
    %v999 = vunpack.c.l.b16 %v155
    %v1000 = vunpack.c.h.b16 %v155
    %v1001 = vunpack.c.l.b16 %v156
    %v1002 = vunpack.c.h.b16 %v156
    %v1003 = vunpack.c.l.b16 %v157
    %v1004 = vunpack.c.h.b16 %v157
    %v1005 = vunpack.c.l.b16 %v158
    %v1006 = vunpack.c.h.b16 %v158
    %v1007 = vunpack.c.l.b16 %v159
    %v1008 = vunpack.c.h.b16 %v159
    %v1009 = vunpack.c.l.b16 %v160
    %v1010 = vunpack.c.h.b16 %v160
    %v1011 = vunpack.c.l.b16 %v161
    %v1012 = vunpack.c.h.b16 %v161
    %v1013 = vunpack.c.l.b16 %v162
    %v1014 = vunpack.c.h.b16 %v162
    %v1015 = vunpack.c.l.b16 %v163
    %v1016 = vunpack.c.h.b16 %v163
    %v1017 = vunpack.c.l.b16 %v164
    %v1018 = vunpack.c.h.b16 %v164
    %v1019 = vunpack.c.l.b16 %v165
    %v1020 = vunpack.c.h.b16 %v165
    %v1021 = vunpack.c.l.b16 %v166
    %v1022 = vunpack.c.h.b16 %v166
    %v1023 = vunpack.c.l.b16 %v167
    %v1024 = vunpack.c.h.b16 %v167
    %v1025 = vunpack.c.l.b16 %v168
    %v1026 = vunpack.c.h.b16 %v168
    %v1027 = vunpack.c.l.b16 %v169
    %v1028 = vunpack.c.h.b16 %v169
    %v1029 = vunpack.c.l.b16 %v170
    %v1030 = vunpack.c.h.b16 %v170
    %v1031 = vunpack.c.l.b16 %v171
    %v1032 = vunpack.c.h.b16 %v171
    %v1033 = vunpack.c.l.b16 %v172
    %v1034 = vunpack.c.h.b16 %v172
    %v1035 = vunpack.c.l.b16 %v173
    %v1036 = vunpack.c.h.b16 %v173
    %v1037 = vunpack.c.l.b16 %v174
    %v1038 = vunpack.c.h.b16 %v174
    %v1039 = vunpack.c.l.b16 %v175
    %v1040 = vunpack.c.h.b16 %v175
    %v1041 = vunpack.c.l.b16 %v176
    %v1042 = vunpack.c.h.b16 %v176
    %v1043 = vunpack.c.l.b16 %v177
    %v1044 = vunpack.c.h.b16 %v177
    %v1045 = vunpack.c.l.b16 %v178
    %v1046 = vunpack.c.h.b16 %v178
    %v1047 = vunpack.c.l.b16 %v179
    %v1048 = vunpack.c.h.b16 %v179
    %v1049 = vunpack.c.l.b16 %v180
    %v1050 = vunpack.c.h.b16 %v180
    %v1051 = vunpack.c.l.b16 %v181
    %v1052 = vunpack.c.h.b16 %v181
    %v1053 = vunpack.c.l.b16 %v182
    %v1054 = vunpack.c.h.b16 %v182
    %v1055 = vunpack.c.l.b16 %v183
    %v1056 = vunpack.c.h.b16 %v183
    %v1057 = vunpack.c.l.b16 %v184
    %v1058 = vunpack.c.h.b16 %v184
    %v1059 = vunpack.c.l.b16 %v185
    %v1060 = vunpack.c.h.b16 %v185
    %v1061 = vunpack.c.l.b16 %v186
    %v1062 = vunpack.c.h.b16 %v186
    %v1063 = vunpack.c.l.b16 %v187
    %v1064 = vunpack.c.h.b16 %v187
    %v1065 = vunpack.c.l.b16 %v188
    %v1066 = vunpack.c.h.b16 %v188
    %v1067 = vunpack.c.l.b16 %v189
    %v1068 = vunpack.c.h.b16 %v189
    %v1069 = vunpack.c.l.b16 %v190
    %v1070 = vunpack.c.h.b16 %v190
    %v1071 = vunpack.c.l.b16 %v191
    %v1072 = vunpack.c.h.b16 %v191
    %v1073 = vunpack.c.l.b16 %v192
    %v1074 = vunpack.c.h.b16 %v192
    %v1075 = vunpack.c.l.b16 %v193
    %v1076 = vunpack.c.h.b16 %v193
    %v1077 = vunpack.c.l.b16 %v194
    %v1078 = vunpack.c.h.b16 %v194
    %v1079 = vunpack.c.l.b16 %v195
    %v1080 = vunpack.c.h.b16 %v195
    %v1081 = vunpack.c.l.b16 %v196
    %v1082 = vunpack.c.h.b16 %v196
    %v1083 = vunpack.c.l.b16 %v197
    %v1084 = vunpack.c.h.b16 %v197
    %v1085 = vunpack.c.l.b16 %v198
    %v1086 = vunpack.c.h.b16 %v198
    %v1087 = vunpack.c.l.b16 %v199
    %v1088 = vunpack.c.h.b16 %v199
    %v1089 = vunpack.c.l.b16 %v200
    %v1090 = vunpack.c.h.b16 %v200
    %v1091 = vunpack.c.l.b16 %v201
    %v1092 = vunpack.c.h.b16 %v201
    %v1093 = vunpack.c.l.b16 %v202
    %v1094 = vunpack.c.h.b16 %v202
    %v1095 = vunpack.c.l.b16 %v203
    %v1096 = vunpack.c.h.b16 %v203
    %v1097 = vunpack.c.l.b16 %v204
    %v1098 = vunpack.c.h.b16 %v204
    %v1099 = vunpack.c.l.b16 %v205
    %v1100 = vunpack.c.h.b16 %v205
    %v1101 = vunpack.c.l.b16 %v206
    %v1102 = vunpack.c.h.b16 %v206
    %v1103 = vunpack.c.l.b16 %v207
    %v1104 = vunpack.c.h.b16 %v207
    %v1105 = vunpack.c.l.b16 %v208
    %v1106 = vunpack.c.h.b16 %v208
    %v1107 = vunpack.c.l.b16 %v209
    %v1108 = vunpack.c.h.b16 %v209
    %v1109 = vunpack.c.l.b16 %v210
    %v1110 = vunpack.c.h.b16 %v210
    %v1111 = vunpack.c.l.b16 %v211
    %v1112 = vunpack.c.h.b16 %v211
    %v1113 = vunpack.c.l.b16 %v212
    %v1114 = vunpack.c.h.b16 %v212
    %v1115 = vunpack.c.l.b16 %v213
    %v1116 = vunpack.c.h.b16 %v213
    %v1117 = vunpack.c.l.b16 %v214
    %v1118 = vunpack.c.h.b16 %v214
    %v1119 = vunpack.c.l.b16 %v215
    %v1120 = vunpack.c.h.b16 %v215
    %v1121 = vunpack.c.l.b16 %v216
    %v1122 = vunpack.c.h.b16 %v216
    %v1123 = vunpack.c.l.b16 %v217
    %v1124 = vunpack.c.h.b16 %v217
    %v1125 = vunpack.c.l.b16 %v218
    %v1126 = vunpack.c.h.b16 %v218
    %v1127 = vunpack.c.l.b16 %v219
    %v1128 = vunpack.c.h.b16 %v219
    %v1129 = vunpack.c.l.b16 %v220
    %v1130 = vunpack.c.h.b16 %v220
    %v1131 = vunpack.c.l.b16 %v221
    %v1132 = vunpack.c.h.b16 %v221
    %v1133 = vunpack.c.l.b16 %v222
    %v1134 = vunpack.c.h.b16 %v222
    %v1135 = vunpack.c.l.b16 %v223
    %v1136 = vunpack.c.h.b16 %v223
    %v1137 = vunpack.c.l.b16 %v224
    %v1138 = vunpack.c.h.b16 %v224
    %v1139 = vunpack.c.l.b16 %v225
    %v1140 = vunpack.c.h.b16 %v225
    %v1141 = vunpack.c.l.b16 %v226
    %v1142 = vunpack.c.h.b16 %v226
    %v1143 = vunpack.c.l.b16 %v227
    %v1144 = vunpack.c.h.b16 %v227
    %v1145 = vunpack.c.l.b16 %v228
    %v1146 = vunpack.c.h.b16 %v228
    %v1147 = vunpack.c.l.b16 %v229
    %v1148 = vunpack.c.h.b16 %v229
    %v1149 = vunpack.c.l.b16 %v230
    %v1150 = vunpack.c.h.b16 %v230
    %v1151 = vunpack.c.l.b16 %v231
    %v1152 = vunpack.c.h.b16 %v231
    %v1153 = vunpack.c.l.b16 %v232
    %v1154 = vunpack.c.h.b16 %v232
    %v1155 = vunpack.c.l.b16 %v233
    %v1156 = vunpack.c.h.b16 %v233
    %v1157 = vunpack.c.l.b16 %v234
    %v1158 = vunpack.c.h.b16 %v234
    %v1159 = vunpack.c.l.b16 %v235
    %v1160 = vunpack.c.h.b16 %v235
    %v1161 = vunpack.c.l.b16 %v236
    %v1162 = vunpack.c.h.b16 %v236
    %v1163 = vunpack.c.l.b16 %v237
    %v1164 = vunpack.c.h.b16 %v237
    %v1165 = vunpack.c.l.b16 %v238
    %v1166 = vunpack.c.h.b16 %v238
    %v1167 = vunpack.c.l.b16 %v239
    %v1168 = vunpack.c.h.b16 %v239
    %v1169 = vunpack.c.l.b16 %v240
    %v1170 = vunpack.c.h.b16 %v240
    %v1171 = vunpack.c.l.b16 %v241
    %v1172 = vunpack.c.h.b16 %v241
    %v1173 = vunpack.c.l.b16 %v242
    %v1174 = vunpack.c.h.b16 %v242
    %v1175 = vunpack.c.l.b16 %v243
    %v1176 = vunpack.c.h.b16 %v243
    %v1177 = vunpack.c.l.b16 %v244
    %v1178 = vunpack.c.h.b16 %v244
    %v1179 = vunpack.c.l.b16 %v245
    %v1180 = vunpack.c.h.b16 %v245
    %v1181 = vunpack.c.l.b16 %v246
    %v1182 = vunpack.c.h.b16 %v246
    %v1183 = vunpack.c.l.b16 %v247
    %v1184 = vunpack.c.h.b16 %v247
    %v1185 = vunpack.c.l.b16 %v248
    %v1186 = vunpack.c.h.b16 %v248
    %v1187 = vunpack.c.l.b16 %v249
    %v1188 = vunpack.c.h.b16 %v249
    %v1189 = vunpack.c.l.b16 %v250
    %v1190 = vunpack.c.h.b16 %v250
    %v1191 = vunpack.c.l.b16 %v251
    %v1192 = vunpack.c.h.b16 %v251
    %v1193 = vunpack.c.l.b16 %v252
    %v1194 = vunpack.c.h.b16 %v252
    %v1195 = vunpack.c.l.b16 %v253
    %v1196 = vunpack.c.h.b16 %v253
    %v1197 = vunpack.c.l.b16 %v254
    %v1198 = vunpack.c.h.b16 %v254
    %v1199 = vunpack.c.l.b16 %v255
    %v1200 = vunpack.c.h.b16 %v255
    %v1201 = vunpack.c.l.b16 %v256
    %v1202 = vunpack.c.h.b16 %v256
    %v1203 = vunpack.c.l.b16 %v257
    %v1204 = vunpack.c.h.b16 %v257
    %v1205 = vunpack.c.l.b16 %v258
    %v1206 = vunpack.c.h.b16 %v258
    %v1207 = vunpack.c.l.b16 %v259
    %v1208 = vunpack.c.h.b16 %v259
    %v1209 = vunpack.c.l.b16 %v260
    %v1210 = vunpack.c.h.b16 %v260
    %v1211 = vunpack.c.l.b16 %v261
    %v1212 = vunpack.c.h.b16 %v261
    %v1213 = vunpack.c.l.b16 %v262
    %v1214 = vunpack.c.h.b16 %v262
    %v1215 = vunpack.c.l.b16 %v263
    %v1216 = vunpack.c.h.b16 %v263
    %v1217 = vunpack.c.l.b16 %v264
    %v1218 = vunpack.c.h.b16 %v264
    %v1219 = vunpack.c.l.b16 %v265
    %v1220 = vunpack.c.h.b16 %v265
    %v1221 = vunpack.c.l.b16 %v266
    %v1222 = vunpack.c.h.b16 %v266
    %v1223 = vunpack.c.l.b16 %v267
    %v1224 = vunpack.c.h.b16 %v267
    %v1225 = vunpack.c.l.b16 %v268
    %v1226 = vunpack.c.h.b16 %v268
    %v1227 = vunpack.c.l.b16 %v269
    %v1228 = vunpack.c.h.b16 %v269
    %v1229 = vunpack.c.l.b16 %v270
    %v1230 = vunpack.c.h.b16 %v270
    %v1231 = vunpack.c.l.b16 %v271
    %v1232 = vunpack.c.h.b16 %v271
    %v1233 = vunpack.c.l.b16 %v272
    %v1234 = vunpack.c.h.b16 %v272
    %v1235 = vunpack.c.l.b16 %v273
    %v1236 = vunpack.c.h.b16 %v273
    %v1237 = vunpack.c.l.b16 %v274
    %v1238 = vunpack.c.h.b16 %v274
    %v1239 = vunpack.c.l.b16 %v275
    %v1240 = vunpack.c.h.b16 %v275
    %v1241 = vunpack.c.l.b16 %v276
    %v1242 = vunpack.c.h.b16 %v276
    %v1243 = vunpack.c.l.b16 %v277
    %v1244 = vunpack.c.h.b16 %v277
    %v1245 = vunpack.c.l.b16 %v278
    %v1246 = vunpack.c.h.b16 %v278
    %v1247 = vunpack.c.l.b16 %v279
    %v1248 = vunpack.c.h.b16 %v279
    %v1249 = vunpack.c.l.b16 %v280
    %v1250 = vunpack.c.h.b16 %v280
    %v1251 = vunpack.c.l.b16 %v281
    %v1252 = vunpack.c.h.b16 %v281
    %v1253 = vunpack.c.l.b16 %v282
    %v1254 = vunpack.c.h.b16 %v282
    %v1255 = vunpack.c.l.b16 %v283
    %v1256 = vunpack.c.h.b16 %v283
    %v1257 = vunpack.c.l.b16 %v284
    %v1258 = vunpack.c.h.b16 %v284
    %v1259 = vunpack.c.l.b16 %v285
    %v1260 = vunpack.c.h.b16 %v285
    %v1261 = vunpack.c.l.b16 %v286
    %v1262 = vunpack.c.h.b16 %v286
    %v1263 = vunpack.c.l.b16 %v287
    %v1264 = vunpack.c.h.b16 %v287
    %v1265 = vunpack.c.l.b16 %v288
    %v1266 = vunpack.c.h.b16 %v288
    %v1267 = vunpack.c.l.b16 %v289
    %v1268 = vunpack.c.h.b16 %v289
    %v1269 = vunpack.c.l.b16 %v290
    %v1270 = vunpack.c.h.b16 %v290
    %v1271 = vunpack.c.l.b16 %v291
    %v1272 = vunpack.c.h.b16 %v291
    %v1273 = vunpack.c.l.b16 %v292
    %v1274 = vunpack.c.h.b16 %v292
    %v1275 = vunpack.c.l.b16 %v293
    %v1276 = vunpack.c.h.b16 %v293
    %v1277 = vunpack.c.l.b16 %v294
    %v1278 = vunpack.c.h.b16 %v294
    %v1279 = vunpack.c.l.b16 %v295
    %v1280 = vunpack.c.h.b16 %v295
    %v1281 = vunpack.c.l.b16 %v296
    %v1282 = vunpack.c.h.b16 %v296
    %v1283 = vunpack.c.l.b16 %v297
    %v1284 = vunpack.c.h.b16 %v297
    %v1285 = vunpack.c.l.b16 %v298
    %v1286 = vunpack.c.h.b16 %v298
    %v1287 = vunpack.c.l.b16 %v299
    %v1288 = vunpack.c.h.b16 %v299
    %v1289 = vunpack.c.l.b16 %v300
    %v1290 = vunpack.c.h.b16 %v300
    %v1291 = vunpack.c.l.b16 %v301
    %v1292 = vunpack.c.h.b16 %v301
    %v1293 = vunpack.c.l.b16 %v302
    %v1294 = vunpack.c.h.b16 %v302
    %v1295 = vunpack.c.l.b16 %v303
    %v1296 = vunpack.c.h.b16 %v303
    %v1297 = vunpack.c.l.b16 %v304
    %v1298 = vunpack.c.h.b16 %v304
    %v1299 = vunpack.c.l.b16 %v305
    %v1300 = vunpack.c.h.b16 %v305
    %v1301 = vunpack.c.l.b16 %v306
    %v1302 = vunpack.c.h.b16 %v306
    %v1303 = vunpack.c.l.b16 %v307
    %v1304 = vunpack.c.h.b16 %v307
    %v1305 = vunpack.c.l.b16 %v308
    %v1306 = vunpack.c.h.b16 %v308
    %v1307 = vunpack.c.l.b16 %v309
    %v1308 = vunpack.c.h.b16 %v309
    %v1309 = vunpack.c.l.b16 %v310
    %v1310 = vunpack.c.h.b16 %v310
    %v1311 = vunpack.c.l.b16 %v311
    %v1312 = vunpack.c.h.b16 %v311
    %v1313 = vunpack.c.l.b16 %v312
    %v1314 = vunpack.c.h.b16 %v312
    %v1315 = vunpack.c.l.b16 %v313
    %v1316 = vunpack.c.h.b16 %v313
    %v1317 = vunpack.c.l.b16 %v314
    %v1318 = vunpack.c.h.b16 %v314
    %v1319 = vunpack.c.l.b16 %v315
    %v1320 = vunpack.c.h.b16 %v315
    %v1321 = vunpack.c.l.b16 %v316
    %v1322 = vunpack.c.h.b16 %v316
    %v1323 = vunpack.c.l.b16 %v317
    %v1324 = vunpack.c.h.b16 %v317
    %v1325 = vunpack.c.l.b16 %v318
    %v1326 = vunpack.c.h.b16 %v318
    %v1327 = vunpack.c.l.b16 %v319
    %v1328 = vunpack.c.h.b16 %v319
    %v1329 = vunpack.c.l.b16 %v320
    %v1330 = vunpack.c.h.b16 %v320
    %v1331 = vunpack.c.l.b16 %v321
    %v1332 = vunpack.c.h.b16 %v321
    %v1333 = vunpack.c.l.b16 %v322
    %v1334 = vunpack.c.h.b16 %v322
    %v1335 = vunpack.c.l.b16 %v323
    %v1336 = vunpack.c.h.b16 %v323
    %v1337 = vunpack.c.l.b16 %v324
    %v1338 = vunpack.c.h.b16 %v324
    %v1339 = vunpack.c.l.b16 %v325
    %v1340 = vunpack.c.h.b16 %v325
    %v1341 = vunpack.c.l.b16 %v326
    %v1342 = vunpack.c.h.b16 %v326
    %v1343 = vunpack.c.l.b16 %v327
    %v1344 = vunpack.c.h.b16 %v327
    %v1345 = vunpack.c.l.b16 %v328
    %v1346 = vunpack.c.h.b16 %v328
    %v1347 = vunpack.c.l.b16 %v329
    %v1348 = vunpack.c.h.b16 %v329
    %v1349 = vunpack.c.l.b16 %v330
    %v1350 = vunpack.c.h.b16 %v330
    %v1351 = vunpack.c.l.b16 %v331
    %v1352 = vunpack.c.h.b16 %v331
    %v1353 = vunpack.c.l.b16 %v332
    %v1354 = vunpack.c.h.b16 %v332
    %v1355 = vunpack.c.l.b16 %v333
    %v1356 = vunpack.c.h.b16 %v333
    %v1357 = vunpack.c.l.b16 %v334
    %v1358 = vunpack.c.h.b16 %v334
    %v1359 = vunpack.c.l.b16 %v335
    %v1360 = vunpack.c.h.b16 %v335
    %v1361 = vunpack.c.l.b16 %v336
    %v1362 = vunpack.c.h.b16 %v336
    %v1363 = vunpack.c.l.b16 %v337
    %v1364 = vunpack.c.h.b16 %v337
    %v1365 = vunpack.c.l.b16 %v338
    %v1366 = vunpack.c.h.b16 %v338
    %v1367 = vunpack.c.l.b16 %v339
    %v1368 = vunpack.c.h.b16 %v339
    %v1369 = vunpack.c.l.b16 %v340
    %v1370 = vunpack.c.h.b16 %v340
    %v1371 = vunpack.c.l.b16 %v341
    %v1372 = vunpack.c.h.b16 %v341
    %v1373 = vunpack.c.l.b16 %v342
    %v1374 = vunpack.c.h.b16 %v342
    %v1375 = vunpack.c.l.b16 %v343
    %v1376 = vunpack.c.h.b16 %v343
    %v1377 = vunpack.c.l.b16 %v344
    %v1378 = vunpack.c.h.b16 %v344
    %v1379 = vunpack.c.l.b16 %v345
    %v1380 = vunpack.c.h.b16 %v345
    %v1381 = vunpack.c.l.b16 %v346
    %v1382 = vunpack.c.h.b16 %v346
    %v1383 = vunpack.c.l.b16 %v347
    %v1384 = vunpack.c.h.b16 %v347
    %v1385 = vunpack.c.l.b16 %v348
    %v1386 = vunpack.c.h.b16 %v348
    %v1387 = vunpack.c.l.b16 %v349
    %v1388 = vunpack.c.h.b16 %v349
    %v1389 = vunpack.c.l.b16 %v350
    %v1390 = vunpack.c.h.b16 %v350
    %v1391 = vunpack.c.l.b16 %v351
    %v1392 = vunpack.c.h.b16 %v351
    %v1393 = vunpack.c.l.b16 %v352
    %v1394 = vunpack.c.h.b16 %v352
    %v1395 = vunpack.c.l.b16 %v353
    %v1396 = vunpack.c.h.b16 %v353
    %v1397 = vunpack.c.l.b16 %v354
    %v1398 = vunpack.c.h.b16 %v354
    %v1399 = vunpack.c.l.b16 %v355
    %v1400 = vunpack.c.h.b16 %v355
    %v1401 = vunpack.c.l.b16 %v356
    %v1402 = vunpack.c.h.b16 %v356
    %v1403 = vunpack.c.l.b16 %v357
    %v1404 = vunpack.c.h.b16 %v357
    %v1405 = vunpack.c.l.b16 %v358
    %v1406 = vunpack.c.h.b16 %v358
    %v1407 = vunpack.c.l.b16 %v359
    %v1408 = vunpack.c.h.b16 %v359
    %v1409 = vunpack.c.l.b16 %v360
    %v1410 = vunpack.c.h.b16 %v360
    %v1411 = vunpack.c.l.b16 %v361
    %v1412 = vunpack.c.h.b16 %v361
    %v1413 = vunpack.c.l.b16 %v362
    %v1414 = vunpack.c.h.b16 %v362
    %v1415 = vunpack.c.l.b16 %v363
    %v1416 = vunpack.c.h.b16 %v363
    %v1417 = vunpack.c.l.b16 %v364
    %v1418 = vunpack.c.h.b16 %v364
    %v1419 = vunpack.c.l.b16 %v365
    %v1420 = vunpack.c.h.b16 %v365
    %v1421 = vunpack.c.l.b16 %v366
    %v1422 = vunpack.c.h.b16 %v366
    %v1423 = vunpack.c.l.b16 %v367
    %v1424 = vunpack.c.h.b16 %v367
    %v1425 = vunpack.c.l.b16 %v368
    %v1426 = vunpack.c.h.b16 %v368
    %v1427 = vunpack.c.l.b16 %v369
    %v1428 = vunpack.c.h.b16 %v369
    %v1429 = vunpack.c.l.b16 %v370
    %v1430 = vunpack.c.h.b16 %v370
    %v1431 = vunpack.c.l.b16 %v371
    %v1432 = vunpack.c.h.b16 %v371
    %v1433 = vunpack.c.l.b16 %v372
    %v1434 = vunpack.c.h.b16 %v372
    %v1435 = vunpack.c.l.b16 %v373
    %v1436 = vunpack.c.h.b16 %v373
    %v1437 = vunpack.c.l.b16 %v374
    %v1438 = vunpack.c.h.b16 %v374
    %v1439 = vunpack.c.l.b16 %v375
    %v1440 = vunpack.c.h.b16 %v375
    %v1441 = vunpack.c.l.b16 %v376
    %v1442 = vunpack.c.h.b16 %v376
    %v1443 = vunpack.c.l.b16 %v377
    %v1444 = vunpack.c.h.b16 %v377
    %v1445 = vunpack.c.l.b16 %v378
    %v1446 = vunpack.c.h.b16 %v378
    %v1447 = vunpack.c.l.b16 %v379
    %v1448 = vunpack.c.h.b16 %v379
    %v1449 = vunpack.c.l.b16 %v380
    %v1450 = vunpack.c.h.b16 %v380
    %v1451 = vunpack.c.l.b16 %v381
    %v1452 = vunpack.c.h.b16 %v381
    %v1453 = vunpack.c.l.b16 %v382
    %v1454 = vunpack.c.h.b16 %v382
    %v1455 = vunpack.c.l.b16 %v383
    %v1456 = vunpack.c.h.b16 %v383
    %v1457 = vunpack.c.l.b16 %v384
    %v1458 = vunpack.c.h.b16 %v384
    %v1459 = vunpack.c.l.b16 %v385
    %v1460 = vunpack.c.h.b16 %v385
    %v1461 = vunpack.c.l.b16 %v386
    %v1462 = vunpack.c.h.b16 %v386
    %v1463 = vunpack.c.l.b16 %v387
    %v1464 = vunpack.c.h.b16 %v387
    %v1465 = vunpack.c.l.b16 %v388
    %v1466 = vunpack.c.h.b16 %v388
    %v1467 = vunpack.c.l.b16 %v389
    %v1468 = vunpack.c.h.b16 %v389
    %v1469 = vunpack.c.l.b16 %v390
    %v1470 = vunpack.c.h.b16 %v390
    %v1471 = vunpack.c.l.b16 %v391
    %v1472 = vunpack.c.h.b16 %v391
    %v1473 = vunpack.c.l.b16 %v392
    %v1474 = vunpack.c.h.b16 %v392
    %v1475 = vunpack.c.l.b16 %v393
    %v1476 = vunpack.c.h.b16 %v393
    %v1477 = vunpack.c.l.b16 %v394
    %v1478 = vunpack.c.h.b16 %v394
    %v1479 = vunpack.c.l.b16 %v395
    %v1480 = vunpack.c.h.b16 %v395
    %v1481 = vunpack.c.l.b16 %v396
    %v1482 = vunpack.c.h.b16 %v396
    %v1483 = vunpack.c.l.b16 %v397
    %v1484 = vunpack.c.h.b16 %v397
    %v1485 = vunpack.c.l.b16 %v398
    %v1486 = vunpack.c.h.b16 %v398
    %v1487 = vunpack.c.l.b16 %v399
    %v1488 = vunpack.c.h.b16 %v399
    %v1489 = vunpack.c.l.b16 %v400
    %v1490 = vunpack.c.h.b16 %v400
    %v1491 = vunpack.c.l.b16 %v401
    %v1492 = vunpack.c.h.b16 %v401
    %v1493 = vunpack.c.l.b16 %v402
    %v1494 = vunpack.c.h.b16 %v402
    %v1495 = vunpack.c.l.b16 %v403
    %v1496 = vunpack.c.h.b16 %v403
    %v1497 = vunpack.c.l.b16 %v404
    %v1498 = vunpack.c.h.b16 %v404
    %v1499 = vunpack.c.l.b16 %v405
    %v1500 = vunpack.c.h.b16 %v405
    %v1501 = vunpack.c.l.b16 %v406
    %v1502 = vunpack.c.h.b16 %v406
    %v1503 = vunpack.c.l.b16 %v407
    %v1504 = vunpack.c.h.b16 %v407
    %v1505 = vunpack.c.l.b16 %v408
    %v1506 = vunpack.c.h.b16 %v408
    %v1507 = vunpack.c.l.b16 %v409
    %v1508 = vunpack.c.h.b16 %v409
    %v1509 = vunpack.c.l.b16 %v410
    %v1510 = vunpack.c.h.b16 %v410
    %v1511 = vunpack.c.l.b16 %v411
    %v1512 = vunpack.c.h.b16 %v411
    %v1513 = vunpack.c.l.b16 %v412
    %v1514 = vunpack.c.h.b16 %v412
    %v1515 = vunpack.c.l.b16 %v413
    %v1516 = vunpack.c.h.b16 %v413
    %v1517 = vunpack.c.l.b16 %v414
    %v1518 = vunpack.c.h.b16 %v414
    %v1519 = vunpack.c.l.b16 %v415
    %v1520 = vunpack.c.h.b16 %v415
    %v1521 = vunpack.c.l.b16 %v416
    %v1522 = vunpack.c.h.b16 %v416
    %v1523 = vunpack.c.l.b16 %v417
    %v1524 = vunpack.c.h.b16 %v417
    %v1525 = vunpack.c.l.b16 %v418
    %v1526 = vunpack.c.h.b16 %v418
    %v1527 = vunpack.c.l.b16 %v419
    %v1528 = vunpack.c.h.b16 %v419
    %v1529 = vunpack.c.l.b16 %v420
    %v1530 = vunpack.c.h.b16 %v420
    %v1531 = vunpack.c.l.b16 %v421
    %v1532 = vunpack.c.h.b16 %v421
    %v1533 = vunpack.c.l.b16 %v422
    %v1534 = vunpack.c.h.b16 %v422
    %v1535 = vunpack.c.l.b16 %v423
    %v1536 = vunpack.c.h.b16 %v423
    %v1537 = vunpack.c.l.b16 %v424
    %v1538 = vunpack.c.h.b16 %v424
    %v1539 = vunpack.c.l.b16 %v425
    %v1540 = vunpack.c.h.b16 %v425
    %v1541 = vunpack.c.l.b16 %v426
    %v1542 = vunpack.c.h.b16 %v426
    %v1543 = vunpack.c.l.b16 %v427
    %v1544 = vunpack.c.h.b16 %v427
    %v1545 = vunpack.c.l.b16 %v428
    %v1546 = vunpack.c.h.b16 %v428
    %v1547 = vunpack.c.l.b16 %v429
    %v1548 = vunpack.c.h.b16 %v429
    %v1549 = vunpack.c.l.b16 %v430
    %v1550 = vunpack.c.h.b16 %v430
    %v1551 = vunpack.c.l.b16 %v431
    %v1552 = vunpack.c.h.b16 %v431
    %v1553 = vunpack.c.l.b16 %v432
    %v1554 = vunpack.c.h.b16 %v432
    %v1555 = vunpack.c.l.b16 %v433
    %v1556 = vunpack.c.h.b16 %v433
    %v1557 = vunpack.c.l.b16 %v434
    %v1558 = vunpack.c.h.b16 %v434
    %v1559 = vunpack.c.l.b16 %v435
    %v1560 = vunpack.c.h.b16 %v435
    %v1561 = vunpack.c.l.b16 %v436
    %v1562 = vunpack.c.h.b16 %v436
    %v1563 = vunpack.c.l.b16 %v437
    %v1564 = vunpack.c.h.b16 %v437
    %v1565 = vunpack.c.l.b16 %v438
    %v1566 = vunpack.c.h.b16 %v438
    %v1567 = vunpack.c.l.b16 %v439
    %v1568 = vunpack.c.h.b16 %v439
    %v1569 = vunpack.c.l.b16 %v440
    %v1570 = vunpack.c.h.b16 %v440
    %v1571 = vunpack.c.l.b16 %v441
    %v1572 = vunpack.c.h.b16 %v441
    %v1573 = vunpack.c.l.b16 %v442
    %v1574 = vunpack.c.h.b16 %v442
    %v1575 = vunpack.c.l.b16 %v443
    %v1576 = vunpack.c.h.b16 %v443
    %v1577 = vunpack.c.l.b16 %v444
    %v1578 = vunpack.c.h.b16 %v444
    %v1579 = vunpack.c.l.b16 %v445
    %v1580 = vunpack.c.h.b16 %v445
    %v1581 = vunpack.c.l.b16 %v446
    %v1582 = vunpack.c.h.b16 %v446
    %v1583 = vunpack.c.l.b16 %v447
    %v1584 = vunpack.c.h.b16 %v447
    %v1585 = vunpack.c.l.b16 %v448
    %v1586 = vunpack.c.h.b16 %v448
    %v1587 = vunpack.c.l.b16 %v449
    %v1588 = vunpack.c.h.b16 %v449
    %v1589 = vunpack.c.l.b16 %v450
    %v1590 = vunpack.c.h.b16 %v450
    %v1591 = vunpack.c.l.b16 %v451
    %v1592 = vunpack.c.h.b16 %v451
    %v1593 = vunpack.c.l.b16 %v452
    %v1594 = vunpack.c.h.b16 %v452
    %v1595 = vunpack.c.l.b16 %v453
    %v1596 = vunpack.c.h.b16 %v453
    %v1597 = vunpack.c.l.b16 %v454
    %v1598 = vunpack.c.h.b16 %v454
    %v1599 = vunpack.c.l.b16 %v455
    %v1600 = vunpack.c.h.b16 %v455
    %v1601 = vunpack.c.l.b16 %v456
    %v1602 = vunpack.c.h.b16 %v456
    %v1603 = vunpack.c.l.b16 %v457
    %v1604 = vunpack.c.h.b16 %v457
    %v1605 = vunpack.c.l.b16 %v458
    %v1606 = vunpack.c.h.b16 %v458
    %v1607 = vunpack.c.l.b16 %v459
    %v1608 = vunpack.c.h.b16 %v459
    %v1609 = vunpack.c.l.b16 %v460
    %v1610 = vunpack.c.h.b16 %v460
    %v1611 = vunpack.c.l.b16 %v461
    %v1612 = vunpack.c.h.b16 %v461
    %v1613 = vunpack.c.l.b16 %v462
    %v1614 = vunpack.c.h.b16 %v462
    %v1615 = vunpack.c.l.b16 %v463
    %v1616 = vunpack.c.h.b16 %v463
    %v1617 = vunpack.c.l.b16 %v464
    %v1618 = vunpack.c.h.b16 %v464
    %v1619 = vunpack.c.l.b16 %v465
    %v1620 = vunpack.c.h.b16 %v465
    %v1621 = vunpack.c.l.b16 %v466
    %v1622 = vunpack.c.h.b16 %v466
    %v1623 = vunpack.c.l.b16 %v467
    %v1624 = vunpack.c.h.b16 %v467
    %v1625 = vunpack.c.l.b16 %v468
    %v1626 = vunpack.c.h.b16 %v468
    %v1627 = vunpack.c.l.b16 %v469
    %v1628 = vunpack.c.h.b16 %v469
    %v1629 = vunpack.c.l.b16 %v470
    %v1630 = vunpack.c.h.b16 %v470
    %v1631 = vunpack.c.l.b16 %v471
    %v1632 = vunpack.c.h.b16 %v471
    %v1633 = vunpack.c.l.b16 %v472
    %v1634 = vunpack.c.h.b16 %v472
    %v1635 = vunpack.c.l.b16 %v473
    %v1636 = vunpack.c.h.b16 %v473
    %v1637 = vunpack.c.l.b16 %v474
    %v1638 = vunpack.c.h.b16 %v474
    %v1639 = vunpack.c.l.b16 %v475
    %v1640 = vunpack.c.h.b16 %v475
    %v1641 = vunpack.c.l.b16 %v476
    %v1642 = vunpack.c.h.b16 %v476
    %v1643 = vunpack.c.l.b16 %v477
    %v1644 = vunpack.c.h.b16 %v477
    %v1645 = vunpack.c.l.b16 %v478
    %v1646 = vunpack.c.h.b16 %v478
    %v1647 = vunpack.c.l.b16 %v479
    %v1648 = vunpack.c.h.b16 %v479
    %v1649 = vunpack.c.l.b16 %v480
    %v1650 = vunpack.c.h.b16 %v480
    %v1651 = vunpack.c.l.b16 %v481
    %v1652 = vunpack.c.h.b16 %v481
    %v1653 = vunpack.c.l.b16 %v482
    %v1654 = vunpack.c.h.b16 %v482
    %v1655 = vunpack.c.l.b16 %v483
    %v1656 = vunpack.c.h.b16 %v483
    %v1657 = vunpack.c.l.b16 %v484
    %v1658 = vunpack.c.h.b16 %v484
    %v1659 = vunpack.c.l.b16 %v485
    %v1660 = vunpack.c.h.b16 %v485
    %v1661 = vunpack.c.l.b16 %v486
    %v1662 = vunpack.c.h.b16 %v486
    %v1663 = vunpack.c.l.b16 %v487
    %v1664 = vunpack.c.h.b16 %v487
    %v1665 = vunpack.c.l.b16 %v488
    %v1666 = vunpack.c.h.b16 %v488
    %v1667 = vunpack.c.l.b16 %v489
    %v1668 = vunpack.c.h.b16 %v489
    %v1669 = vunpack.c.l.b16 %v490
    %v1670 = vunpack.c.h.b16 %v490
    %v1671 = vunpack.c.l.b16 %v491
    %v1672 = vunpack.c.h.b16 %v491
    %v1673 = vunpack.c.l.b16 %v492
    %v1674 = vunpack.c.h.b16 %v492
    %v1675 = vunpack.c.l.b16 %v493
    %v1676 = vunpack.c.h.b16 %v493
    %v1677 = vunpack.c.l.b16 %v494
    %v1678 = vunpack.c.h.b16 %v494
    %v1679 = vunpack.c.l.b16 %v495
    %v1680 = vunpack.c.h.b16 %v495
    %v1681 = vunpack.c.l.b16 %v496
    %v1682 = vunpack.c.h.b16 %v496
    %v1683 = vunpack.c.l.b16 %v497
    %v1684 = vunpack.c.h.b16 %v497
    %v1685 = vunpack.c.l.b16 %v498
    %v1686 = vunpack.c.h.b16 %v498
    %v1687 = vunpack.c.l.b16 %v499
    %v1688 = vunpack.c.h.b16 %v499
    %v1689 = vunpack.c.l.b16 %v500
    %v1690 = vunpack.c.h.b16 %v500
    %v1691 = vunpack.c.l.b16 %v501
    %v1692 = vunpack.c.h.b16 %v501
    %v1693 = vunpack.c.l.b16 %v502
    %v1694 = vunpack.c.h.b16 %v502
    %v1695 = vunpack.c.l.b16 %v503
    %v1696 = vunpack.c.h.b16 %v503
    %v1697 = vunpack.c.l.b16 %v504
    %v1698 = vunpack.c.h.b16 %v504
    %v1699 = vunpack.c.l.b16 %v505
    %v1700 = vunpack.c.h.b16 %v505
    %v1701 = vunpack.c.l.b16 %v506
    %v1702 = vunpack.c.h.b16 %v506
    %v1703 = vunpack.c.l.b16 %v507
    %v1704 = vunpack.c.h.b16 %v507
    %v1705 = vunpack.c.l.b16 %v508
    %v1706 = vunpack.c.h.b16 %v508
    %v1707 = vunpack.c.l.b16 %v509
    %v1708 = vunpack.c.h.b16 %v509
    %v1709 = vunpack.c.l.b16 %v510
    %v1710 = vunpack.c.h.b16 %v510
    %v1711 = vunpack.c.l.b16 %v511
    %v1712 = vunpack.c.h.b16 %v511
    %v1713 = vunpack.c.l.b16 %v512
    %v1714 = vunpack.c.h.b16 %v512
    %v1715 = vunpack.c.l.b16 %v513
    %v1716 = vunpack.c.h.b16 %v513
    %v1717 = vunpack.c.l.b16 %v514
    %v1718 = vunpack.c.h.b16 %v514
    %v1719 = vunpack.c.l.b16 %v515
    %v1720 = vunpack.c.h.b16 %v515
    %v1721 = vunpack.c.l.b16 %v516
    %v1722 = vunpack.c.h.b16 %v516
    %v1723 = vunpack.c.l.b16 %v517
    %v1724 = vunpack.c.h.b16 %v517
    %v1725 = vunpack.c.l.b16 %v518
    %v1726 = vunpack.c.h.b16 %v518
    %v1727 = vpack.c.b16 %v951, %v943
    %v1728 = vpack.c.b16 %v952, %v944
    %v1729 = vpack.c.b16 %v953, %v945
    %v1730 = vpack.c.b16 %v954, %v946
    %v1731 = vpack.c.b16 %v955, %v947
    %v1732 = vpack.c.b16 %v956, %v948
    %v1733 = vpack.c.b16 %v957, %v949
    %v1734 = vpack.c.b16 %v958, %v950
    %v1735 = vpack.c.b16 %v967, %v959
    %v1736 = vpack.c.b16 %v968, %v960
    %v1737 = vpack.c.b16 %v969, %v961
    %v1738 = vpack.c.b16 %v970, %v962
    %v1739 = vpack.c.b16 %v971, %v963
    %v1740 = vpack.c.b16 %v972, %v964
    %v1741 = vpack.c.b16 %v973, %v965
    %v1742 = vpack.c.b16 %v974, %v966
    %v1743 = vpack.c.b16 %v983, %v975
    %v1744 = vpack.c.b16 %v984, %v976
    %v1745 = vpack.c.b16 %v985, %v977
    %v1746 = vpack.c.b16 %v986, %v978
    %v1747 = vpack.c.b16 %v987, %v979
    %v1748 = vpack.c.b16 %v988, %v980
    %v1749 = vpack.c.b16 %v989, %v981
    %v1750 = vpack.c.b16 %v990, %v982
    %v1751 = vpack.c.b16 %v999, %v991
    %v1752 = vpack.c.b16 %v1000, %v992
    %v1753 = vpack.c.b16 %v1001, %v993
    %v1754 = vpack.c.b16 %v1002, %v994
    %v1755 = vpack.c.b16 %v1003, %v995
    %v1756 = vpack.c.b16 %v1004, %v996
    %v1757 = vpack.c.b16 %v1005, %v997
    %v1758 = vpack.c.b16 %v1006, %v998
    %v1759 = vpack.c.b16 %v1015, %v1007
    %v1760 = vpack.c.b16 %v1016, %v1008
    %v1761 = vpack.c.b16 %v1017, %v1009
    %v1762 = vpack.c.b16 %v1018, %v1010
    %v1763 = vpack.c.b16 %v1019, %v1011
    %v1764 = vpack.c.b16 %v1020, %v1012
    %v1765 = vpack.c.b16 %v1021, %v1013
    %v1766 = vpack.c.b16 %v1022, %v1014
    %v1767 = vpack.c.b16 %v1031, %v1023
    %v1768 = vpack.c.b16 %v1032, %v1024
    %v1769 = vpack.c.b16 %v1033, %v1025
    %v1770 = vpack.c.b16 %v1034, %v1026
    %v1771 = vpack.c.b16 %v1035, %v1027
    %v1772 = vpack.c.b16 %v1036, %v1028
    %v1773 = vpack.c.b16 %v1037, %v1029
    %v1774 = vpack.c.b16 %v1038, %v1030
    %v1775 = vpack.c.b16 %v1047, %v1039
    %v1776 = vpack.c.b16 %v1048, %v1040
    %v1777 = vpack.c.b16 %v1049, %v1041
    %v1778 = vpack.c.b16 %v1050, %v1042
    %v1779 = vpack.c.b16 %v1051, %v1043
    %v1780 = vpack.c.b16 %v1052, %v1044
    %v1781 = vpack.c.b16 %v1053, %v1045
    %v1782 = vpack.c.b16 %v1054, %v1046
    %v1783 = vpack.c.b16 %v1063, %v1055
    %v1784 = vpack.c.b16 %v1064, %v1056
    %v1785 = vpack.c.b16 %v1065, %v1057
    %v1786 = vpack.c.b16 %v1066, %v1058
    %v1787 = vpack.c.b16 %v1067, %v1059
    %v1788 = vpack.c.b16 %v1068, %v1060
    %v1789 = vpack.c.b16 %v1069, %v1061
    %v1790 = vpack.c.b16 %v1070, %v1062
    %v1791 = vpack.c.b16 %v1079, %v1071
    %v1792 = vpack.c.b16 %v1080, %v1072
    %v1793 = vpack.c.b16 %v1081, %v1073
    %v1794 = vpack.c.b16 %v1082, %v1074
    %v1795 = vpack.c.b16 %v1083, %v1075
    %v1796 = vpack.c.b16 %v1084, %v1076
    %v1797 = vpack.c.b16 %v1085, %v1077
    %v1798 = vpack.c.b16 %v1086, %v1078
    %v1799 = vpack.c.b16 %v1095, %v1087
    %v1800 = vpack.c.b16 %v1096, %v1088
    %v1801 = vpack.c.b16 %v1097, %v1089
    %v1802 = vpack.c.b16 %v1098, %v1090
    %v1803 = vpack.c.b16 %v1099, %v1091
    %v1804 = vpack.c.b16 %v1100, %v1092
    %v1805 = vpack.c.b16 %v1101, %v1093
    %v1806 = vpack.c.b16 %v1102, %v1094
    %v1807 = vpack.c.b16 %v1111, %v1103
    %v1808 = vpack.c.b16 %v1112, %v1104
    %v1809 = vpack.c.b16 %v1113, %v1105
    %v1810 = vpack.c.b16 %v1114, %v1106
    %v1811 = vpack.c.b16 %v1115, %v1107
    %v1812 = vpack.c.b16 %v1116, %v1108
    %v1813 = vpack.c.b16 %v1117, %v1109
    %v1814 = vpack.c.b16 %v1118, %v1110
    %v1815 = vpack.c.b16 %v1127, %v1119
    %v1816 = vpack.c.b16 %v1128, %v1120
    %v1817 = vpack.c.b16 %v1129, %v1121
    %v1818 = vpack.c.b16 %v1130, %v1122
    %v1819 = vpack.c.b16 %v1131, %v1123
    %v1820 = vpack.c.b16 %v1132, %v1124
    %v1821 = vpack.c.b16 %v1133, %v1125
    %v1822 = vpack.c.b16 %v1134, %v1126
    %v1823 = vpack.c.b16 %v1143, %v1135
    %v1824 = vpack.c.b16 %v1144, %v1136
    %v1825 = vpack.c.b16 %v1145, %v1137
    %v1826 = vpack.c.b16 %v1146, %v1138
    %v1827 = vpack.c.b16 %v1147, %v1139
    %v1828 = vpack.c.b16 %v1148, %v1140
    %v1829 = vpack.c.b16 %v1149, %v1141
    %v1830 = vpack.c.b16 %v1150, %v1142
    %v1831 = vpack.c.b16 %v1159, %v1151
    %v1832 = vpack.c.b16 %v1160, %v1152
    %v1833 = vpack.c.b16 %v1161, %v1153
    %v1834 = vpack.c.b16 %v1162, %v1154
    %v1835 = vpack.c.b16 %v1163, %v1155
    %v1836 = vpack.c.b16 %v1164, %v1156
    %v1837 = vpack.c.b16 %v1165, %v1157
    %v1838 = vpack.c.b16 %v1166, %v1158
    %v1839 = vpack.c.b16 %v1175, %v1167
    %v1840 = vpack.c.b16 %v1176, %v1168
    %v1841 = vpack.c.b16 %v1177, %v1169
    %v1842 = vpack.c.b16 %v1178, %v1170
    %v1843 = vpack.c.b16 %v1179, %v1171
    %v1844 = vpack.c.b16 %v1180, %v1172
    %v1845 = vpack.c.b16 %v1181, %v1173
    %v1846 = vpack.c.b16 %v1182, %v1174
    %v1847 = vpack.c.b16 %v1191, %v1183
    %v1848 = vpack.c.b16 %v1192, %v1184
    %v1849 = vpack.c.b16 %v1193, %v1185
    %v1850 = vpack.c.b16 %v1194, %v1186
    %v1851 = vpack.c.b16 %v1195, %v1187
    %v1852 = vpack.c.b16 %v1196, %v1188
    %v1853 = vpack.c.b16 %v1197, %v1189
    %v1854 = vpack.c.b16 %v1198, %v1190
    %v1855 = vpack.c.b16 %v1207, %v1199
    %v1856 = vpack.c.b16 %v1208, %v1200
    %v1857 = vpack.c.b16 %v1209, %v1201
    %v1858 = vpack.c.b16 %v1210, %v1202
    %v1859 = vpack.c.b16 %v1211, %v1203
    %v1860 = vpack.c.b16 %v1212, %v1204
    %v1861 = vpack.c.b16 %v1213, %v1205
    %v1862 = vpack.c.b16 %v1214, %v1206
    %v1863 = vpack.c.b16 %v1223, %v1215
    %v1864 = vpack.c.b16 %v1224, %v1216
    %v1865 = vpack.c.b16 %v1225, %v1217
    %v1866 = vpack.c.b16 %v1226, %v1218
    %v1867 = vpack.c.b16 %v1227, %v1219
    %v1868 = vpack.c.b16 %v1228, %v1220
    %v1869 = vpack.c.b16 %v1229, %v1221
    %v1870 = vpack.c.b16 %v1230, %v1222
    %v1871 = vpack.c.b16 %v1239, %v1231
    %v1872 = vpack.c.b16 %v1240, %v1232
    %v1873 = vpack.c.b16 %v1241, %v1233
    %v1874 = vpack.c.b16 %v1242, %v1234
    %v1875 = vpack.c.b16 %v1243, %v1235
    %v1876 = vpack.c.b16 %v1244, %v1236
    %v1877 = vpack.c.b16 %v1245, %v1237
    %v1878 = vpack.c.b16 %v1246, %v1238
    %v1879 = vpack.c.b16 %v1255, %v1247
    %v1880 = vpack.c.b16 %v1256, %v1248
    %v1881 = vpack.c.b16 %v1257, %v1249
    %v1882 = vpack.c.b16 %v1258, %v1250
    %v1883 = vpack.c.b16 %v1259, %v1251
    %v1884 = vpack.c.b16 %v1260, %v1252
    %v1885 = vpack.c.b16 %v1261, %v1253
    %v1886 = vpack.c.b16 %v1262, %v1254
    %v1887 = vpack.c.b16 %v1271, %v1263
    %v1888 = vpack.c.b16 %v1272, %v1264
    %v1889 = vpack.c.b16 %v1273, %v1265
    %v1890 = vpack.c.b16 %v1274, %v1266
    %v1891 = vpack.c.b16 %v1275, %v1267
    %v1892 = vpack.c.b16 %v1276, %v1268
    %v1893 = vpack.c.b16 %v1277, %v1269
    %v1894 = vpack.c.b16 %v1278, %v1270
    %v1895 = vpack.c.b16 %v1287, %v1279
    %v1896 = vpack.c.b16 %v1288, %v1280
    %v1897 = vpack.c.b16 %v1289, %v1281
    %v1898 = vpack.c.b16 %v1290, %v1282
    %v1899 = vpack.c.b16 %v1291, %v1283
    %v1900 = vpack.c.b16 %v1292, %v1284
    %v1901 = vpack.c.b16 %v1293, %v1285
    %v1902 = vpack.c.b16 %v1294, %v1286
    %v1903 = vpack.c.b16 %v1303, %v1295
    %v1904 = vpack.c.b16 %v1304, %v1296
    %v1905 = vpack.c.b16 %v1305, %v1297
    %v1906 = vpack.c.b16 %v1306, %v1298
    %v1907 = vpack.c.b16 %v1307, %v1299
    %v1908 = vpack.c.b16 %v1308, %v1300
    %v1909 = vpack.c.b16 %v1309, %v1301
    %v1910 = vpack.c.b16 %v1310, %v1302
    %v1911 = vpack.c.b16 %v1319, %v1311
    %v1912 = vpack.c.b16 %v1320, %v1312
    %v1913 = vpack.c.b16 %v1321, %v1313
    %v1914 = vpack.c.b16 %v1322, %v1314
    %v1915 = vpack.c.b16 %v1323, %v1315
    %v1916 = vpack.c.b16 %v1324, %v1316
    %v1917 = vpack.c.b16 %v1325, %v1317
    %v1918 = vpack.c.b16 %v1326, %v1318
    %v1919 = vpack.c.b16 %v1335, %v1327
    %v1920 = vpack.c.b16 %v1336, %v1328
    %v1921 = vpack.c.b16 %v1337, %v1329
    %v1922 = vpack.c.b16 %v1338, %v1330
    %v1923 = vpack.c.b16 %v1339, %v1331
    %v1924 = vpack.c.b16 %v1340, %v1332
    %v1925 = vpack.c.b16 %v1341, %v1333
    %v1926 = vpack.c.b16 %v1342, %v1334
    %v1927 = vpack.c.b16 %v1351, %v1343
    %v1928 = vpack.c.b16 %v1352, %v1344
    %v1929 = vpack.c.b16 %v1353, %v1345
    %v1930 = vpack.c.b16 %v1354, %v1346
    %v1931 = vpack.c.b16 %v1355, %v1347
    %v1932 = vpack.c.b16 %v1356, %v1348
    %v1933 = vpack.c.b16 %v1357, %v1349
    %v1934 = vpack.c.b16 %v1358, %v1350
    %v1935 = vpack.c.b16 %v1367, %v1359
    %v1936 = vpack.c.b16 %v1368, %v1360
    %v1937 = vpack.c.b16 %v1369, %v1361
    %v1938 = vpack.c.b16 %v1370, %v1362
    %v1939 = vpack.c.b16 %v1371, %v1363
    %v1940 = vpack.c.b16 %v1372, %v1364
    %v1941 = vpack.c.b16 %v1373, %v1365
    %v1942 = vpack.c.b16 %v1374, %v1366
    %v1943 = vpack.c.b16 %v1383, %v1375
    %v1944 = vpack.c.b16 %v1384, %v1376
    %v1945 = vpack.c.b16 %v1385, %v1377
    %v1946 = vpack.c.b16 %v1386, %v1378
    %v1947 = vpack.c.b16 %v1387, %v1379
    %v1948 = vpack.c.b16 %v1388, %v1380
    %v1949 = vpack.c.b16 %v1389, %v1381
    %v1950 = vpack.c.b16 %v1390, %v1382
    %v1951 = vpack.c.b16 %v1399, %v1391
    %v1952 = vpack.c.b16 %v1400, %v1392
    %v1953 = vpack.c.b16 %v1401, %v1393
    %v1954 = vpack.c.b16 %v1402, %v1394
    %v1955 = vpack.c.b16 %v1403, %v1395
    %v1956 = vpack.c.b16 %v1404, %v1396
    %v1957 = vpack.c.b16 %v1405, %v1397
    %v1958 = vpack.c.b16 %v1406, %v1398
    %v1959 = vpack.c.b16 %v1415, %v1407
    %v1960 = vpack.c.b16 %v1416, %v1408
    %v1961 = vpack.c.b16 %v1417, %v1409
    %v1962 = vpack.c.b16 %v1418, %v1410
    %v1963 = vpack.c.b16 %v1419, %v1411
    %v1964 = vpack.c.b16 %v1420, %v1412
    %v1965 = vpack.c.b16 %v1421, %v1413
    %v1966 = vpack.c.b16 %v1422, %v1414
    %v1967 = vpack.c.b16 %v1431, %v1423
    %v1968 = vpack.c.b16 %v1432, %v1424
    %v1969 = vpack.c.b16 %v1433, %v1425
    %v1970 = vpack.c.b16 %v1434, %v1426
    %v1971 = vpack.c.b16 %v1435, %v1427
    %v1972 = vpack.c.b16 %v1436, %v1428
    %v1973 = vpack.c.b16 %v1437, %v1429
    %v1974 = vpack.c.b16 %v1438, %v1430
    %v1975 = vpack.c.b16 %v1447, %v1439
    %v1976 = vpack.c.b16 %v1448, %v1440
    %v1977 = vpack.c.b16 %v1449, %v1441
    %v1978 = vpack.c.b16 %v1450, %v1442
    %v1979 = vpack.c.b16 %v1451, %v1443
    %v1980 = vpack.c.b16 %v1452, %v1444
    %v1981 = vpack.c.b16 %v1453, %v1445
    %v1982 = vpack.c.b16 %v1454, %v1446
    %v1983 = vpack.c.b16 %v1463, %v1455
    %v1984 = vpack.c.b16 %v1464, %v1456
    %v1985 = vpack.c.b16 %v1465, %v1457
    %v1986 = vpack.c.b16 %v1466, %v1458
    %v1987 = vpack.c.b16 %v1467, %v1459
    %v1988 = vpack.c.b16 %v1468, %v1460
    %v1989 = vpack.c.b16 %v1469, %v1461
    %v1990 = vpack.c.b16 %v1470, %v1462
    %v1991 = vpack.c.b16 %v1479, %v1471
    %v1992 = vpack.c.b16 %v1480, %v1472
    %v1993 = vpack.c.b16 %v1481, %v1473
    %v1994 = vpack.c.b16 %v1482, %v1474
    %v1995 = vpack.c.b16 %v1483, %v1475
    %v1996 = vpack.c.b16 %v1484, %v1476
    %v1997 = vpack.c.b16 %v1485, %v1477
    %v1998 = vpack.c.b16 %v1486, %v1478
    %v1999 = vpack.c.b16 %v1495, %v1487
    %v2000 = vpack.c.b16 %v1496, %v1488
    %v2001 = vpack.c.b16 %v1497, %v1489
    %v2002 = vpack.c.b16 %v1498, %v1490
    %v2003 = vpack.c.b16 %v1499, %v1491
    %v2004 = vpack.c.b16 %v1500, %v1492
    %v2005 = vpack.c.b16 %v1501, %v1493
    %v2006 = vpack.c.b16 %v1502, %v1494
    %v2007 = vpack.c.b16 %v1511, %v1503
    %v2008 = vpack.c.b16 %v1512, %v1504
    %v2009 = vpack.c.b16 %v1513, %v1505
    %v2010 = vpack.c.b16 %v1514, %v1506
    %v2011 = vpack.c.b16 %v1515, %v1507
    %v2012 = vpack.c.b16 %v1516, %v1508
    %v2013 = vpack.c.b16 %v1517, %v1509
    %v2014 = vpack.c.b16 %v1518, %v1510
    %v2015 = vpack.c.b16 %v1527, %v1519
    %v2016 = vpack.c.b16 %v1528, %v1520
    %v2017 = vpack.c.b16 %v1529, %v1521
    %v2018 = vpack.c.b16 %v1530, %v1522
    %v2019 = vpack.c.b16 %v1531, %v1523
    %v2020 = vpack.c.b16 %v1532, %v1524
    %v2021 = vpack.c.b16 %v1533, %v1525
    %v2022 = vpack.c.b16 %v1534, %v1526
    %v2023 = vpack.c.b16 %v1543, %v1535
    %v2024 = vpack.c.b16 %v1544, %v1536
    %v2025 = vpack.c.b16 %v1545, %v1537
    %v2026 = vpack.c.b16 %v1546, %v1538
    %v2027 = vpack.c.b16 %v1547, %v1539
    %v2028 = vpack.c.b16 %v1548, %v1540
    %v2029 = vpack.c.b16 %v1549, %v1541
    %v2030 = vpack.c.b16 %v1550, %v1542
    %v2031 = vpack.c.b16 %v1559, %v1551
    %v2032 = vpack.c.b16 %v1560, %v1552
    %v2033 = vpack.c.b16 %v1561, %v1553
    %v2034 = vpack.c.b16 %v1562, %v1554
    %v2035 = vpack.c.b16 %v1563, %v1555
    %v2036 = vpack.c.b16 %v1564, %v1556
    %v2037 = vpack.c.b16 %v1565, %v1557
    %v2038 = vpack.c.b16 %v1566, %v1558
    %v2039 = vpack.c.b16 %v1575, %v1567
    %v2040 = vpack.c.b16 %v1576, %v1568
    %v2041 = vpack.c.b16 %v1577, %v1569
    %v2042 = vpack.c.b16 %v1578, %v1570
    %v2043 = vpack.c.b16 %v1579, %v1571
    %v2044 = vpack.c.b16 %v1580, %v1572
    %v2045 = vpack.c.b16 %v1581, %v1573
    %v2046 = vpack.c.b16 %v1582, %v1574
    %v2047 = vpack.c.b16 %v1591, %v1583
    %v2048 = vpack.c.b16 %v1592, %v1584
    %v2049 = vpack.c.b16 %v1593, %v1585
    %v2050 = vpack.c.b16 %v1594, %v1586
    %v2051 = vpack.c.b16 %v1595, %v1587
    %v2052 = vpack.c.b16 %v1596, %v1588
    %v2053 = vpack.c.b16 %v1597, %v1589
    %v2054 = vpack.c.b16 %v1598, %v1590
    %v2055 = vpack.c.b16 %v1607, %v1599
    %v2056 = vpack.c.b16 %v1608, %v1600
    %v2057 = vpack.c.b16 %v1609, %v1601
    %v2058 = vpack.c.b16 %v1610, %v1602
    %v2059 = vpack.c.b16 %v1611, %v1603
    %v2060 = vpack.c.b16 %v1612, %v1604
    %v2061 = vpack.c.b16 %v1613, %v1605
    %v2062 = vpack.c.b16 %v1614, %v1606
    %v2063 = vpack.c.b16 %v1623, %v1615
    %v2064 = vpack.c.b16 %v1624, %v1616
    %v2065 = vpack.c.b16 %v1625, %v1617
    %v2066 = vpack.c.b16 %v1626, %v1618
    %v2067 = vpack.c.b16 %v1627, %v1619
    %v2068 = vpack.c.b16 %v1628, %v1620
    %v2069 = vpack.c.b16 %v1629, %v1621
    %v2070 = vpack.c.b16 %v1630, %v1622
    %v2071 = vpack.c.b16 %v1639, %v1631
    %v2072 = vpack.c.b16 %v1640, %v1632
    %v2073 = vpack.c.b16 %v1641, %v1633
    %v2074 = vpack.c.b16 %v1642, %v1634
    %v2075 = vpack.c.b16 %v1643, %v1635
    %v2076 = vpack.c.b16 %v1644, %v1636
    %v2077 = vpack.c.b16 %v1645, %v1637
    %v2078 = vpack.c.b16 %v1646, %v1638
    %v2079 = vpack.c.b16 %v1655, %v1647
    %v2080 = vpack.c.b16 %v1656, %v1648
    %v2081 = vpack.c.b16 %v1657, %v1649
    %v2082 = vpack.c.b16 %v1658, %v1650
    %v2083 = vpack.c.b16 %v1659, %v1651
    %v2084 = vpack.c.b16 %v1660, %v1652
    %v2085 = vpack.c.b16 %v1661, %v1653
    %v2086 = vpack.c.b16 %v1662, %v1654
    %v2087 = vpack.c.b16 %v1671, %v1663
    %v2088 = vpack.c.b16 %v1672, %v1664
    %v2089 = vpack.c.b16 %v1673, %v1665
    %v2090 = vpack.c.b16 %v1674, %v1666
    %v2091 = vpack.c.b16 %v1675, %v1667
    %v2092 = vpack.c.b16 %v1676, %v1668
    %v2093 = vpack.c.b16 %v1677, %v1669
    %v2094 = vpack.c.b16 %v1678, %v1670
    %v2095 = vpack.c.b16 %v1687, %v1679
    %v2096 = vpack.c.b16 %v1688, %v1680
    %v2097 = vpack.c.b16 %v1689, %v1681
    %v2098 = vpack.c.b16 %v1690, %v1682
    %v2099 = vpack.c.b16 %v1691, %v1683
    %v2100 = vpack.c.b16 %v1692, %v1684
    %v2101 = vpack.c.b16 %v1693, %v1685
    %v2102 = vpack.c.b16 %v1694, %v1686
    %v2103 = vpack.c.b16 %v1703, %v1695
    %v2104 = vpack.c.b16 %v1704, %v1696
    %v2105 = vpack.c.b16 %v1705, %v1697
    %v2106 = vpack.c.b16 %v1706, %v1698
    %v2107 = vpack.c.b16 %v1707, %v1699
    %v2108 = vpack.c.b16 %v1708, %v1700
    %v2109 = vpack.c.b16 %v1709, %v1701
    %v2110 = vpack.c.b16 %v1710, %v1702
    %v2111 = vpack.c.b16 %v1719, %v1711
    %v2112 = vpack.c.b16 %v1720, %v1712
    %v2113 = vpack.c.b16 %v1721, %v1713
    %v2114 = vpack.c.b16 %v1722, %v1714
    %v2115 = vpack.c.b16 %v1723, %v1715
    %v2116 = vpack.c.b16 %v1724, %v1716
    %v2117 = vpack.c.b16 %v1725, %v1717
    %v2118 = vpack.c.b16 %v1726, %v1718
    %vm2511 = vcmask 130048
    %v2513 = vsel %vm2511, %v544, 0
    %2515 = vmatpush.bf16.msra.mxu0 %v1783
    %2516 = vmatpush.bf16.msra.mxu0 %v1775
    %2517 = vmatpush.bf16.msra.mxu0 %v1767
    %2518 = vmatpush.bf16.msra.mxu0 %v1759
    %2519 = vmatpush.bf16.msra.mxu0 %v1751
    %2520 = vmatpush.bf16.msra.mxu0 %v1743
    %2521 = vmatpush.bf16.msra.mxu0 %v1735
    %2522 = vmatpush.bf16.msra.mxu0 %v1727
    %2523 = vmatmul.bf16.gmra.mxu0 %v538
    %v2524 = vpop.f32.mrf.mxu0
    %v2525 = vadd.f32 %v519, %v2524
    %v2526 = vpop.f32.mrf.mxu0
    %2527 = vdwg.mxu0
    %2528 = vmatpush.bf16.msra.mxu0 %v1847
    %2529 = vmatpush.bf16.msra.mxu0 %v1839
    %2530 = vmatpush.bf16.msra.mxu0 %v1831
    %2531 = vmatpush.bf16.msra.mxu0 %v1823
    %2532 = vmatpush.bf16.msra.mxu0 %v1815
    %2533 = vmatpush.bf16.msra.mxu0 %v1807
    %2534 = vmatpush.bf16.msra.mxu0 %v1799
    %2535 = vmatpush.bf16.msra.mxu0 %v1791
    %2536 = vmatmul.bf16.gmra.mxu0 %v539
    %v2537 = vpop.f32.mrf.mxu0
    %v2538 = vadd.f32 %v2525, %v2537
    %v2539 = vpop.f32.mrf.mxu0
    %2540 = vdwg.mxu0
    %2541 = vmatpush.bf16.msra.mxu0 %v1911
    %2542 = vmatpush.bf16.msra.mxu0 %v1903
    %2543 = vmatpush.bf16.msra.mxu0 %v1895
    %2544 = vmatpush.bf16.msra.mxu0 %v1887
    %2545 = vmatpush.bf16.msra.mxu0 %v1879
    %2546 = vmatpush.bf16.msra.mxu0 %v1871
    %2547 = vmatpush.bf16.msra.mxu0 %v1863
    %2548 = vmatpush.bf16.msra.mxu0 %v1855
    %2549 = vmatmul.bf16.gmra.mxu0 %v540
    %v2550 = vpop.f32.mrf.mxu0
    %v2551 = vadd.f32 %v2538, %v2550
    %v2552 = vpop.f32.mrf.mxu0
    %2553 = vdwg.mxu0
    %2554 = vmatpush.bf16.msra.mxu0 %v1975
    %2555 = vmatpush.bf16.msra.mxu0 %v1967
    %2556 = vmatpush.bf16.msra.mxu0 %v1959
    %2557 = vmatpush.bf16.msra.mxu0 %v1951
    %2558 = vmatpush.bf16.msra.mxu0 %v1943
    %2559 = vmatpush.bf16.msra.mxu0 %v1935
    %2560 = vmatpush.bf16.msra.mxu0 %v1927
    %2561 = vmatpush.bf16.msra.mxu0 %v1919
    %2562 = vmatmul.bf16.gmra.mxu0 %v541
    %v2563 = vpop.f32.mrf.mxu0
    %v2564 = vadd.f32 %v2551, %v2563
    %v2565 = vpop.f32.mrf.mxu0
    %2566 = vdwg.mxu0
    %2567 = vmatpush.bf16.msra.mxu0 %v2039
    %2568 = vmatpush.bf16.msra.mxu0 %v2031
    %2569 = vmatpush.bf16.msra.mxu0 %v2023
    %2570 = vmatpush.bf16.msra.mxu0 %v2015
    %2571 = vmatpush.bf16.msra.mxu0 %v2007
    %2572 = vmatpush.bf16.msra.mxu0 %v1999
    %2573 = vmatpush.bf16.msra.mxu0 %v1991
    %2574 = vmatpush.bf16.msra.mxu0 %v1983
    %2575 = vmatmul.bf16.gmra.mxu0 %v542
    %v2576 = vpop.f32.mrf.mxu0
    %v2577 = vadd.f32 %v2564, %v2576
    %v2578 = vpop.f32.mrf.mxu0
    %2579 = vdwg.mxu0
    %2580 = vmatpush.bf16.msra.mxu0 %v2103
    %2581 = vmatpush.bf16.msra.mxu0 %v2095
    %2582 = vmatpush.bf16.msra.mxu0 %v2087
    %2583 = vmatpush.bf16.msra.mxu0 %v2079
    %2584 = vmatpush.bf16.msra.mxu0 %v2071
    %2585 = vmatpush.bf16.msra.mxu0 %v2063
    %2586 = vmatpush.bf16.msra.mxu0 %v2055
    %2587 = vmatpush.bf16.msra.mxu0 %v2047
    %2588 = vmatmul.bf16.gmra.mxu0 %v543
    %v2589 = vpop.f32.mrf.mxu0
    %v2590 = vadd.f32 %v2577, %v2589
    %v2591 = vpop.f32.mrf.mxu0
    %2592 = vdwg.mxu0
    %2593 = vmatpush.bf16.msra.mxu0 0
    %2594 = vmatpush.bf16.msra.mxu0 0
    %2595 = vmatpush.bf16.msra.mxu0 0
    %2596 = vmatpush.bf16.msra.mxu0 0
    %2597 = vmatpush.bf16.msra.mxu0 0
    %2598 = vmatpush.bf16.msra.mxu0 0
    %2599 = vmatpush.bf16.msra.mxu0 0
    %2600 = vmatpush.bf16.msra.mxu0 %v2111
    %2601 = vmatmul.bf16.gmra.mxu0 %v2513
    %v2602 = vpop.f32.mrf.mxu0
    %v2603 = vadd.f32 %v2590, %v2602
    %v2604 = vpop.f32.mrf.mxu0
    %2605 = vdwg.mxu0
    %2606 = vmatpush.bf16.msra.mxu0 %v1784
    %2607 = vmatpush.bf16.msra.mxu0 %v1776
    %2608 = vmatpush.bf16.msra.mxu0 %v1768
    %2609 = vmatpush.bf16.msra.mxu0 %v1760
    %2610 = vmatpush.bf16.msra.mxu0 %v1752
    %2611 = vmatpush.bf16.msra.mxu0 %v1744
    %2612 = vmatpush.bf16.msra.mxu0 %v1736
    %2613 = vmatpush.bf16.msra.mxu0 %v1728
    %2614 = vmatmul.bf16.gmra.mxu0 %v538
    %v2615 = vpop.f32.mrf.mxu0
    %v2616 = vadd.f32 %v520, %v2615
    %v2617 = vpop.f32.mrf.mxu0
    %2618 = vdwg.mxu0
    %2619 = vmatpush.bf16.msra.mxu0 %v1848
    %2620 = vmatpush.bf16.msra.mxu0 %v1840
    %2621 = vmatpush.bf16.msra.mxu0 %v1832
    %2622 = vmatpush.bf16.msra.mxu0 %v1824
    %2623 = vmatpush.bf16.msra.mxu0 %v1816
    %2624 = vmatpush.bf16.msra.mxu0 %v1808
    %2625 = vmatpush.bf16.msra.mxu0 %v1800
    %2626 = vmatpush.bf16.msra.mxu0 %v1792
    %2627 = vmatmul.bf16.gmra.mxu0 %v539
    %v2628 = vpop.f32.mrf.mxu0
    %v2629 = vadd.f32 %v2616, %v2628
    %v2630 = vpop.f32.mrf.mxu0
    %2631 = vdwg.mxu0
    %2632 = vmatpush.bf16.msra.mxu0 %v1912
    %2633 = vmatpush.bf16.msra.mxu0 %v1904
    %2634 = vmatpush.bf16.msra.mxu0 %v1896
    %2635 = vmatpush.bf16.msra.mxu0 %v1888
    %2636 = vmatpush.bf16.msra.mxu0 %v1880
    %2637 = vmatpush.bf16.msra.mxu0 %v1872
    %2638 = vmatpush.bf16.msra.mxu0 %v1864
    %2639 = vmatpush.bf16.msra.mxu0 %v1856
    %2640 = vmatmul.bf16.gmra.mxu0 %v540
    %v2641 = vpop.f32.mrf.mxu0
    %v2642 = vadd.f32 %v2629, %v2641
    %v2643 = vpop.f32.mrf.mxu0
    %2644 = vdwg.mxu0
    %2645 = vmatpush.bf16.msra.mxu0 %v1976
    %2646 = vmatpush.bf16.msra.mxu0 %v1968
    %2647 = vmatpush.bf16.msra.mxu0 %v1960
    %2648 = vmatpush.bf16.msra.mxu0 %v1952
    %2649 = vmatpush.bf16.msra.mxu0 %v1944
    %2650 = vmatpush.bf16.msra.mxu0 %v1936
    %2651 = vmatpush.bf16.msra.mxu0 %v1928
    %2652 = vmatpush.bf16.msra.mxu0 %v1920
    %2653 = vmatmul.bf16.gmra.mxu0 %v541
    %v2654 = vpop.f32.mrf.mxu0
    %v2655 = vadd.f32 %v2642, %v2654
    %v2656 = vpop.f32.mrf.mxu0
    %2657 = vdwg.mxu0
    %2658 = vmatpush.bf16.msra.mxu0 %v2040
    %2659 = vmatpush.bf16.msra.mxu0 %v2032
    %2660 = vmatpush.bf16.msra.mxu0 %v2024
    %2661 = vmatpush.bf16.msra.mxu0 %v2016
    %2662 = vmatpush.bf16.msra.mxu0 %v2008
    %2663 = vmatpush.bf16.msra.mxu0 %v2000
    %2664 = vmatpush.bf16.msra.mxu0 %v1992
    %2665 = vmatpush.bf16.msra.mxu0 %v1984
    %2666 = vmatmul.bf16.gmra.mxu0 %v542
    %v2667 = vpop.f32.mrf.mxu0
    %v2668 = vadd.f32 %v2655, %v2667
    %v2669 = vpop.f32.mrf.mxu0
    %2670 = vdwg.mxu0
    %2671 = vmatpush.bf16.msra.mxu0 %v2104
    %2672 = vmatpush.bf16.msra.mxu0 %v2096
    %2673 = vmatpush.bf16.msra.mxu0 %v2088
    %2674 = vmatpush.bf16.msra.mxu0 %v2080
    %2675 = vmatpush.bf16.msra.mxu0 %v2072
    %2676 = vmatpush.bf16.msra.mxu0 %v2064
    %2677 = vmatpush.bf16.msra.mxu0 %v2056
    %2678 = vmatpush.bf16.msra.mxu0 %v2048
    %2679 = vmatmul.bf16.gmra.mxu0 %v543
    %v2680 = vpop.f32.mrf.mxu0
    %v2681 = vadd.f32 %v2668, %v2680
    %v2682 = vpop.f32.mrf.mxu0
    %2683 = vdwg.mxu0
    %2684 = vmatpush.bf16.msra.mxu0 0
    %2685 = vmatpush.bf16.msra.mxu0 0
    %2686 = vmatpush.bf16.msra.mxu0 0
    %2687 = vmatpush.bf16.msra.mxu0 0
    %2688 = vmatpush.bf16.msra.mxu0 0
    %2689 = vmatpush.bf16.msra.mxu0 0
    %2690 = vmatpush.bf16.msra.mxu0 0
    %2691 = vmatpush.bf16.msra.mxu0 %v2112
    %2692 = vmatmul.bf16.gmra.mxu0 %v2513
    %v2693 = vpop.f32.mrf.mxu0
    %v2694 = vadd.f32 %v2681, %v2693
    %v2695 = vpop.f32.mrf.mxu0
    %2696 = vdwg.mxu0
    %2697 = vmatpush.bf16.msra.mxu0 %v1785
    %2698 = vmatpush.bf16.msra.mxu0 %v1777
    %2699 = vmatpush.bf16.msra.mxu0 %v1769
    %2700 = vmatpush.bf16.msra.mxu0 %v1761
    %2701 = vmatpush.bf16.msra.mxu0 %v1753
    %2702 = vmatpush.bf16.msra.mxu0 %v1745
    %2703 = vmatpush.bf16.msra.mxu0 %v1737
    %2704 = vmatpush.bf16.msra.mxu0 %v1729
    %2705 = vmatmul.bf16.gmra.mxu0 %v538
    %v2706 = vpop.f32.mrf.mxu0
    %v2707 = vadd.f32 %v521, %v2706
    %v2708 = vpop.f32.mrf.mxu0
    %2709 = vdwg.mxu0
    %2710 = vmatpush.bf16.msra.mxu0 %v1849
    %2711 = vmatpush.bf16.msra.mxu0 %v1841
    %2712 = vmatpush.bf16.msra.mxu0 %v1833
    %2713 = vmatpush.bf16.msra.mxu0 %v1825
    %2714 = vmatpush.bf16.msra.mxu0 %v1817
    %2715 = vmatpush.bf16.msra.mxu0 %v1809
    %2716 = vmatpush.bf16.msra.mxu0 %v1801
    %2717 = vmatpush.bf16.msra.mxu0 %v1793
    %2718 = vmatmul.bf16.gmra.mxu0 %v539
    %v2719 = vpop.f32.mrf.mxu0
    %v2720 = vadd.f32 %v2707, %v2719
    %v2721 = vpop.f32.mrf.mxu0
    %2722 = vdwg.mxu0
    %2723 = vmatpush.bf16.msra.mxu0 %v1913
    %2724 = vmatpush.bf16.msra.mxu0 %v1905
    %2725 = vmatpush.bf16.msra.mxu0 %v1897
    %2726 = vmatpush.bf16.msra.mxu0 %v1889
    %2727 = vmatpush.bf16.msra.mxu0 %v1881
    %2728 = vmatpush.bf16.msra.mxu0 %v1873
    %2729 = vmatpush.bf16.msra.mxu0 %v1865
    %2730 = vmatpush.bf16.msra.mxu0 %v1857
    %2731 = vmatmul.bf16.gmra.mxu0 %v540
    %v2732 = vpop.f32.mrf.mxu0
    %v2733 = vadd.f32 %v2720, %v2732
    %v2734 = vpop.f32.mrf.mxu0
    %2735 = vdwg.mxu0
    %2736 = vmatpush.bf16.msra.mxu0 %v1977
    %2737 = vmatpush.bf16.msra.mxu0 %v1969
    %2738 = vmatpush.bf16.msra.mxu0 %v1961
    %2739 = vmatpush.bf16.msra.mxu0 %v1953
    %2740 = vmatpush.bf16.msra.mxu0 %v1945
    %2741 = vmatpush.bf16.msra.mxu0 %v1937
    %2742 = vmatpush.bf16.msra.mxu0 %v1929
    %2743 = vmatpush.bf16.msra.mxu0 %v1921
    %2744 = vmatmul.bf16.gmra.mxu0 %v541
    %v2745 = vpop.f32.mrf.mxu0
    %v2746 = vadd.f32 %v2733, %v2745
    %v2747 = vpop.f32.mrf.mxu0
    %2748 = vdwg.mxu0
    %2749 = vmatpush.bf16.msra.mxu0 %v2041
    %2750 = vmatpush.bf16.msra.mxu0 %v2033
    %2751 = vmatpush.bf16.msra.mxu0 %v2025
    %2752 = vmatpush.bf16.msra.mxu0 %v2017
    %2753 = vmatpush.bf16.msra.mxu0 %v2009
    %2754 = vmatpush.bf16.msra.mxu0 %v2001
    %2755 = vmatpush.bf16.msra.mxu0 %v1993
    %2756 = vmatpush.bf16.msra.mxu0 %v1985
    %2757 = vmatmul.bf16.gmra.mxu0 %v542
    %v2758 = vpop.f32.mrf.mxu0
    %v2759 = vadd.f32 %v2746, %v2758
    %v2760 = vpop.f32.mrf.mxu0
    %2761 = vdwg.mxu0
    %2762 = vmatpush.bf16.msra.mxu0 %v2105
    %2763 = vmatpush.bf16.msra.mxu0 %v2097
    %2764 = vmatpush.bf16.msra.mxu0 %v2089
    %2765 = vmatpush.bf16.msra.mxu0 %v2081
    %2766 = vmatpush.bf16.msra.mxu0 %v2073
    %2767 = vmatpush.bf16.msra.mxu0 %v2065
    %2768 = vmatpush.bf16.msra.mxu0 %v2057
    %2769 = vmatpush.bf16.msra.mxu0 %v2049
    %2770 = vmatmul.bf16.gmra.mxu0 %v543
    %v2771 = vpop.f32.mrf.mxu0
    %v2772 = vadd.f32 %v2759, %v2771
    %v2773 = vpop.f32.mrf.mxu0
    %2774 = vdwg.mxu0
    %2775 = vmatpush.bf16.msra.mxu0 0
    %2776 = vmatpush.bf16.msra.mxu0 0
    %2777 = vmatpush.bf16.msra.mxu0 0
    %2778 = vmatpush.bf16.msra.mxu0 0
    %2779 = vmatpush.bf16.msra.mxu0 0
    %2780 = vmatpush.bf16.msra.mxu0 0
    %2781 = vmatpush.bf16.msra.mxu0 0
    %2782 = vmatpush.bf16.msra.mxu0 %v2113
    %2783 = vmatmul.bf16.gmra.mxu0 %v2513
    %v2784 = vpop.f32.mrf.mxu0
    %v2785 = vadd.f32 %v2772, %v2784
    %v2786 = vpop.f32.mrf.mxu0
    %2787 = vdwg.mxu0
    %2788 = vmatpush.bf16.msra.mxu0 %v1786
    %2789 = vmatpush.bf16.msra.mxu0 %v1778
    %2790 = vmatpush.bf16.msra.mxu0 %v1770
    %2791 = vmatpush.bf16.msra.mxu0 %v1762
    %2792 = vmatpush.bf16.msra.mxu0 %v1754
    %2793 = vmatpush.bf16.msra.mxu0 %v1746
    %2794 = vmatpush.bf16.msra.mxu0 %v1738
    %2795 = vmatpush.bf16.msra.mxu0 %v1730
    %2796 = vmatmul.bf16.gmra.mxu0 %v538
    %v2797 = vpop.f32.mrf.mxu0
    %v2798 = vadd.f32 %v522, %v2797
    %v2799 = vpop.f32.mrf.mxu0
    %2800 = vdwg.mxu0
    %2801 = vmatpush.bf16.msra.mxu0 %v1850
    %2802 = vmatpush.bf16.msra.mxu0 %v1842
    %2803 = vmatpush.bf16.msra.mxu0 %v1834
    %2804 = vmatpush.bf16.msra.mxu0 %v1826
    %2805 = vmatpush.bf16.msra.mxu0 %v1818
    %2806 = vmatpush.bf16.msra.mxu0 %v1810
    %2807 = vmatpush.bf16.msra.mxu0 %v1802
    %2808 = vmatpush.bf16.msra.mxu0 %v1794
    %2809 = vmatmul.bf16.gmra.mxu0 %v539
    %v2810 = vpop.f32.mrf.mxu0
    %v2811 = vadd.f32 %v2798, %v2810
    %v2812 = vpop.f32.mrf.mxu0
    %2813 = vdwg.mxu0
    %2814 = vmatpush.bf16.msra.mxu0 %v1914
    %2815 = vmatpush.bf16.msra.mxu0 %v1906
    %2816 = vmatpush.bf16.msra.mxu0 %v1898
    %2817 = vmatpush.bf16.msra.mxu0 %v1890
    %2818 = vmatpush.bf16.msra.mxu0 %v1882
    %2819 = vmatpush.bf16.msra.mxu0 %v1874
    %2820 = vmatpush.bf16.msra.mxu0 %v1866
    %2821 = vmatpush.bf16.msra.mxu0 %v1858
    %2822 = vmatmul.bf16.gmra.mxu0 %v540
    %v2823 = vpop.f32.mrf.mxu0
    %v2824 = vadd.f32 %v2811, %v2823
    %v2825 = vpop.f32.mrf.mxu0
    %2826 = vdwg.mxu0
    %2827 = vmatpush.bf16.msra.mxu0 %v1978
    %2828 = vmatpush.bf16.msra.mxu0 %v1970
    %2829 = vmatpush.bf16.msra.mxu0 %v1962
    %2830 = vmatpush.bf16.msra.mxu0 %v1954
    %2831 = vmatpush.bf16.msra.mxu0 %v1946
    %2832 = vmatpush.bf16.msra.mxu0 %v1938
    %2833 = vmatpush.bf16.msra.mxu0 %v1930
    %2834 = vmatpush.bf16.msra.mxu0 %v1922
    %2835 = vmatmul.bf16.gmra.mxu0 %v541
    %v2836 = vpop.f32.mrf.mxu0
    %v2837 = vadd.f32 %v2824, %v2836
    %v2838 = vpop.f32.mrf.mxu0
    %2839 = vdwg.mxu0
    %2840 = vmatpush.bf16.msra.mxu0 %v2042
    %2841 = vmatpush.bf16.msra.mxu0 %v2034
    %2842 = vmatpush.bf16.msra.mxu0 %v2026
    %2843 = vmatpush.bf16.msra.mxu0 %v2018
    %2844 = vmatpush.bf16.msra.mxu0 %v2010
    %2845 = vmatpush.bf16.msra.mxu0 %v2002
    %2846 = vmatpush.bf16.msra.mxu0 %v1994
    %2847 = vmatpush.bf16.msra.mxu0 %v1986
    %2848 = vmatmul.bf16.gmra.mxu0 %v542
    %v2849 = vpop.f32.mrf.mxu0
    %v2850 = vadd.f32 %v2837, %v2849
    %v2851 = vpop.f32.mrf.mxu0
    %2852 = vdwg.mxu0
    %2853 = vmatpush.bf16.msra.mxu0 %v2106
    %2854 = vmatpush.bf16.msra.mxu0 %v2098
    %2855 = vmatpush.bf16.msra.mxu0 %v2090
    %2856 = vmatpush.bf16.msra.mxu0 %v2082
    %2857 = vmatpush.bf16.msra.mxu0 %v2074
    %2858 = vmatpush.bf16.msra.mxu0 %v2066
    %2859 = vmatpush.bf16.msra.mxu0 %v2058
    %2860 = vmatpush.bf16.msra.mxu0 %v2050
    %2861 = vmatmul.bf16.gmra.mxu0 %v543
    %v2862 = vpop.f32.mrf.mxu0
    %v2863 = vadd.f32 %v2850, %v2862
    %v2864 = vpop.f32.mrf.mxu0
    %2865 = vdwg.mxu0
    %2866 = vmatpush.bf16.msra.mxu0 0
    %2867 = vmatpush.bf16.msra.mxu0 0
    %2868 = vmatpush.bf16.msra.mxu0 0
    %2869 = vmatpush.bf16.msra.mxu0 0
    %2870 = vmatpush.bf16.msra.mxu0 0
    %2871 = vmatpush.bf16.msra.mxu0 0
    %2872 = vmatpush.bf16.msra.mxu0 0
    %2873 = vmatpush.bf16.msra.mxu0 %v2114
    %2874 = vmatmul.bf16.gmra.mxu0 %v2513
    %v2875 = vpop.f32.mrf.mxu0
    %v2876 = vadd.f32 %v2863, %v2875
    %v2877 = vpop.f32.mrf.mxu0
    %2878 = vdwg.mxu0
    %2879 = vmatpush.bf16.msra.mxu0 %v1787
    %2880 = vmatpush.bf16.msra.mxu0 %v1779
    %2881 = vmatpush.bf16.msra.mxu0 %v1771
    %2882 = vmatpush.bf16.msra.mxu0 %v1763
    %2883 = vmatpush.bf16.msra.mxu0 %v1755
    %2884 = vmatpush.bf16.msra.mxu0 %v1747
    %2885 = vmatpush.bf16.msra.mxu0 %v1739
    %2886 = vmatpush.bf16.msra.mxu0 %v1731
    %2887 = vmatmul.bf16.gmra.mxu0 %v538
    %v2888 = vpop.f32.mrf.mxu0
    %v2889 = vadd.f32 %v523, %v2888
    %v2890 = vpop.f32.mrf.mxu0
    %2891 = vdwg.mxu0
    %2892 = vmatpush.bf16.msra.mxu0 %v1851
    %2893 = vmatpush.bf16.msra.mxu0 %v1843
    %2894 = vmatpush.bf16.msra.mxu0 %v1835
    %2895 = vmatpush.bf16.msra.mxu0 %v1827
    %2896 = vmatpush.bf16.msra.mxu0 %v1819
    %2897 = vmatpush.bf16.msra.mxu0 %v1811
    %2898 = vmatpush.bf16.msra.mxu0 %v1803
    %2899 = vmatpush.bf16.msra.mxu0 %v1795
    %2900 = vmatmul.bf16.gmra.mxu0 %v539
    %v2901 = vpop.f32.mrf.mxu0
    %v2902 = vadd.f32 %v2889, %v2901
    %v2903 = vpop.f32.mrf.mxu0
    %2904 = vdwg.mxu0
    %2905 = vmatpush.bf16.msra.mxu0 %v1915
    %2906 = vmatpush.bf16.msra.mxu0 %v1907
    %2907 = vmatpush.bf16.msra.mxu0 %v1899
    %2908 = vmatpush.bf16.msra.mxu0 %v1891
    %2909 = vmatpush.bf16.msra.mxu0 %v1883
    %2910 = vmatpush.bf16.msra.mxu0 %v1875
    %2911 = vmatpush.bf16.msra.mxu0 %v1867
    %2912 = vmatpush.bf16.msra.mxu0 %v1859
    %2913 = vmatmul.bf16.gmra.mxu0 %v540
    %v2914 = vpop.f32.mrf.mxu0
    %v2915 = vadd.f32 %v2902, %v2914
    %v2916 = vpop.f32.mrf.mxu0
    %2917 = vdwg.mxu0
    %2918 = vmatpush.bf16.msra.mxu0 %v1979
    %2919 = vmatpush.bf16.msra.mxu0 %v1971
    %2920 = vmatpush.bf16.msra.mxu0 %v1963
    %2921 = vmatpush.bf16.msra.mxu0 %v1955
    %2922 = vmatpush.bf16.msra.mxu0 %v1947
    %2923 = vmatpush.bf16.msra.mxu0 %v1939
    %2924 = vmatpush.bf16.msra.mxu0 %v1931
    %2925 = vmatpush.bf16.msra.mxu0 %v1923
    %2926 = vmatmul.bf16.gmra.mxu0 %v541
    %v2927 = vpop.f32.mrf.mxu0
    %v2928 = vadd.f32 %v2915, %v2927
    %v2929 = vpop.f32.mrf.mxu0
    %2930 = vdwg.mxu0
    %2931 = vmatpush.bf16.msra.mxu0 %v2043
    %2932 = vmatpush.bf16.msra.mxu0 %v2035
    %2933 = vmatpush.bf16.msra.mxu0 %v2027
    %2934 = vmatpush.bf16.msra.mxu0 %v2019
    %2935 = vmatpush.bf16.msra.mxu0 %v2011
    %2936 = vmatpush.bf16.msra.mxu0 %v2003
    %2937 = vmatpush.bf16.msra.mxu0 %v1995
    %2938 = vmatpush.bf16.msra.mxu0 %v1987
    %2939 = vmatmul.bf16.gmra.mxu0 %v542
    %v2940 = vpop.f32.mrf.mxu0
    %v2941 = vadd.f32 %v2928, %v2940
    %v2942 = vpop.f32.mrf.mxu0
    %2943 = vdwg.mxu0
    %2944 = vmatpush.bf16.msra.mxu0 %v2107
    %2945 = vmatpush.bf16.msra.mxu0 %v2099
    %2946 = vmatpush.bf16.msra.mxu0 %v2091
    %2947 = vmatpush.bf16.msra.mxu0 %v2083
    %2948 = vmatpush.bf16.msra.mxu0 %v2075
    %2949 = vmatpush.bf16.msra.mxu0 %v2067
    %2950 = vmatpush.bf16.msra.mxu0 %v2059
    %2951 = vmatpush.bf16.msra.mxu0 %v2051
    %2952 = vmatmul.bf16.gmra.mxu0 %v543
    %v2953 = vpop.f32.mrf.mxu0
    %v2954 = vadd.f32 %v2941, %v2953
    %v2955 = vpop.f32.mrf.mxu0
    %2956 = vdwg.mxu0
    %2957 = vmatpush.bf16.msra.mxu0 0
    %2958 = vmatpush.bf16.msra.mxu0 0
    %2959 = vmatpush.bf16.msra.mxu0 0
    %2960 = vmatpush.bf16.msra.mxu0 0
    %2961 = vmatpush.bf16.msra.mxu0 0
    %2962 = vmatpush.bf16.msra.mxu0 0
    %2963 = vmatpush.bf16.msra.mxu0 0
    %2964 = vmatpush.bf16.msra.mxu0 %v2115
    %2965 = vmatmul.bf16.gmra.mxu0 %v2513
    %v2966 = vpop.f32.mrf.mxu0
    %v2967 = vadd.f32 %v2954, %v2966
    %v2968 = vpop.f32.mrf.mxu0
    %2969 = vdwg.mxu0
    %2970 = vmatpush.bf16.msra.mxu0 %v1788
    %2971 = vmatpush.bf16.msra.mxu0 %v1780
    %2972 = vmatpush.bf16.msra.mxu0 %v1772
    %2973 = vmatpush.bf16.msra.mxu0 %v1764
    %2974 = vmatpush.bf16.msra.mxu0 %v1756
    %2975 = vmatpush.bf16.msra.mxu0 %v1748
    %2976 = vmatpush.bf16.msra.mxu0 %v1740
    %2977 = vmatpush.bf16.msra.mxu0 %v1732
    %2978 = vmatmul.bf16.gmra.mxu0 %v538
    %v2979 = vpop.f32.mrf.mxu0
    %v2980 = vadd.f32 %v524, %v2979
    %v2981 = vpop.f32.mrf.mxu0
    %2982 = vdwg.mxu0
    %2983 = vmatpush.bf16.msra.mxu0 %v1852
    %2984 = vmatpush.bf16.msra.mxu0 %v1844
    %2985 = vmatpush.bf16.msra.mxu0 %v1836
    %2986 = vmatpush.bf16.msra.mxu0 %v1828
    %2987 = vmatpush.bf16.msra.mxu0 %v1820
    %2988 = vmatpush.bf16.msra.mxu0 %v1812
    %2989 = vmatpush.bf16.msra.mxu0 %v1804
    %2990 = vmatpush.bf16.msra.mxu0 %v1796
    %2991 = vmatmul.bf16.gmra.mxu0 %v539
    %v2992 = vpop.f32.mrf.mxu0
    %v2993 = vadd.f32 %v2980, %v2992
    %v2994 = vpop.f32.mrf.mxu0
    %2995 = vdwg.mxu0
    %2996 = vmatpush.bf16.msra.mxu0 %v1916
    %2997 = vmatpush.bf16.msra.mxu0 %v1908
    %2998 = vmatpush.bf16.msra.mxu0 %v1900
    %2999 = vmatpush.bf16.msra.mxu0 %v1892
    %3000 = vmatpush.bf16.msra.mxu0 %v1884
    %3001 = vmatpush.bf16.msra.mxu0 %v1876
    %3002 = vmatpush.bf16.msra.mxu0 %v1868
    %3003 = vmatpush.bf16.msra.mxu0 %v1860
    %3004 = vmatmul.bf16.gmra.mxu0 %v540
    %v3005 = vpop.f32.mrf.mxu0
    %v3006 = vadd.f32 %v2993, %v3005
    %v3007 = vpop.f32.mrf.mxu0
    %3008 = vdwg.mxu0
    %3009 = vmatpush.bf16.msra.mxu0 %v1980
    %3010 = vmatpush.bf16.msra.mxu0 %v1972
    %3011 = vmatpush.bf16.msra.mxu0 %v1964
    %3012 = vmatpush.bf16.msra.mxu0 %v1956
    %3013 = vmatpush.bf16.msra.mxu0 %v1948
    %3014 = vmatpush.bf16.msra.mxu0 %v1940
    %3015 = vmatpush.bf16.msra.mxu0 %v1932
    %3016 = vmatpush.bf16.msra.mxu0 %v1924
    %3017 = vmatmul.bf16.gmra.mxu0 %v541
    %v3018 = vpop.f32.mrf.mxu0
    %v3019 = vadd.f32 %v3006, %v3018
    %v3020 = vpop.f32.mrf.mxu0
    %3021 = vdwg.mxu0
    %3022 = vmatpush.bf16.msra.mxu0 %v2044
    %3023 = vmatpush.bf16.msra.mxu0 %v2036
    %3024 = vmatpush.bf16.msra.mxu0 %v2028
    %3025 = vmatpush.bf16.msra.mxu0 %v2020
    %3026 = vmatpush.bf16.msra.mxu0 %v2012
    %3027 = vmatpush.bf16.msra.mxu0 %v2004
    %3028 = vmatpush.bf16.msra.mxu0 %v1996
    %3029 = vmatpush.bf16.msra.mxu0 %v1988
    %3030 = vmatmul.bf16.gmra.mxu0 %v542
    %v3031 = vpop.f32.mrf.mxu0
    %v3032 = vadd.f32 %v3019, %v3031
    %v3033 = vpop.f32.mrf.mxu0
    %3034 = vdwg.mxu0
    %3035 = vmatpush.bf16.msra.mxu0 %v2108
    %3036 = vmatpush.bf16.msra.mxu0 %v2100
    %3037 = vmatpush.bf16.msra.mxu0 %v2092
    %3038 = vmatpush.bf16.msra.mxu0 %v2084
    %3039 = vmatpush.bf16.msra.mxu0 %v2076
    %3040 = vmatpush.bf16.msra.mxu0 %v2068
    %3041 = vmatpush.bf16.msra.mxu0 %v2060
    %3042 = vmatpush.bf16.msra.mxu0 %v2052
    %3043 = vmatmul.bf16.gmra.mxu0 %v543
    %v3044 = vpop.f32.mrf.mxu0
    %v3045 = vadd.f32 %v3032, %v3044
    %v3046 = vpop.f32.mrf.mxu0
    %3047 = vdwg.mxu0
    %3048 = vmatpush.bf16.msra.mxu0 0
    %3049 = vmatpush.bf16.msra.mxu0 0
    %3050 = vmatpush.bf16.msra.mxu0 0
    %3051 = vmatpush.bf16.msra.mxu0 0
    %3052 = vmatpush.bf16.msra.mxu0 0
    %3053 = vmatpush.bf16.msra.mxu0 0
    %3054 = vmatpush.bf16.msra.mxu0 0
    %3055 = vmatpush.bf16.msra.mxu0 %v2116
    %3056 = vmatmul.bf16.gmra.mxu0 %v2513
    %v3057 = vpop.f32.mrf.mxu0
    %v3058 = vadd.f32 %v3045, %v3057
    %v3059 = vpop.f32.mrf.mxu0
    %3060 = vdwg.mxu0
    %3061 = vmatpush.bf16.msra.mxu0 %v1789
    %3062 = vmatpush.bf16.msra.mxu0 %v1781
    %3063 = vmatpush.bf16.msra.mxu0 %v1773
    %3064 = vmatpush.bf16.msra.mxu0 %v1765
    %3065 = vmatpush.bf16.msra.mxu0 %v1757
    %3066 = vmatpush.bf16.msra.mxu0 %v1749
    %3067 = vmatpush.bf16.msra.mxu0 %v1741
    %3068 = vmatpush.bf16.msra.mxu0 %v1733
    %3069 = vmatmul.bf16.gmra.mxu0 %v538
    %v3070 = vpop.f32.mrf.mxu0
    %v3071 = vadd.f32 %v525, %v3070
    %v3072 = vpop.f32.mrf.mxu0
    %3073 = vdwg.mxu0
    %3074 = vmatpush.bf16.msra.mxu0 %v1853
    %3075 = vmatpush.bf16.msra.mxu0 %v1845
    %3076 = vmatpush.bf16.msra.mxu0 %v1837
    %3077 = vmatpush.bf16.msra.mxu0 %v1829
    %3078 = vmatpush.bf16.msra.mxu0 %v1821
    %3079 = vmatpush.bf16.msra.mxu0 %v1813
    %3080 = vmatpush.bf16.msra.mxu0 %v1805
    %3081 = vmatpush.bf16.msra.mxu0 %v1797
    %3082 = vmatmul.bf16.gmra.mxu0 %v539
    %v3083 = vpop.f32.mrf.mxu0
    %v3084 = vadd.f32 %v3071, %v3083
    %v3085 = vpop.f32.mrf.mxu0
    %3086 = vdwg.mxu0
    %3087 = vmatpush.bf16.msra.mxu0 %v1917
    %3088 = vmatpush.bf16.msra.mxu0 %v1909
    %3089 = vmatpush.bf16.msra.mxu0 %v1901
    %3090 = vmatpush.bf16.msra.mxu0 %v1893
    %3091 = vmatpush.bf16.msra.mxu0 %v1885
    %3092 = vmatpush.bf16.msra.mxu0 %v1877
    %3093 = vmatpush.bf16.msra.mxu0 %v1869
    %3094 = vmatpush.bf16.msra.mxu0 %v1861
    %3095 = vmatmul.bf16.gmra.mxu0 %v540
    %v3096 = vpop.f32.mrf.mxu0
    %v3097 = vadd.f32 %v3084, %v3096
    %v3098 = vpop.f32.mrf.mxu0
    %3099 = vdwg.mxu0
    %3100 = vmatpush.bf16.msra.mxu0 %v1981
    %3101 = vmatpush.bf16.msra.mxu0 %v1973
    %3102 = vmatpush.bf16.msra.mxu0 %v1965
    %3103 = vmatpush.bf16.msra.mxu0 %v1957
    %3104 = vmatpush.bf16.msra.mxu0 %v1949
    %3105 = vmatpush.bf16.msra.mxu0 %v1941
    %3106 = vmatpush.bf16.msra.mxu0 %v1933
    %3107 = vmatpush.bf16.msra.mxu0 %v1925
    %3108 = vmatmul.bf16.gmra.mxu0 %v541
    %v3109 = vpop.f32.mrf.mxu0
    %v3110 = vadd.f32 %v3097, %v3109
    %v3111 = vpop.f32.mrf.mxu0
    %3112 = vdwg.mxu0
    %3113 = vmatpush.bf16.msra.mxu0 %v2045
    %3114 = vmatpush.bf16.msra.mxu0 %v2037
    %3115 = vmatpush.bf16.msra.mxu0 %v2029
    %3116 = vmatpush.bf16.msra.mxu0 %v2021
    %3117 = vmatpush.bf16.msra.mxu0 %v2013
    %3118 = vmatpush.bf16.msra.mxu0 %v2005
    %3119 = vmatpush.bf16.msra.mxu0 %v1997
    %3120 = vmatpush.bf16.msra.mxu0 %v1989
    %3121 = vmatmul.bf16.gmra.mxu0 %v542
    %v3122 = vpop.f32.mrf.mxu0
    %v3123 = vadd.f32 %v3110, %v3122
    %v3124 = vpop.f32.mrf.mxu0
    %3125 = vdwg.mxu0
    %3126 = vmatpush.bf16.msra.mxu0 %v2109
    %3127 = vmatpush.bf16.msra.mxu0 %v2101
    %3128 = vmatpush.bf16.msra.mxu0 %v2093
    %3129 = vmatpush.bf16.msra.mxu0 %v2085
    %3130 = vmatpush.bf16.msra.mxu0 %v2077
    %3131 = vmatpush.bf16.msra.mxu0 %v2069
    %3132 = vmatpush.bf16.msra.mxu0 %v2061
    %3133 = vmatpush.bf16.msra.mxu0 %v2053
    %3134 = vmatmul.bf16.gmra.mxu0 %v543
    %v3135 = vpop.f32.mrf.mxu0
    %v3136 = vadd.f32 %v3123, %v3135
    %v3137 = vpop.f32.mrf.mxu0
    %3138 = vdwg.mxu0
    %3139 = vmatpush.bf16.msra.mxu0 0
    %3140 = vmatpush.bf16.msra.mxu0 0
    %3141 = vmatpush.bf16.msra.mxu0 0
    %3142 = vmatpush.bf16.msra.mxu0 0
    %3143 = vmatpush.bf16.msra.mxu0 0
    %3144 = vmatpush.bf16.msra.mxu0 0
    %3145 = vmatpush.bf16.msra.mxu0 0
    %3146 = vmatpush.bf16.msra.mxu0 %v2117
    %3147 = vmatmul.bf16.gmra.mxu0 %v2513
    %v3148 = vpop.f32.mrf.mxu0
    %v3149 = vadd.f32 %v3136, %v3148
    %v3150 = vpop.f32.mrf.mxu0
    %3151 = vdwg.mxu0
    %3152 = vmatpush.bf16.msra.mxu0 %v1790
    %3153 = vmatpush.bf16.msra.mxu0 %v1782
    %3154 = vmatpush.bf16.msra.mxu0 %v1774
    %3155 = vmatpush.bf16.msra.mxu0 %v1766
    %3156 = vmatpush.bf16.msra.mxu0 %v1758
    %3157 = vmatpush.bf16.msra.mxu0 %v1750
    %3158 = vmatpush.bf16.msra.mxu0 %v1742
    %3159 = vmatpush.bf16.msra.mxu0 %v1734
    %3160 = vmatmul.bf16.gmra.mxu0 %v538
    %v3161 = vpop.f32.mrf.mxu0
    %v3162 = vadd.f32 %v526, %v3161
    %v3163 = vpop.f32.mrf.mxu0
    %3164 = vdwg.mxu0
    %3165 = vmatpush.bf16.msra.mxu0 %v1854
    %3166 = vmatpush.bf16.msra.mxu0 %v1846
    %3167 = vmatpush.bf16.msra.mxu0 %v1838
    %3168 = vmatpush.bf16.msra.mxu0 %v1830
    %3169 = vmatpush.bf16.msra.mxu0 %v1822
    %3170 = vmatpush.bf16.msra.mxu0 %v1814
    %3171 = vmatpush.bf16.msra.mxu0 %v1806
    %3172 = vmatpush.bf16.msra.mxu0 %v1798
    %3173 = vmatmul.bf16.gmra.mxu0 %v539
    %v3174 = vpop.f32.mrf.mxu0
    %v3175 = vadd.f32 %v3162, %v3174
    %v3176 = vpop.f32.mrf.mxu0
    %3177 = vdwg.mxu0
    %3178 = vmatpush.bf16.msra.mxu0 %v1918
    %3179 = vmatpush.bf16.msra.mxu0 %v1910
    %3180 = vmatpush.bf16.msra.mxu0 %v1902
    %3181 = vmatpush.bf16.msra.mxu0 %v1894
    %3182 = vmatpush.bf16.msra.mxu0 %v1886
    %3183 = vmatpush.bf16.msra.mxu0 %v1878
    %3184 = vmatpush.bf16.msra.mxu0 %v1870
    %3185 = vmatpush.bf16.msra.mxu0 %v1862
    %3186 = vmatmul.bf16.gmra.mxu0 %v540
    %v3187 = vpop.f32.mrf.mxu0
    %v3188 = vadd.f32 %v3175, %v3187
    %v3189 = vpop.f32.mrf.mxu0
    %3190 = vdwg.mxu0
    %3191 = vmatpush.bf16.msra.mxu0 %v1982
    %3192 = vmatpush.bf16.msra.mxu0 %v1974
    %3193 = vmatpush.bf16.msra.mxu0 %v1966
    %3194 = vmatpush.bf16.msra.mxu0 %v1958
    %3195 = vmatpush.bf16.msra.mxu0 %v1950
    %3196 = vmatpush.bf16.msra.mxu0 %v1942
    %3197 = vmatpush.bf16.msra.mxu0 %v1934
    %3198 = vmatpush.bf16.msra.mxu0 %v1926
    %3199 = vmatmul.bf16.gmra.mxu0 %v541
    %v3200 = vpop.f32.mrf.mxu0
    %v3201 = vadd.f32 %v3188, %v3200
    %v3202 = vpop.f32.mrf.mxu0
    %3203 = vdwg.mxu0
    %3204 = vmatpush.bf16.msra.mxu0 %v2046
    %3205 = vmatpush.bf16.msra.mxu0 %v2038
    %3206 = vmatpush.bf16.msra.mxu0 %v2030
    %3207 = vmatpush.bf16.msra.mxu0 %v2022
    %3208 = vmatpush.bf16.msra.mxu0 %v2014
    %3209 = vmatpush.bf16.msra.mxu0 %v2006
    %3210 = vmatpush.bf16.msra.mxu0 %v1998
    %3211 = vmatpush.bf16.msra.mxu0 %v1990
    %3212 = vmatmul.bf16.gmra.mxu0 %v542
    %v3213 = vpop.f32.mrf.mxu0
    %v3214 = vadd.f32 %v3201, %v3213
    %v3215 = vpop.f32.mrf.mxu0
    %3216 = vdwg.mxu0
    %3217 = vmatpush.bf16.msra.mxu0 %v2110
    %3218 = vmatpush.bf16.msra.mxu0 %v2102
    %3219 = vmatpush.bf16.msra.mxu0 %v2094
    %3220 = vmatpush.bf16.msra.mxu0 %v2086
    %3221 = vmatpush.bf16.msra.mxu0 %v2078
    %3222 = vmatpush.bf16.msra.mxu0 %v2070
    %3223 = vmatpush.bf16.msra.mxu0 %v2062
    %3224 = vmatpush.bf16.msra.mxu0 %v2054
    %3225 = vmatmul.bf16.gmra.mxu0 %v543
    %v3226 = vpop.f32.mrf.mxu0
    %v3227 = vadd.f32 %v3214, %v3226
    %v3228 = vpop.f32.mrf.mxu0
    %3229 = vdwg.mxu0
    %3230 = vmatpush.bf16.msra.mxu0 0
    %3231 = vmatpush.bf16.msra.mxu0 0
    %3232 = vmatpush.bf16.msra.mxu0 0
    %3233 = vmatpush.bf16.msra.mxu0 0
    %3234 = vmatpush.bf16.msra.mxu0 0
    %3235 = vmatpush.bf16.msra.mxu0 0
    %3236 = vmatpush.bf16.msra.mxu0 0
    %3237 = vmatpush.bf16.msra.mxu0 %v2118
    %3238 = vmatmul.bf16.gmra.mxu0 %v2513
    %v3239 = vpop.f32.mrf.mxu0
    %v3240 = vadd.f32 %v3227, %v3239
    %v3241 = vpop.f32.mrf.mxu0
    %3242 = vdwg.mxu0
    %v3243 = vmul.f32 %v2603, 0.2
    %v3244 = vmul.f32 %v2694, 0.2
    %v3245 = vmul.f32 %v2785, 0.2
    %v3246 = vmul.f32 %v2876, 0.2
    %v3247 = vmul.f32 %v2967, 0.2
    %v3248 = vmul.f32 %v3058, 0.2
    %v3249 = vmul.f32 %v3149, 0.2
    %v3250 = vmul.f32 %v3240, 0.2
    %v3251 = vmax.f32 %v2603, %v3243
    %v3252 = vmax.f32 %v2694, %v3244
    %v3253 = vmax.f32 %v2785, %v3245
    %v3254 = vmax.f32 %v2876, %v3246
    %v3255 = vmax.f32 %v2967, %v3247
    %v3256 = vmax.f32 %v3058, %v3248
    %v3257 = vmax.f32 %v3149, %v3249
    %v3258 = vmax.f32 %v3240, %v3250
    %v3259 = vpack.c.bf16 %v3251, %v3251
    %v3260 = vpack.c.bf16 %v3252, %v3252
    %v3261 = vpack.c.bf16 %v3253, %v3253
    %v3262 = vpack.c.bf16 %v3254, %v3254
    %v3263 = vpack.c.bf16 %v3255, %v3255
    %v3264 = vpack.c.bf16 %v3256, %v3256
    %v3265 = vpack.c.bf16 %v3257, %v3257
    %v3266 = vpack.c.bf16 %v3258, %v3258
    %v3267 = vld [vmem:[#allocation5] sm:$0xff]
    %v3268 = vld [vmem:[#allocation5 + $0x8] sm:$0xff]
    %v3269 = vld [vmem:[#allocation5 + $0x10] sm:$0xff]
    %v3270 = vld [vmem:[#allocation5 + $0x18] sm:$0xff]
    %v3271 = vld [vmem:[#allocation5 + $0x20] sm:$0xff]
    %v3272 = vld [vmem:[#allocation5 + $0x28] sm:$0xff]
    %v3273 = vld [vmem:[#allocation5 + $0x30] sm:$0xff]
    %v3274 = vld [vmem:[#allocation5 + $0x38] sm:$0xff]
    %v3275 = vld [vmem:[#allocation5 + $0x40] sm:$0xff]
    %v3276 = vld [vmem:[#allocation5 + $0x48] sm:$0xff]
    %v3277 = vld [vmem:[#allocation5 + $0x50] sm:$0xff]
    %v3278 = vld [vmem:[#allocation5 + $0x58] sm:$0xff]
    %v3279 = vld [vmem:[#allocation5 + $0x60] sm:$0xff]
    %v3280 = vld [vmem:[#allocation5 + $0x68] sm:$0xff]
    %v3281 = vld [vmem:[#allocation5 + $0x70] sm:$0xff]
    %v3282 = vld [vmem:[#allocation5 + $0x78] sm:$0xff]
    %v3283 = vld [vmem:[#allocation5 + $0x80] sm:$0xff]
    %v3284 = vld [vmem:[#allocation5 + $0x88] sm:$0xff]
    %v3285 = vld [vmem:[#allocation5 + $0x90] sm:$0xff]
    %v3286 = vld [vmem:[#allocation5 + $0x98] sm:$0xff]
    %v3287 = vld [vmem:[#allocation5 + $0xa0] sm:$0xff]
    %v3288 = vld [vmem:[#allocation5 + $0xa8] sm:$0xff]
    %v3289 = vld [vmem:[#allocation5 + $0xb0] sm:$0xff]
    %v3290 = vld [vmem:[#allocation5 + $0xb8] sm:$0xff]
    %v3291 = vld [vmem:[#allocation5 + $0xc0] sm:$0xff]
    %v3292 = vld [vmem:[#allocation5 + $0xc8] sm:$0xff]
    %v3293 = vld [vmem:[#allocation5 + $0xd0] sm:$0xff]
    %v3294 = vld [vmem:[#allocation5 + $0xd8] sm:$0xff]
    %v3295 = vld [vmem:[#allocation5 + $0xe0] sm:$0xff]
    %v3296 = vld [vmem:[#allocation5 + $0xe8] sm:$0xff]
    %v3297 = vld [vmem:[#allocation5 + $0xf0] sm:$0xff]
    %v3298 = vld [vmem:[#allocation5 + $0xf8] sm:$0xff]
    %v3299 = vld [vmem:[#allocation5 + $0x100] sm:$0xff]
    %v3300 = vld [vmem:[#allocation5 + $0x108] sm:$0xff]
    %v3301 = vld [vmem:[#allocation5 + $0x110] sm:$0xff]
    %v3302 = vld [vmem:[#allocation5 + $0x118] sm:$0xff]
    %v3303 = vld [vmem:[#allocation5 + $0x120] sm:$0xff]
    %v3304 = vld [vmem:[#allocation5 + $0x128] sm:$0xff]
    %v3305 = vld [vmem:[#allocation5 + $0x130] sm:$0xff]
    %v3306 = vld [vmem:[#allocation5 + $0x138] sm:$0xff]
    %v3307 = vld [vmem:[#allocation5 + $0x140] sm:$0xff]
    %v3308 = vld [vmem:[#allocation5 + $0x148] sm:$0xff]
    %v3309 = vld [vmem:[#allocation5 + $0x150] sm:$0xff]
    %v3310 = vld [vmem:[#allocation5 + $0x158] sm:$0xff]
    %v3311 = vld [vmem:[#allocation5 + $0x160] sm:$0xff]
    %v3312 = vld [vmem:[#allocation5 + $0x168] sm:$0xff]
    %v3313 = vld [vmem:[#allocation5 + $0x170] sm:$0xff]
    %v3314 = vld [vmem:[#allocation5 + $0x178] sm:$0xff]
    %v3315 = vld [vmem:[#allocation5 + $0x180] sm:$0xff]
    %v3316 = vld [vmem:[#allocation5 + $0x188] sm:$0xff]
    %v3317 = vld [vmem:[#allocation5 + $0x190] sm:$0xff]
    %v3318 = vld [vmem:[#allocation5 + $0x198] sm:$0xff]
    %v3319 = vld [vmem:[#allocation5 + $0x1a0] sm:$0xff]
    %v3320 = vld [vmem:[#allocation5 + $0x1a8] sm:$0xff]
    %v3321 = vld [vmem:[#allocation5 + $0x1b0] sm:$0xff]
    %v3322 = vld [vmem:[#allocation5 + $0x1b8] sm:$0xff]
    %v3323 = vld [vmem:[#allocation5 + $0x1c0] sm:$0xff]
    %v3324 = vld [vmem:[#allocation5 + $0x1c8] sm:$0xff]
    %v3325 = vld [vmem:[#allocation5 + $0x1d0] sm:$0xff]
    %v3326 = vld [vmem:[#allocation5 + $0x1d8] sm:$0xff]
    %v3327 = vld [vmem:[#allocation5 + $0x1e0] sm:$0xff]
    %v3328 = vld [vmem:[#allocation5 + $0x1e8] sm:$0xff]
    %v3329 = vld [vmem:[#allocation5 + $0x1f0] sm:$0xff]
    %v3330 = vld [vmem:[#allocation5 + $0x1f8] sm:$0xff]
    %v3331 = vld [vmem:[#allocation5 + $0x200] sm:$0xff]
    %v3332 = vld [vmem:[#allocation5 + $0x208] sm:$0xff]
    %v3333 = vld [vmem:[#allocation5 + $0x210] sm:$0xff]
    %v3334 = vld [vmem:[#allocation5 + $0x218] sm:$0xff]
    %v3335 = vld [vmem:[#allocation5 + $0x220] sm:$0xff]
    %v3336 = vld [vmem:[#allocation5 + $0x228] sm:$0xff]
    %v3337 = vld [vmem:[#allocation5 + $0x230] sm:$0xff]
    %v3338 = vld [vmem:[#allocation5 + $0x238] sm:$0xff]
    %v3339 = vld [vmem:[#allocation5 + $0x240] sm:$0xff]
    %v3340 = vld [vmem:[#allocation5 + $0x248] sm:$0xff]
    %v3341 = vld [vmem:[#allocation5 + $0x250] sm:$0xff]
    %v3342 = vld [vmem:[#allocation5 + $0x258] sm:$0xff]
    %v3343 = vld [vmem:[#allocation5 + $0x260] sm:$0xff]
    %v3344 = vld [vmem:[#allocation5 + $0x268] sm:$0xff]
    %v3345 = vld [vmem:[#allocation5 + $0x270] sm:$0xff]
    %v3346 = vld [vmem:[#allocation5 + $0x278] sm:$0xff]
    %v3347 = vld [vmem:[#allocation5 + $0x280] sm:$0xff]
    %v3348 = vld [vmem:[#allocation5 + $0x288] sm:$0xff]
    %v3349 = vld [vmem:[#allocation5 + $0x290] sm:$0xff]
    %v3350 = vld [vmem:[#allocation5 + $0x298] sm:$0xff]
    %v3351 = vld [vmem:[#allocation5 + $0x2a0] sm:$0xff]
    %v3352 = vld [vmem:[#allocation5 + $0x2a8] sm:$0xff]
    %v3353 = vld [vmem:[#allocation5 + $0x2b0] sm:$0xff]
    %v3354 = vld [vmem:[#allocation5 + $0x2b8] sm:$0xff]
    %v3355 = vld [vmem:[#allocation5 + $0x2c0] sm:$0xff]
    %v3356 = vld [vmem:[#allocation5 + $0x2c8] sm:$0xff]
    %v3357 = vld [vmem:[#allocation5 + $0x2d0] sm:$0xff]
    %v3358 = vld [vmem:[#allocation5 + $0x2d8] sm:$0xff]
    %v3359 = vld [vmem:[#allocation5 + $0x2e0] sm:$0xff]
    %v3360 = vld [vmem:[#allocation5 + $0x2e8] sm:$0xff]
    %v3361 = vld [vmem:[#allocation5 + $0x2f0] sm:$0xff]
    %v3362 = vld [vmem:[#allocation5 + $0x2f8] sm:$0xff]
    %v3363 = vld [vmem:[#allocation5 + $0x300] sm:$0xff]
    %v3364 = vld [vmem:[#allocation5 + $0x308] sm:$0xff]
    %v3365 = vld [vmem:[#allocation5 + $0x310] sm:$0xff]
    %v3366 = vld [vmem:[#allocation5 + $0x318] sm:$0xff]
    %v3367 = vld [vmem:[#allocation5 + $0x320] sm:$0xff]
    %v3368 = vld [vmem:[#allocation5 + $0x328] sm:$0xff]
    %v3369 = vld [vmem:[#allocation5 + $0x330] sm:$0xff]
    %v3370 = vld [vmem:[#allocation5 + $0x338] sm:$0xff]
    %v3371 = vld [vmem:[#allocation5 + $0x340] sm:$0xff]
    %v3372 = vld [vmem:[#allocation5 + $0x348] sm:$0xff]
    %v3373 = vld [vmem:[#allocation5 + $0x350] sm:$0xff]
    %v3374 = vld [vmem:[#allocation5 + $0x358] sm:$0xff]
    %v3375 = vld [vmem:[#allocation5 + $0x360] sm:$0xff]
    %v3376 = vld [vmem:[#allocation5 + $0x368] sm:$0xff]
    %v3377 = vld [vmem:[#allocation5 + $0x370] sm:$0xff]
    %v3378 = vld [vmem:[#allocation5 + $0x378] sm:$0xff]
    %v3379 = vld [vmem:[#allocation5 + $0x380] sm:$0xff]
    %v3380 = vld [vmem:[#allocation5 + $0x388] sm:$0xff]
    %v3381 = vld [vmem:[#allocation5 + $0x390] sm:$0xff]
    %v3382 = vld [vmem:[#allocation5 + $0x398] sm:$0xff]
    %v3383 = vld [vmem:[#allocation5 + $0x3a0] sm:$0xff]
    %v3384 = vld [vmem:[#allocation5 + $0x3a8] sm:$0xff]
    %v3385 = vld [vmem:[#allocation5 + $0x3b0] sm:$0xff]
    %v3386 = vld [vmem:[#allocation5 + $0x3b8] sm:$0xff]
    %v3387 = vld [vmem:[#allocation5 + $0x3c0] sm:$0xff]
    %v3388 = vld [vmem:[#allocation5 + $0x3c8] sm:$0xff]
    %v3389 = vld [vmem:[#allocation5 + $0x3d0] sm:$0xff]
    %v3390 = vld [vmem:[#allocation5 + $0x3d8] sm:$0xff]
    %v3391 = vld [vmem:[#allocation5 + $0x3e0] sm:$0xff]
    %v3392 = vld [vmem:[#allocation5 + $0x3e8] sm:$0xff]
    %v3393 = vld [vmem:[#allocation5 + $0x3f0] sm:$0xff]
    %v3394 = vld [vmem:[#allocation5 + $0x3f8] sm:$0xff]
    %v3395 = vld [vmem:[#allocation5 + $0x400] sm:$0xff]
    %v3396 = vld [vmem:[#allocation5 + $0x408] sm:$0xff]
    %v3397 = vld [vmem:[#allocation5 + $0x410] sm:$0xff]
    %v3398 = vld [vmem:[#allocation5 + $0x418] sm:$0xff]
    %v3399 = vld [vmem:[#allocation5 + $0x420] sm:$0xff]
    %v3400 = vld [vmem:[#allocation5 + $0x428] sm:$0xff]
    %v3401 = vld [vmem:[#allocation5 + $0x430] sm:$0xff]
    %v3402 = vld [vmem:[#allocation5 + $0x438] sm:$0xff]
    %v3403 = vld [vmem:[#allocation5 + $0x440] sm:$0xff]
    %v3404 = vld [vmem:[#allocation5 + $0x448] sm:$0xff]
    %v3405 = vld [vmem:[#allocation5 + $0x450] sm:$0xff]
    %v3406 = vld [vmem:[#allocation5 + $0x458] sm:$0xff]
    %v3407 = vld [vmem:[#allocation5 + $0x460] sm:$0xff]
    %v3408 = vld [vmem:[#allocation5 + $0x468] sm:$0xff]
    %v3409 = vld [vmem:[#allocation5 + $0x470] sm:$0xff]
    %v3410 = vld [vmem:[#allocation5 + $0x478] sm:$0xff]
    %v3411 = vld [vmem:[#allocation5 + $0x480] sm:$0xff]
    %v3412 = vld [vmem:[#allocation5 + $0x488] sm:$0xff]
    %v3413 = vld [vmem:[#allocation5 + $0x490] sm:$0xff]
    %v3414 = vld [vmem:[#allocation5 + $0x498] sm:$0xff]
    %v3415 = vld [vmem:[#allocation5 + $0x4a0] sm:$0xff]
    %v3416 = vld [vmem:[#allocation5 + $0x4a8] sm:$0xff]
    %v3417 = vld [vmem:[#allocation5 + $0x4b0] sm:$0xff]
    %v3418 = vld [vmem:[#allocation5 + $0x4b8] sm:$0xff]
    %v3419 = vld [vmem:[#allocation5 + $0x4c0] sm:$0xff]
    %v3420 = vld [vmem:[#allocation5 + $0x4c8] sm:$0xff]
    %v3421 = vld [vmem:[#allocation5 + $0x4d0] sm:$0xff]
    %v3422 = vld [vmem:[#allocation5 + $0x4d8] sm:$0xff]
    %v3423 = vld [vmem:[#allocation5 + $0x4e0] sm:$0xff]
    %v3424 = vld [vmem:[#allocation5 + $0x4e8] sm:$0xff]
    %v3425 = vld [vmem:[#allocation5 + $0x4f0] sm:$0xff]
    %v3426 = vld [vmem:[#allocation5 + $0x4f8] sm:$0xff]
    %v3427 = vld [vmem:[#allocation5 + $0x500] sm:$0xff]
    %v3428 = vld [vmem:[#allocation5 + $0x508] sm:$0xff]
    %v3429 = vld [vmem:[#allocation5 + $0x510] sm:$0xff]
    %v3430 = vld [vmem:[#allocation5 + $0x518] sm:$0xff]
    %v3431 = vld [vmem:[#allocation5 + $0x520] sm:$0xff]
    %v3432 = vld [vmem:[#allocation5 + $0x528] sm:$0xff]
    %v3433 = vld [vmem:[#allocation5 + $0x530] sm:$0xff]
    %v3434 = vld [vmem:[#allocation5 + $0x538] sm:$0xff]
    %v3435 = vld [vmem:[#allocation5 + $0x540] sm:$0xff]
    %v3436 = vld [vmem:[#allocation5 + $0x548] sm:$0xff]
    %v3437 = vld [vmem:[#allocation5 + $0x550] sm:$0xff]
    %v3438 = vld [vmem:[#allocation5 + $0x558] sm:$0xff]
    %v3439 = vld [vmem:[#allocation5 + $0x560] sm:$0xff]
    %v3440 = vld [vmem:[#allocation5 + $0x568] sm:$0xff]
    %v3441 = vld [vmem:[#allocation5 + $0x570] sm:$0xff]
    %v3442 = vld [vmem:[#allocation5 + $0x578] sm:$0xff]
    %v3443 = vld [vmem:[#allocation5 + $0x580] sm:$0xff]
    %v3444 = vld [vmem:[#allocation5 + $0x588] sm:$0xff]
    %v3445 = vld [vmem:[#allocation5 + $0x590] sm:$0xff]
    %v3446 = vld [vmem:[#allocation5 + $0x598] sm:$0xff]
    %v3447 = vld [vmem:[#allocation5 + $0x5a0] sm:$0xff]
    %v3448 = vld [vmem:[#allocation5 + $0x5a8] sm:$0xff]
    %v3449 = vld [vmem:[#allocation5 + $0x5b0] sm:$0xff]
    %v3450 = vld [vmem:[#allocation5 + $0x5b8] sm:$0xff]
    %v3451 = vld [vmem:[#allocation5 + $0x5c0] sm:$0xff]
    %v3452 = vld [vmem:[#allocation5 + $0x5c8] sm:$0xff]
    %v3453 = vld [vmem:[#allocation5 + $0x5d0] sm:$0xff]
    %v3454 = vld [vmem:[#allocation5 + $0x5d8] sm:$0xff]
    %v3455 = vld [vmem:[#allocation5 + $0x5e0] sm:$0xff]
    %v3456 = vld [vmem:[#allocation5 + $0x5e8] sm:$0xff]
    %v3457 = vld [vmem:[#allocation5 + $0x5f0] sm:$0xff]
    %v3458 = vld [vmem:[#allocation5 + $0x5f8] sm:$0xff]
    %v3459 = vld [vmem:[#allocation5 + $0x600] sm:$0xff]
    %v3460 = vld [vmem:[#allocation5 + $0x608] sm:$0xff]
    %v3461 = vld [vmem:[#allocation5 + $0x610] sm:$0xff]
    %v3462 = vld [vmem:[#allocation5 + $0x618] sm:$0xff]
    %v3463 = vld [vmem:[#allocation5 + $0x620] sm:$0xff]
    %v3464 = vld [vmem:[#allocation5 + $0x628] sm:$0xff]
    %v3465 = vld [vmem:[#allocation5 + $0x630] sm:$0xff]
    %v3466 = vld [vmem:[#allocation5 + $0x638] sm:$0xff]
    %v3467 = vld [vmem:[#allocation5 + $0x640] sm:$0xff]
    %v3468 = vld [vmem:[#allocation5 + $0x648] sm:$0xff]
    %v3469 = vld [vmem:[#allocation5 + $0x650] sm:$0xff]
    %v3470 = vld [vmem:[#allocation5 + $0x658] sm:$0xff]
    %v3471 = vld [vmem:[#allocation5 + $0x660] sm:$0xff]
    %v3472 = vld [vmem:[#allocation5 + $0x668] sm:$0xff]
    %v3473 = vld [vmem:[#allocation5 + $0x670] sm:$0xff]
    %v3474 = vld [vmem:[#allocation5 + $0x678] sm:$0xff]
    %v3475 = vld [vmem:[#allocation5 + $0x680] sm:$0xff]
    %v3476 = vld [vmem:[#allocation5 + $0x688] sm:$0xff]
    %v3477 = vld [vmem:[#allocation5 + $0x690] sm:$0xff]
    %v3478 = vld [vmem:[#allocation5 + $0x698] sm:$0xff]
    %v3479 = vld [vmem:[#allocation5 + $0x6a0] sm:$0xff]
    %v3480 = vld [vmem:[#allocation5 + $0x6a8] sm:$0xff]
    %v3481 = vld [vmem:[#allocation5 + $0x6b0] sm:$0xff]
    %v3482 = vld [vmem:[#allocation5 + $0x6b8] sm:$0xff]
    %v3483 = vld [vmem:[#allocation5 + $0x6c0] sm:$0xff]
    %v3484 = vld [vmem:[#allocation5 + $0x6c8] sm:$0xff]
    %v3485 = vld [vmem:[#allocation5 + $0x6d0] sm:$0xff]
    %v3486 = vld [vmem:[#allocation5 + $0x6d8] sm:$0xff]
    %v3487 = vld [vmem:[#allocation5 + $0x6e0] sm:$0xff]
    %v3488 = vld [vmem:[#allocation5 + $0x6e8] sm:$0xff]
    %v3489 = vld [vmem:[#allocation5 + $0x6f0] sm:$0xff]
    %v3490 = vld [vmem:[#allocation5 + $0x6f8] sm:$0xff]
    %v3491 = vld [vmem:[#allocation5 + $0x700] sm:$0xff]
    %v3492 = vld [vmem:[#allocation5 + $0x708] sm:$0xff]
    %v3493 = vld [vmem:[#allocation5 + $0x710] sm:$0xff]
    %v3494 = vld [vmem:[#allocation5 + $0x718] sm:$0xff]
    %v3495 = vld [vmem:[#allocation5 + $0x720] sm:$0xff]
    %v3496 = vld [vmem:[#allocation5 + $0x728] sm:$0xff]
    %v3497 = vld [vmem:[#allocation5 + $0x730] sm:$0xff]
    %v3498 = vld [vmem:[#allocation5 + $0x738] sm:$0xff]
    %v3499 = vld [vmem:[#allocation5 + $0x740] sm:$0xff]
    %v3500 = vld [vmem:[#allocation5 + $0x748] sm:$0xff]
    %v3501 = vld [vmem:[#allocation5 + $0x750] sm:$0xff]
    %v3502 = vld [vmem:[#allocation5 + $0x758] sm:$0xff]
    %v3503 = vld [vmem:[#allocation5 + $0x760] sm:$0xff]
    %v3504 = vld [vmem:[#allocation5 + $0x768] sm:$0xff]
    %v3505 = vld [vmem:[#allocation5 + $0x770] sm:$0xff]
    %v3506 = vld [vmem:[#allocation5 + $0x778] sm:$0xff]
    %v3507 = vld [vmem:[#allocation5 + $0x780] sm:$0xff]
    %v3508 = vld [vmem:[#allocation5 + $0x788] sm:$0xff]
    %v3509 = vld [vmem:[#allocation5 + $0x790] sm:$0xff]
    %v3510 = vld [vmem:[#allocation5 + $0x798] sm:$0xff]
    %v3511 = vld [vmem:[#allocation5 + $0x7a0] sm:$0xff]
    %v3512 = vld [vmem:[#allocation5 + $0x7a8] sm:$0xff]
    %v3513 = vld [vmem:[#allocation5 + $0x7b0] sm:$0xff]
    %v3514 = vld [vmem:[#allocation5 + $0x7b8] sm:$0xff]
    %v3515 = vld [vmem:[#allocation5 + $0x7c0] sm:$0xff]
    %v3516 = vld [vmem:[#allocation5 + $0x7c8] sm:$0xff]
    %v3517 = vld [vmem:[#allocation5 + $0x7d0] sm:$0xff]
    %v3518 = vld [vmem:[#allocation5 + $0x7d8] sm:$0xff]
    %v3519 = vld [vmem:[#allocation5 + $0x7e0] sm:$0xff]
    %v3520 = vld [vmem:[#allocation5 + $0x7e8] sm:$0xff]
    %v3521 = vld [vmem:[#allocation5 + $0x7f0] sm:$0xff]
    %v3522 = vld [vmem:[#allocation5 + $0x7f8] sm:$0xff]
    %v3523 = vld [vmem:[#allocation7] sm:$0xf]
    %v3525 = vperm.slane %v3523, 0
    %v3526 = vperm.slane %v3523, 1
    %v3527 = vperm.slane %v3523, 2
    %v3528 = vperm.slane %v3523, 3
    %v3789 = vunpack.c.l.b16 %v3267
    %v3790 = vunpack.c.h.b16 %v3267
    %v3791 = vunpack.c.l.b16 %v3268
    %v3792 = vunpack.c.h.b16 %v3268
    %v3793 = vunpack.c.l.b16 %v3269
    %v3794 = vunpack.c.h.b16 %v3269
    %v3795 = vunpack.c.l.b16 %v3270
    %v3796 = vunpack.c.h.b16 %v3270
    %v3797 = vunpack.c.l.b16 %v3271
    %v3798 = vunpack.c.h.b16 %v3271
    %v3799 = vunpack.c.l.b16 %v3272
    %v3800 = vunpack.c.h.b16 %v3272
    %v3801 = vunpack.c.l.b16 %v3273
    %v3802 = vunpack.c.h.b16 %v3273
    %v3803 = vunpack.c.l.b16 %v3274
    %v3804 = vunpack.c.h.b16 %v3274
    %v3805 = vunpack.c.l.b16 %v3275
    %v3806 = vunpack.c.h.b16 %v3275
    %v3807 = vunpack.c.l.b16 %v3276
    %v3808 = vunpack.c.h.b16 %v3276
    %v3809 = vunpack.c.l.b16 %v3277
    %v3810 = vunpack.c.h.b16 %v3277
    %v3811 = vunpack.c.l.b16 %v3278
    %v3812 = vunpack.c.h.b16 %v3278
    %v3813 = vunpack.c.l.b16 %v3279
    %v3814 = vunpack.c.h.b16 %v3279
    %v3815 = vunpack.c.l.b16 %v3280
    %v3816 = vunpack.c.h.b16 %v3280
    %v3817 = vunpack.c.l.b16 %v3281
    %v3818 = vunpack.c.h.b16 %v3281
    %v3819 = vunpack.c.l.b16 %v3282
    %v3820 = vunpack.c.h.b16 %v3282
    %v3821 = vunpack.c.l.b16 %v3283
    %v3822 = vunpack.c.h.b16 %v3283
    %v3823 = vunpack.c.l.b16 %v3284
    %v3824 = vunpack.c.h.b16 %v3284
    %v3825 = vunpack.c.l.b16 %v3285
    %v3826 = vunpack.c.h.b16 %v3285
    %v3827 = vunpack.c.l.b16 %v3286
    %v3828 = vunpack.c.h.b16 %v3286
    %v3829 = vunpack.c.l.b16 %v3287
    %v3830 = vunpack.c.h.b16 %v3287
    %v3831 = vunpack.c.l.b16 %v3288
    %v3832 = vunpack.c.h.b16 %v3288
    %v3833 = vunpack.c.l.b16 %v3289
    %v3834 = vunpack.c.h.b16 %v3289
    %v3835 = vunpack.c.l.b16 %v3290
    %v3836 = vunpack.c.h.b16 %v3290
    %v3837 = vunpack.c.l.b16 %v3291
    %v3838 = vunpack.c.h.b16 %v3291
    %v3839 = vunpack.c.l.b16 %v3292
    %v3840 = vunpack.c.h.b16 %v3292
    %v3841 = vunpack.c.l.b16 %v3293
    %v3842 = vunpack.c.h.b16 %v3293
    %v3843 = vunpack.c.l.b16 %v3294
    %v3844 = vunpack.c.h.b16 %v3294
    %v3845 = vunpack.c.l.b16 %v3295
    %v3846 = vunpack.c.h.b16 %v3295
    %v3847 = vunpack.c.l.b16 %v3296
    %v3848 = vunpack.c.h.b16 %v3296
    %v3849 = vunpack.c.l.b16 %v3297
    %v3850 = vunpack.c.h.b16 %v3297
    %v3851 = vunpack.c.l.b16 %v3298
    %v3852 = vunpack.c.h.b16 %v3298
    %v3853 = vunpack.c.l.b16 %v3299
    %v3854 = vunpack.c.h.b16 %v3299
    %v3855 = vunpack.c.l.b16 %v3300
    %v3856 = vunpack.c.h.b16 %v3300
    %v3857 = vunpack.c.l.b16 %v3301
    %v3858 = vunpack.c.h.b16 %v3301
    %v3859 = vunpack.c.l.b16 %v3302
    %v3860 = vunpack.c.h.b16 %v3302
    %v3861 = vunpack.c.l.b16 %v3303
    %v3862 = vunpack.c.h.b16 %v3303
    %v3863 = vunpack.c.l.b16 %v3304
    %v3864 = vunpack.c.h.b16 %v3304
    %v3865 = vunpack.c.l.b16 %v3305
    %v3866 = vunpack.c.h.b16 %v3305
    %v3867 = vunpack.c.l.b16 %v3306
    %v3868 = vunpack.c.h.b16 %v3306
    %v3869 = vunpack.c.l.b16 %v3307
    %v3870 = vunpack.c.h.b16 %v3307
    %v3871 = vunpack.c.l.b16 %v3308
    %v3872 = vunpack.c.h.b16 %v3308
    %v3873 = vunpack.c.l.b16 %v3309
    %v3874 = vunpack.c.h.b16 %v3309
    %v3875 = vunpack.c.l.b16 %v3310
    %v3876 = vunpack.c.h.b16 %v3310
    %v3877 = vunpack.c.l.b16 %v3311
    %v3878 = vunpack.c.h.b16 %v3311
    %v3879 = vunpack.c.l.b16 %v3312
    %v3880 = vunpack.c.h.b16 %v3312
    %v3881 = vunpack.c.l.b16 %v3313
    %v3882 = vunpack.c.h.b16 %v3313
    %v3883 = vunpack.c.l.b16 %v3314
    %v3884 = vunpack.c.h.b16 %v3314
    %v3885 = vunpack.c.l.b16 %v3315
    %v3886 = vunpack.c.h.b16 %v3315
    %v3887 = vunpack.c.l.b16 %v3316
    %v3888 = vunpack.c.h.b16 %v3316
    %v3889 = vunpack.c.l.b16 %v3317
    %v3890 = vunpack.c.h.b16 %v3317
    %v3891 = vunpack.c.l.b16 %v3318
    %v3892 = vunpack.c.h.b16 %v3318
    %v3893 = vunpack.c.l.b16 %v3319
    %v3894 = vunpack.c.h.b16 %v3319
    %v3895 = vunpack.c.l.b16 %v3320
    %v3896 = vunpack.c.h.b16 %v3320
    %v3897 = vunpack.c.l.b16 %v3321
    %v3898 = vunpack.c.h.b16 %v3321
    %v3899 = vunpack.c.l.b16 %v3322
    %v3900 = vunpack.c.h.b16 %v3322
    %v3901 = vunpack.c.l.b16 %v3323
    %v3902 = vunpack.c.h.b16 %v3323
    %v3903 = vunpack.c.l.b16 %v3324
    %v3904 = vunpack.c.h.b16 %v3324
    %v3905 = vunpack.c.l.b16 %v3325
    %v3906 = vunpack.c.h.b16 %v3325
    %v3907 = vunpack.c.l.b16 %v3326
    %v3908 = vunpack.c.h.b16 %v3326
    %v3909 = vunpack.c.l.b16 %v3327
    %v3910 = vunpack.c.h.b16 %v3327
    %v3911 = vunpack.c.l.b16 %v3328
    %v3912 = vunpack.c.h.b16 %v3328
    %v3913 = vunpack.c.l.b16 %v3329
    %v3914 = vunpack.c.h.b16 %v3329
    %v3915 = vunpack.c.l.b16 %v3330
    %v3916 = vunpack.c.h.b16 %v3330
    %v3917 = vunpack.c.l.b16 %v3331
    %v3918 = vunpack.c.h.b16 %v3331
    %v3919 = vunpack.c.l.b16 %v3332
    %v3920 = vunpack.c.h.b16 %v3332
    %v3921 = vunpack.c.l.b16 %v3333
    %v3922 = vunpack.c.h.b16 %v3333
    %v3923 = vunpack.c.l.b16 %v3334
    %v3924 = vunpack.c.h.b16 %v3334
    %v3925 = vunpack.c.l.b16 %v3335
    %v3926 = vunpack.c.h.b16 %v3335
    %v3927 = vunpack.c.l.b16 %v3336
    %v3928 = vunpack.c.h.b16 %v3336
    %v3929 = vunpack.c.l.b16 %v3337
    %v3930 = vunpack.c.h.b16 %v3337
    %v3931 = vunpack.c.l.b16 %v3338
    %v3932 = vunpack.c.h.b16 %v3338
    %v3933 = vunpack.c.l.b16 %v3339
    %v3934 = vunpack.c.h.b16 %v3339
    %v3935 = vunpack.c.l.b16 %v3340
    %v3936 = vunpack.c.h.b16 %v3340
    %v3937 = vunpack.c.l.b16 %v3341
    %v3938 = vunpack.c.h.b16 %v3341
    %v3939 = vunpack.c.l.b16 %v3342
    %v3940 = vunpack.c.h.b16 %v3342
    %v3941 = vunpack.c.l.b16 %v3343
    %v3942 = vunpack.c.h.b16 %v3343
    %v3943 = vunpack.c.l.b16 %v3344
    %v3944 = vunpack.c.h.b16 %v3344
    %v3945 = vunpack.c.l.b16 %v3345
    %v3946 = vunpack.c.h.b16 %v3345
    %v3947 = vunpack.c.l.b16 %v3346
    %v3948 = vunpack.c.h.b16 %v3346
    %v3949 = vunpack.c.l.b16 %v3347
    %v3950 = vunpack.c.h.b16 %v3347
    %v3951 = vunpack.c.l.b16 %v3348
    %v3952 = vunpack.c.h.b16 %v3348
    %v3953 = vunpack.c.l.b16 %v3349
    %v3954 = vunpack.c.h.b16 %v3349
    %v3955 = vunpack.c.l.b16 %v3350
    %v3956 = vunpack.c.h.b16 %v3350
    %v3957 = vunpack.c.l.b16 %v3351
    %v3958 = vunpack.c.h.b16 %v3351
    %v3959 = vunpack.c.l.b16 %v3352
    %v3960 = vunpack.c.h.b16 %v3352
    %v3961 = vunpack.c.l.b16 %v3353
    %v3962 = vunpack.c.h.b16 %v3353
    %v3963 = vunpack.c.l.b16 %v3354
    %v3964 = vunpack.c.h.b16 %v3354
    %v3965 = vunpack.c.l.b16 %v3355
    %v3966 = vunpack.c.h.b16 %v3355
    %v3967 = vunpack.c.l.b16 %v3356
    %v3968 = vunpack.c.h.b16 %v3356
    %v3969 = vunpack.c.l.b16 %v3357
    %v3970 = vunpack.c.h.b16 %v3357
    %v3971 = vunpack.c.l.b16 %v3358
    %v3972 = vunpack.c.h.b16 %v3358
    %v3973 = vunpack.c.l.b16 %v3359
    %v3974 = vunpack.c.h.b16 %v3359
    %v3975 = vunpack.c.l.b16 %v3360
    %v3976 = vunpack.c.h.b16 %v3360
    %v3977 = vunpack.c.l.b16 %v3361
    %v3978 = vunpack.c.h.b16 %v3361
    %v3979 = vunpack.c.l.b16 %v3362
    %v3980 = vunpack.c.h.b16 %v3362
    %v3981 = vunpack.c.l.b16 %v3363
    %v3982 = vunpack.c.h.b16 %v3363
    %v3983 = vunpack.c.l.b16 %v3364
    %v3984 = vunpack.c.h.b16 %v3364
    %v3985 = vunpack.c.l.b16 %v3365
    %v3986 = vunpack.c.h.b16 %v3365
    %v3987 = vunpack.c.l.b16 %v3366
    %v3988 = vunpack.c.h.b16 %v3366
    %v3989 = vunpack.c.l.b16 %v3367
    %v3990 = vunpack.c.h.b16 %v3367
    %v3991 = vunpack.c.l.b16 %v3368
    %v3992 = vunpack.c.h.b16 %v3368
    %v3993 = vunpack.c.l.b16 %v3369
    %v3994 = vunpack.c.h.b16 %v3369
    %v3995 = vunpack.c.l.b16 %v3370
    %v3996 = vunpack.c.h.b16 %v3370
    %v3997 = vunpack.c.l.b16 %v3371
    %v3998 = vunpack.c.h.b16 %v3371
    %v3999 = vunpack.c.l.b16 %v3372
    %v4000 = vunpack.c.h.b16 %v3372
    %v4001 = vunpack.c.l.b16 %v3373
    %v4002 = vunpack.c.h.b16 %v3373
    %v4003 = vunpack.c.l.b16 %v3374
    %v4004 = vunpack.c.h.b16 %v3374
    %v4005 = vunpack.c.l.b16 %v3375
    %v4006 = vunpack.c.h.b16 %v3375
    %v4007 = vunpack.c.l.b16 %v3376
    %v4008 = vunpack.c.h.b16 %v3376
    %v4009 = vunpack.c.l.b16 %v3377
    %v4010 = vunpack.c.h.b16 %v3377
    %v4011 = vunpack.c.l.b16 %v3378
    %v4012 = vunpack.c.h.b16 %v3378
    %v4013 = vunpack.c.l.b16 %v3379
    %v4014 = vunpack.c.h.b16 %v3379
    %v4015 = vunpack.c.l.b16 %v3380
    %v4016 = vunpack.c.h.b16 %v3380
    %v4017 = vunpack.c.l.b16 %v3381
    %v4018 = vunpack.c.h.b16 %v3381
    %v4019 = vunpack.c.l.b16 %v3382
    %v4020 = vunpack.c.h.b16 %v3382
    %v4021 = vunpack.c.l.b16 %v3383
    %v4022 = vunpack.c.h.b16 %v3383
    %v4023 = vunpack.c.l.b16 %v3384
    %v4024 = vunpack.c.h.b16 %v3384
    %v4025 = vunpack.c.l.b16 %v3385
    %v4026 = vunpack.c.h.b16 %v3385
    %v4027 = vunpack.c.l.b16 %v3386
    %v4028 = vunpack.c.h.b16 %v3386
    %v4029 = vunpack.c.l.b16 %v3387
    %v4030 = vunpack.c.h.b16 %v3387
    %v4031 = vunpack.c.l.b16 %v3388
    %v4032 = vunpack.c.h.b16 %v3388
    %v4033 = vunpack.c.l.b16 %v3389
    %v4034 = vunpack.c.h.b16 %v3389
    %v4035 = vunpack.c.l.b16 %v3390
    %v4036 = vunpack.c.h.b16 %v3390
    %v4037 = vunpack.c.l.b16 %v3391
    %v4038 = vunpack.c.h.b16 %v3391
    %v4039 = vunpack.c.l.b16 %v3392
    %v4040 = vunpack.c.h.b16 %v3392
    %v4041 = vunpack.c.l.b16 %v3393
    %v4042 = vunpack.c.h.b16 %v3393
    %v4043 = vunpack.c.l.b16 %v3394
    %v4044 = vunpack.c.h.b16 %v3394
    %v4045 = vunpack.c.l.b16 %v3395
    %v4046 = vunpack.c.h.b16 %v3395
    %v4047 = vunpack.c.l.b16 %v3396
    %v4048 = vunpack.c.h.b16 %v3396
    %v4049 = vunpack.c.l.b16 %v3397
    %v4050 = vunpack.c.h.b16 %v3397
    %v4051 = vunpack.c.l.b16 %v3398
    %v4052 = vunpack.c.h.b16 %v3398
    %v4053 = vunpack.c.l.b16 %v3399
    %v4054 = vunpack.c.h.b16 %v3399
    %v4055 = vunpack.c.l.b16 %v3400
    %v4056 = vunpack.c.h.b16 %v3400
    %v4057 = vunpack.c.l.b16 %v3401
    %v4058 = vunpack.c.h.b16 %v3401
    %v4059 = vunpack.c.l.b16 %v3402
    %v4060 = vunpack.c.h.b16 %v3402
    %v4061 = vunpack.c.l.b16 %v3403
    %v4062 = vunpack.c.h.b16 %v3403
    %v4063 = vunpack.c.l.b16 %v3404
    %v4064 = vunpack.c.h.b16 %v3404
    %v4065 = vunpack.c.l.b16 %v3405
    %v4066 = vunpack.c.h.b16 %v3405
    %v4067 = vunpack.c.l.b16 %v3406
    %v4068 = vunpack.c.h.b16 %v3406
    %v4069 = vunpack.c.l.b16 %v3407
    %v4070 = vunpack.c.h.b16 %v3407
    %v4071 = vunpack.c.l.b16 %v3408
    %v4072 = vunpack.c.h.b16 %v3408
    %v4073 = vunpack.c.l.b16 %v3409
    %v4074 = vunpack.c.h.b16 %v3409
    %v4075 = vunpack.c.l.b16 %v3410
    %v4076 = vunpack.c.h.b16 %v3410
    %v4077 = vunpack.c.l.b16 %v3411
    %v4078 = vunpack.c.h.b16 %v3411
    %v4079 = vunpack.c.l.b16 %v3412
    %v4080 = vunpack.c.h.b16 %v3412
    %v4081 = vunpack.c.l.b16 %v3413
    %v4082 = vunpack.c.h.b16 %v3413
    %v4083 = vunpack.c.l.b16 %v3414
    %v4084 = vunpack.c.h.b16 %v3414
    %v4085 = vunpack.c.l.b16 %v3415
    %v4086 = vunpack.c.h.b16 %v3415
    %v4087 = vunpack.c.l.b16 %v3416
    %v4088 = vunpack.c.h.b16 %v3416
    %v4089 = vunpack.c.l.b16 %v3417
    %v4090 = vunpack.c.h.b16 %v3417
    %v4091 = vunpack.c.l.b16 %v3418
    %v4092 = vunpack.c.h.b16 %v3418
    %v4093 = vunpack.c.l.b16 %v3419
    %v4094 = vunpack.c.h.b16 %v3419
    %v4095 = vunpack.c.l.b16 %v3420
    %v4096 = vunpack.c.h.b16 %v3420
    %v4097 = vunpack.c.l.b16 %v3421
    %v4098 = vunpack.c.h.b16 %v3421
    %v4099 = vunpack.c.l.b16 %v3422
    %v4100 = vunpack.c.h.b16 %v3422
    %v4101 = vunpack.c.l.b16 %v3423
    %v4102 = vunpack.c.h.b16 %v3423
    %v4103 = vunpack.c.l.b16 %v3424
    %v4104 = vunpack.c.h.b16 %v3424
    %v4105 = vunpack.c.l.b16 %v3425
    %v4106 = vunpack.c.h.b16 %v3425
    %v4107 = vunpack.c.l.b16 %v3426
    %v4108 = vunpack.c.h.b16 %v3426
    %v4109 = vunpack.c.l.b16 %v3427
    %v4110 = vunpack.c.h.b16 %v3427
    %v4111 = vunpack.c.l.b16 %v3428
    %v4112 = vunpack.c.h.b16 %v3428
    %v4113 = vunpack.c.l.b16 %v3429
    %v4114 = vunpack.c.h.b16 %v3429
    %v4115 = vunpack.c.l.b16 %v3430
    %v4116 = vunpack.c.h.b16 %v3430
    %v4117 = vunpack.c.l.b16 %v3431
    %v4118 = vunpack.c.h.b16 %v3431
    %v4119 = vunpack.c.l.b16 %v3432
    %v4120 = vunpack.c.h.b16 %v3432
    %v4121 = vunpack.c.l.b16 %v3433
    %v4122 = vunpack.c.h.b16 %v3433
    %v4123 = vunpack.c.l.b16 %v3434
    %v4124 = vunpack.c.h.b16 %v3434
    %v4125 = vunpack.c.l.b16 %v3435
    %v4126 = vunpack.c.h.b16 %v3435
    %v4127 = vunpack.c.l.b16 %v3436
    %v4128 = vunpack.c.h.b16 %v3436
    %v4129 = vunpack.c.l.b16 %v3437
    %v4130 = vunpack.c.h.b16 %v3437
    %v4131 = vunpack.c.l.b16 %v3438
    %v4132 = vunpack.c.h.b16 %v3438
    %v4133 = vunpack.c.l.b16 %v3439
    %v4134 = vunpack.c.h.b16 %v3439
    %v4135 = vunpack.c.l.b16 %v3440
    %v4136 = vunpack.c.h.b16 %v3440
    %v4137 = vunpack.c.l.b16 %v3441
    %v4138 = vunpack.c.h.b16 %v3441
    %v4139 = vunpack.c.l.b16 %v3442
    %v4140 = vunpack.c.h.b16 %v3442
    %v4141 = vunpack.c.l.b16 %v3443
    %v4142 = vunpack.c.h.b16 %v3443
    %v4143 = vunpack.c.l.b16 %v3444
    %v4144 = vunpack.c.h.b16 %v3444
    %v4145 = vunpack.c.l.b16 %v3445
    %v4146 = vunpack.c.h.b16 %v3445
    %v4147 = vunpack.c.l.b16 %v3446
    %v4148 = vunpack.c.h.b16 %v3446
    %v4149 = vunpack.c.l.b16 %v3447
    %v4150 = vunpack.c.h.b16 %v3447
    %v4151 = vunpack.c.l.b16 %v3448
    %v4152 = vunpack.c.h.b16 %v3448
    %v4153 = vunpack.c.l.b16 %v3449
    %v4154 = vunpack.c.h.b16 %v3449
    %v4155 = vunpack.c.l.b16 %v3450
    %v4156 = vunpack.c.h.b16 %v3450
    %v4157 = vunpack.c.l.b16 %v3451
    %v4158 = vunpack.c.h.b16 %v3451
    %v4159 = vunpack.c.l.b16 %v3452
    %v4160 = vunpack.c.h.b16 %v3452
    %v4161 = vunpack.c.l.b16 %v3453
    %v4162 = vunpack.c.h.b16 %v3453
    %v4163 = vunpack.c.l.b16 %v3454
    %v4164 = vunpack.c.h.b16 %v3454
    %v4165 = vunpack.c.l.b16 %v3455
    %v4166 = vunpack.c.h.b16 %v3455
    %v4167 = vunpack.c.l.b16 %v3456
    %v4168 = vunpack.c.h.b16 %v3456
    %v4169 = vunpack.c.l.b16 %v3457
    %v4170 = vunpack.c.h.b16 %v3457
    %v4171 = vunpack.c.l.b16 %v3458
    %v4172 = vunpack.c.h.b16 %v3458
    %v4173 = vunpack.c.l.b16 %v3459
    %v4174 = vunpack.c.h.b16 %v3459
    %v4175 = vunpack.c.l.b16 %v3460
    %v4176 = vunpack.c.h.b16 %v3460
    %v4177 = vunpack.c.l.b16 %v3461
    %v4178 = vunpack.c.h.b16 %v3461
    %v4179 = vunpack.c.l.b16 %v3462
    %v4180 = vunpack.c.h.b16 %v3462
    %v4181 = vunpack.c.l.b16 %v3463
    %v4182 = vunpack.c.h.b16 %v3463
    %v4183 = vunpack.c.l.b16 %v3464
    %v4184 = vunpack.c.h.b16 %v3464
    %v4185 = vunpack.c.l.b16 %v3465
    %v4186 = vunpack.c.h.b16 %v3465
    %v4187 = vunpack.c.l.b16 %v3466
    %v4188 = vunpack.c.h.b16 %v3466
    %v4189 = vunpack.c.l.b16 %v3467
    %v4190 = vunpack.c.h.b16 %v3467
    %v4191 = vunpack.c.l.b16 %v3468
    %v4192 = vunpack.c.h.b16 %v3468
    %v4193 = vunpack.c.l.b16 %v3469
    %v4194 = vunpack.c.h.b16 %v3469
    %v4195 = vunpack.c.l.b16 %v3470
    %v4196 = vunpack.c.h.b16 %v3470
    %v4197 = vunpack.c.l.b16 %v3471
    %v4198 = vunpack.c.h.b16 %v3471
    %v4199 = vunpack.c.l.b16 %v3472
    %v4200 = vunpack.c.h.b16 %v3472
    %v4201 = vunpack.c.l.b16 %v3473
    %v4202 = vunpack.c.h.b16 %v3473
    %v4203 = vunpack.c.l.b16 %v3474
    %v4204 = vunpack.c.h.b16 %v3474
    %v4205 = vunpack.c.l.b16 %v3475
    %v4206 = vunpack.c.h.b16 %v3475
    %v4207 = vunpack.c.l.b16 %v3476
    %v4208 = vunpack.c.h.b16 %v3476
    %v4209 = vunpack.c.l.b16 %v3477
    %v4210 = vunpack.c.h.b16 %v3477
    %v4211 = vunpack.c.l.b16 %v3478
    %v4212 = vunpack.c.h.b16 %v3478
    %v4213 = vunpack.c.l.b16 %v3479
    %v4214 = vunpack.c.h.b16 %v3479
    %v4215 = vunpack.c.l.b16 %v3480
    %v4216 = vunpack.c.h.b16 %v3480
    %v4217 = vunpack.c.l.b16 %v3481
    %v4218 = vunpack.c.h.b16 %v3481
    %v4219 = vunpack.c.l.b16 %v3482
    %v4220 = vunpack.c.h.b16 %v3482
    %v4221 = vunpack.c.l.b16 %v3483
    %v4222 = vunpack.c.h.b16 %v3483
    %v4223 = vunpack.c.l.b16 %v3484
    %v4224 = vunpack.c.h.b16 %v3484
    %v4225 = vunpack.c.l.b16 %v3485
    %v4226 = vunpack.c.h.b16 %v3485
    %v4227 = vunpack.c.l.b16 %v3486
    %v4228 = vunpack.c.h.b16 %v3486
    %v4229 = vunpack.c.l.b16 %v3487
    %v4230 = vunpack.c.h.b16 %v3487
    %v4231 = vunpack.c.l.b16 %v3488
    %v4232 = vunpack.c.h.b16 %v3488
    %v4233 = vunpack.c.l.b16 %v3489
    %v4234 = vunpack.c.h.b16 %v3489
    %v4235 = vunpack.c.l.b16 %v3490
    %v4236 = vunpack.c.h.b16 %v3490
    %v4237 = vunpack.c.l.b16 %v3491
    %v4238 = vunpack.c.h.b16 %v3491
    %v4239 = vunpack.c.l.b16 %v3492
    %v4240 = vunpack.c.h.b16 %v3492
    %v4241 = vunpack.c.l.b16 %v3493
    %v4242 = vunpack.c.h.b16 %v3493
    %v4243 = vunpack.c.l.b16 %v3494
    %v4244 = vunpack.c.h.b16 %v3494
    %v4245 = vunpack.c.l.b16 %v3495
    %v4246 = vunpack.c.h.b16 %v3495
    %v4247 = vunpack.c.l.b16 %v3496
    %v4248 = vunpack.c.h.b16 %v3496
    %v4249 = vunpack.c.l.b16 %v3497
    %v4250 = vunpack.c.h.b16 %v3497
    %v4251 = vunpack.c.l.b16 %v3498
    %v4252 = vunpack.c.h.b16 %v3498
    %v4253 = vunpack.c.l.b16 %v3499
    %v4254 = vunpack.c.h.b16 %v3499
    %v4255 = vunpack.c.l.b16 %v3500
    %v4256 = vunpack.c.h.b16 %v3500
    %v4257 = vunpack.c.l.b16 %v3501
    %v4258 = vunpack.c.h.b16 %v3501
    %v4259 = vunpack.c.l.b16 %v3502
    %v4260 = vunpack.c.h.b16 %v3502
    %v4261 = vunpack.c.l.b16 %v3503
    %v4262 = vunpack.c.h.b16 %v3503
    %v4263 = vunpack.c.l.b16 %v3504
    %v4264 = vunpack.c.h.b16 %v3504
    %v4265 = vunpack.c.l.b16 %v3505
    %v4266 = vunpack.c.h.b16 %v3505
    %v4267 = vunpack.c.l.b16 %v3506
    %v4268 = vunpack.c.h.b16 %v3506
    %v4269 = vunpack.c.l.b16 %v3507
    %v4270 = vunpack.c.h.b16 %v3507
    %v4271 = vunpack.c.l.b16 %v3508
    %v4272 = vunpack.c.h.b16 %v3508
    %v4273 = vunpack.c.l.b16 %v3509
    %v4274 = vunpack.c.h.b16 %v3509
    %v4275 = vunpack.c.l.b16 %v3510
    %v4276 = vunpack.c.h.b16 %v3510
    %v4277 = vunpack.c.l.b16 %v3511
    %v4278 = vunpack.c.h.b16 %v3511
    %v4279 = vunpack.c.l.b16 %v3512
    %v4280 = vunpack.c.h.b16 %v3512
    %v4281 = vunpack.c.l.b16 %v3513
    %v4282 = vunpack.c.h.b16 %v3513
    %v4283 = vunpack.c.l.b16 %v3514
    %v4284 = vunpack.c.h.b16 %v3514
    %v4285 = vunpack.c.l.b16 %v3515
    %v4286 = vunpack.c.h.b16 %v3515
    %v4287 = vunpack.c.l.b16 %v3516
    %v4288 = vunpack.c.h.b16 %v3516
    %v4289 = vunpack.c.l.b16 %v3517
    %v4290 = vunpack.c.h.b16 %v3517
    %v4291 = vunpack.c.l.b16 %v3518
    %v4292 = vunpack.c.h.b16 %v3518
    %v4293 = vunpack.c.l.b16 %v3519
    %v4294 = vunpack.c.h.b16 %v3519
    %v4295 = vunpack.c.l.b16 %v3520
    %v4296 = vunpack.c.h.b16 %v3520
    %v4297 = vunpack.c.l.b16 %v3521
    %v4298 = vunpack.c.h.b16 %v3521
    %v4299 = vunpack.c.l.b16 %v3522
    %v4300 = vunpack.c.h.b16 %v3522
    %v4301 = vpack.c.b16 %v3793, %v3789
    %v4302 = vpack.c.b16 %v3794, %v3790
    %v4303 = vpack.c.b16 %v3795, %v3791
    %v4304 = vpack.c.b16 %v3796, %v3792
    %v4305 = vpack.c.b16 %v3801, %v3797
    %v4306 = vpack.c.b16 %v3802, %v3798
    %v4307 = vpack.c.b16 %v3803, %v3799
    %v4308 = vpack.c.b16 %v3804, %v3800
    %v4309 = vpack.c.b16 %v3809, %v3805
    %v4310 = vpack.c.b16 %v3810, %v3806
    %v4311 = vpack.c.b16 %v3811, %v3807
    %v4312 = vpack.c.b16 %v3812, %v3808
    %v4313 = vpack.c.b16 %v3817, %v3813
    %v4314 = vpack.c.b16 %v3818, %v3814
    %v4315 = vpack.c.b16 %v3819, %v3815
    %v4316 = vpack.c.b16 %v3820, %v3816
    %v4317 = vpack.c.b16 %v3825, %v3821
    %v4318 = vpack.c.b16 %v3826, %v3822
    %v4319 = vpack.c.b16 %v3827, %v3823
    %v4320 = vpack.c.b16 %v3828, %v3824
    %v4321 = vpack.c.b16 %v3833, %v3829
    %v4322 = vpack.c.b16 %v3834, %v3830
    %v4323 = vpack.c.b16 %v3835, %v3831
    %v4324 = vpack.c.b16 %v3836, %v3832
    %v4325 = vpack.c.b16 %v3841, %v3837
    %v4326 = vpack.c.b16 %v3842, %v3838
    %v4327 = vpack.c.b16 %v3843, %v3839
    %v4328 = vpack.c.b16 %v3844, %v3840
    %v4329 = vpack.c.b16 %v3849, %v3845
    %v4330 = vpack.c.b16 %v3850, %v3846
    %v4331 = vpack.c.b16 %v3851, %v3847
    %v4332 = vpack.c.b16 %v3852, %v3848
    %v4333 = vpack.c.b16 %v3857, %v3853
    %v4334 = vpack.c.b16 %v3858, %v3854
    %v4335 = vpack.c.b16 %v3859, %v3855
    %v4336 = vpack.c.b16 %v3860, %v3856
    %v4337 = vpack.c.b16 %v3865, %v3861
    %v4338 = vpack.c.b16 %v3866, %v3862
    %v4339 = vpack.c.b16 %v3867, %v3863
    %v4340 = vpack.c.b16 %v3868, %v3864
    %v4341 = vpack.c.b16 %v3873, %v3869
    %v4342 = vpack.c.b16 %v3874, %v3870
    %v4343 = vpack.c.b16 %v3875, %v3871
    %v4344 = vpack.c.b16 %v3876, %v3872
    %v4345 = vpack.c.b16 %v3881, %v3877
    %v4346 = vpack.c.b16 %v3882, %v3878
    %v4347 = vpack.c.b16 %v3883, %v3879
    %v4348 = vpack.c.b16 %v3884, %v3880
    %v4349 = vpack.c.b16 %v3889, %v3885
    %v4350 = vpack.c.b16 %v3890, %v3886
    %v4351 = vpack.c.b16 %v3891, %v3887
    %v4352 = vpack.c.b16 %v3892, %v3888
    %v4353 = vpack.c.b16 %v3897, %v3893
    %v4354 = vpack.c.b16 %v3898, %v3894
    %v4355 = vpack.c.b16 %v3899, %v3895
    %v4356 = vpack.c.b16 %v3900, %v3896
    %v4357 = vpack.c.b16 %v3905, %v3901
    %v4358 = vpack.c.b16 %v3906, %v3902
    %v4359 = vpack.c.b16 %v3907, %v3903
    %v4360 = vpack.c.b16 %v3908, %v3904
    %v4361 = vpack.c.b16 %v3913, %v3909
    %v4362 = vpack.c.b16 %v3914, %v3910
    %v4363 = vpack.c.b16 %v3915, %v3911
    %v4364 = vpack.c.b16 %v3916, %v3912
    %v4365 = vpack.c.b16 %v3921, %v3917
    %v4366 = vpack.c.b16 %v3922, %v3918
    %v4367 = vpack.c.b16 %v3923, %v3919
    %v4368 = vpack.c.b16 %v3924, %v3920
    %v4369 = vpack.c.b16 %v3929, %v3925
    %v4370 = vpack.c.b16 %v3930, %v3926
    %v4371 = vpack.c.b16 %v3931, %v3927
    %v4372 = vpack.c.b16 %v3932, %v3928
    %v4373 = vpack.c.b16 %v3937, %v3933
    %v4374 = vpack.c.b16 %v3938, %v3934
    %v4375 = vpack.c.b16 %v3939, %v3935
    %v4376 = vpack.c.b16 %v3940, %v3936
    %v4377 = vpack.c.b16 %v3945, %v3941
    %v4378 = vpack.c.b16 %v3946, %v3942
    %v4379 = vpack.c.b16 %v3947, %v3943
    %v4380 = vpack.c.b16 %v3948, %v3944
    %v4381 = vpack.c.b16 %v3953, %v3949
    %v4382 = vpack.c.b16 %v3954, %v3950
    %v4383 = vpack.c.b16 %v3955, %v3951
    %v4384 = vpack.c.b16 %v3956, %v3952
    %v4385 = vpack.c.b16 %v3961, %v3957
    %v4386 = vpack.c.b16 %v3962, %v3958
    %v4387 = vpack.c.b16 %v3963, %v3959
    %v4388 = vpack.c.b16 %v3964, %v3960
    %v4389 = vpack.c.b16 %v3969, %v3965
    %v4390 = vpack.c.b16 %v3970, %v3966
    %v4391 = vpack.c.b16 %v3971, %v3967
    %v4392 = vpack.c.b16 %v3972, %v3968
    %v4393 = vpack.c.b16 %v3977, %v3973
    %v4394 = vpack.c.b16 %v3978, %v3974
    %v4395 = vpack.c.b16 %v3979, %v3975
    %v4396 = vpack.c.b16 %v3980, %v3976
    %v4397 = vpack.c.b16 %v3985, %v3981
    %v4398 = vpack.c.b16 %v3986, %v3982
    %v4399 = vpack.c.b16 %v3987, %v3983
    %v4400 = vpack.c.b16 %v3988, %v3984
    %v4401 = vpack.c.b16 %v3993, %v3989
    %v4402 = vpack.c.b16 %v3994, %v3990
    %v4403 = vpack.c.b16 %v3995, %v3991
    %v4404 = vpack.c.b16 %v3996, %v3992
    %v4405 = vpack.c.b16 %v4001, %v3997
    %v4406 = vpack.c.b16 %v4002, %v3998
    %v4407 = vpack.c.b16 %v4003, %v3999
    %v4408 = vpack.c.b16 %v4004, %v4000
    %v4409 = vpack.c.b16 %v4009, %v4005
    %v4410 = vpack.c.b16 %v4010, %v4006
    %v4411 = vpack.c.b16 %v4011, %v4007
    %v4412 = vpack.c.b16 %v4012, %v4008
    %v4413 = vpack.c.b16 %v4017, %v4013
    %v4414 = vpack.c.b16 %v4018, %v4014
    %v4415 = vpack.c.b16 %v4019, %v4015
    %v4416 = vpack.c.b16 %v4020, %v4016
    %v4417 = vpack.c.b16 %v4025, %v4021
    %v4418 = vpack.c.b16 %v4026, %v4022
    %v4419 = vpack.c.b16 %v4027, %v4023
    %v4420 = vpack.c.b16 %v4028, %v4024
    %v4421 = vpack.c.b16 %v4033, %v4029
    %v4422 = vpack.c.b16 %v4034, %v4030
    %v4423 = vpack.c.b16 %v4035, %v4031
    %v4424 = vpack.c.b16 %v4036, %v4032
    %v4425 = vpack.c.b16 %v4041, %v4037
    %v4426 = vpack.c.b16 %v4042, %v4038
    %v4427 = vpack.c.b16 %v4043, %v4039
    %v4428 = vpack.c.b16 %v4044, %v4040
    %v4429 = vpack.c.b16 %v4049, %v4045
    %v4430 = vpack.c.b16 %v4050, %v4046
    %v4431 = vpack.c.b16 %v4051, %v4047
    %v4432 = vpack.c.b16 %v4052, %v4048
    %v4433 = vpack.c.b16 %v4057, %v4053
    %v4434 = vpack.c.b16 %v4058, %v4054
    %v4435 = vpack.c.b16 %v4059, %v4055
    %v4436 = vpack.c.b16 %v4060, %v4056
    %v4437 = vpack.c.b16 %v4065, %v4061
    %v4438 = vpack.c.b16 %v4066, %v4062
    %v4439 = vpack.c.b16 %v4067, %v4063
    %v4440 = vpack.c.b16 %v4068, %v4064
    %v4441 = vpack.c.b16 %v4073, %v4069
    %v4442 = vpack.c.b16 %v4074, %v4070
    %v4443 = vpack.c.b16 %v4075, %v4071
    %v4444 = vpack.c.b16 %v4076, %v4072
    %v4445 = vpack.c.b16 %v4081, %v4077
    %v4446 = vpack.c.b16 %v4082, %v4078
    %v4447 = vpack.c.b16 %v4083, %v4079
    %v4448 = vpack.c.b16 %v4084, %v4080
    %v4449 = vpack.c.b16 %v4089, %v4085
    %v4450 = vpack.c.b16 %v4090, %v4086
    %v4451 = vpack.c.b16 %v4091, %v4087
    %v4452 = vpack.c.b16 %v4092, %v4088
    %v4453 = vpack.c.b16 %v4097, %v4093
    %v4454 = vpack.c.b16 %v4098, %v4094
    %v4455 = vpack.c.b16 %v4099, %v4095
    %v4456 = vpack.c.b16 %v4100, %v4096
    %v4457 = vpack.c.b16 %v4105, %v4101
    %v4458 = vpack.c.b16 %v4106, %v4102
    %v4459 = vpack.c.b16 %v4107, %v4103
    %v4460 = vpack.c.b16 %v4108, %v4104
    %v4461 = vpack.c.b16 %v4113, %v4109
    %v4462 = vpack.c.b16 %v4114, %v4110
    %v4463 = vpack.c.b16 %v4115, %v4111
    %v4464 = vpack.c.b16 %v4116, %v4112
    %v4465 = vpack.c.b16 %v4121, %v4117
    %v4466 = vpack.c.b16 %v4122, %v4118
    %v4467 = vpack.c.b16 %v4123, %v4119
    %v4468 = vpack.c.b16 %v4124, %v4120
    %v4469 = vpack.c.b16 %v4129, %v4125
    %v4470 = vpack.c.b16 %v4130, %v4126
    %v4471 = vpack.c.b16 %v4131, %v4127
    %v4472 = vpack.c.b16 %v4132, %v4128
    %v4473 = vpack.c.b16 %v4137, %v4133
    %v4474 = vpack.c.b16 %v4138, %v4134
    %v4475 = vpack.c.b16 %v4139, %v4135
    %v4476 = vpack.c.b16 %v4140, %v4136
    %v4477 = vpack.c.b16 %v4145, %v4141
    %v4478 = vpack.c.b16 %v4146, %v4142
    %v4479 = vpack.c.b16 %v4147, %v4143
    %v4480 = vpack.c.b16 %v4148, %v4144
    %v4481 = vpack.c.b16 %v4153, %v4149
    %v4482 = vpack.c.b16 %v4154, %v4150
    %v4483 = vpack.c.b16 %v4155, %v4151
    %v4484 = vpack.c.b16 %v4156, %v4152
    %v4485 = vpack.c.b16 %v4161, %v4157
    %v4486 = vpack.c.b16 %v4162, %v4158
    %v4487 = vpack.c.b16 %v4163, %v4159
    %v4488 = vpack.c.b16 %v4164, %v4160
    %v4489 = vpack.c.b16 %v4169, %v4165
    %v4490 = vpack.c.b16 %v4170, %v4166
    %v4491 = vpack.c.b16 %v4171, %v4167
    %v4492 = vpack.c.b16 %v4172, %v4168
    %v4493 = vpack.c.b16 %v4177, %v4173
    %v4494 = vpack.c.b16 %v4178, %v4174
    %v4495 = vpack.c.b16 %v4179, %v4175
    %v4496 = vpack.c.b16 %v4180, %v4176
    %v4497 = vpack.c.b16 %v4185, %v4181
    %v4498 = vpack.c.b16 %v4186, %v4182
    %v4499 = vpack.c.b16 %v4187, %v4183
    %v4500 = vpack.c.b16 %v4188, %v4184
    %v4501 = vpack.c.b16 %v4193, %v4189
    %v4502 = vpack.c.b16 %v4194, %v4190
    %v4503 = vpack.c.b16 %v4195, %v4191
    %v4504 = vpack.c.b16 %v4196, %v4192
    %v4505 = vpack.c.b16 %v4201, %v4197
    %v4506 = vpack.c.b16 %v4202, %v4198
    %v4507 = vpack.c.b16 %v4203, %v4199
    %v4508 = vpack.c.b16 %v4204, %v4200
    %v4509 = vpack.c.b16 %v4209, %v4205
    %v4510 = vpack.c.b16 %v4210, %v4206
    %v4511 = vpack.c.b16 %v4211, %v4207
    %v4512 = vpack.c.b16 %v4212, %v4208
    %v4513 = vpack.c.b16 %v4217, %v4213
    %v4514 = vpack.c.b16 %v4218, %v4214
    %v4515 = vpack.c.b16 %v4219, %v4215
    %v4516 = vpack.c.b16 %v4220, %v4216
    %v4517 = vpack.c.b16 %v4225, %v4221
    %v4518 = vpack.c.b16 %v4226, %v4222
    %v4519 = vpack.c.b16 %v4227, %v4223
    %v4520 = vpack.c.b16 %v4228, %v4224
    %v4521 = vpack.c.b16 %v4233, %v4229
    %v4522 = vpack.c.b16 %v4234, %v4230
    %v4523 = vpack.c.b16 %v4235, %v4231
    %v4524 = vpack.c.b16 %v4236, %v4232
    %v4525 = vpack.c.b16 %v4241, %v4237
    %v4526 = vpack.c.b16 %v4242, %v4238
    %v4527 = vpack.c.b16 %v4243, %v4239
    %v4528 = vpack.c.b16 %v4244, %v4240
    %v4529 = vpack.c.b16 %v4249, %v4245
    %v4530 = vpack.c.b16 %v4250, %v4246
    %v4531 = vpack.c.b16 %v4251, %v4247
    %v4532 = vpack.c.b16 %v4252, %v4248
    %v4533 = vpack.c.b16 %v4257, %v4253
    %v4534 = vpack.c.b16 %v4258, %v4254
    %v4535 = vpack.c.b16 %v4259, %v4255
    %v4536 = vpack.c.b16 %v4260, %v4256
    %v4537 = vpack.c.b16 %v4265, %v4261
    %v4538 = vpack.c.b16 %v4266, %v4262
    %v4539 = vpack.c.b16 %v4267, %v4263
    %v4540 = vpack.c.b16 %v4268, %v4264
    %v4541 = vpack.c.b16 %v4273, %v4269
    %v4542 = vpack.c.b16 %v4274, %v4270
    %v4543 = vpack.c.b16 %v4275, %v4271
    %v4544 = vpack.c.b16 %v4276, %v4272
    %v4545 = vpack.c.b16 %v4281, %v4277
    %v4546 = vpack.c.b16 %v4282, %v4278
    %v4547 = vpack.c.b16 %v4283, %v4279
    %v4548 = vpack.c.b16 %v4284, %v4280
    %v4549 = vpack.c.b16 %v4289, %v4285
    %v4550 = vpack.c.b16 %v4290, %v4286
    %v4551 = vpack.c.b16 %v4291, %v4287
    %v4552 = vpack.c.b16 %v4292, %v4288
    %v4553 = vpack.c.b16 %v4297, %v4293
    %v4554 = vpack.c.b16 %v4298, %v4294
    %v4555 = vpack.c.b16 %v4299, %v4295
    %v4556 = vpack.c.b16 %v4300, %v4296
    %4813 = vmatpush.bf16.msra.mxu0 %v4329
    %4814 = vmatpush.bf16.msra.mxu0 %v4325
    %4815 = vmatpush.bf16.msra.mxu0 %v4321
    %4816 = vmatpush.bf16.msra.mxu0 %v4317
    %4817 = vmatpush.bf16.msra.mxu0 %v4313
    %4818 = vmatpush.bf16.msra.mxu0 %v4309
    %4819 = vmatpush.bf16.msra.mxu0 %v4305
    %4820 = vmatpush.bf16.msra.mxu0 %v4301
    %4821 = vmatmul.bf16.gmra.mxu0 %v3259
    %v4822 = vpop.f32.mrf.mxu0
    %v4823 = vadd.f32 %v3525, %v4822
    %v4824 = vpop.f32.mrf.mxu0
    %4825 = vdwg.mxu0
    %4826 = vmatpush.bf16.msra.mxu0 %v4361
    %4827 = vmatpush.bf16.msra.mxu0 %v4357
    %4828 = vmatpush.bf16.msra.mxu0 %v4353
    %4829 = vmatpush.bf16.msra.mxu0 %v4349
    %4830 = vmatpush.bf16.msra.mxu0 %v4345
    %4831 = vmatpush.bf16.msra.mxu0 %v4341
    %4832 = vmatpush.bf16.msra.mxu0 %v4337
    %4833 = vmatpush.bf16.msra.mxu0 %v4333
    %4834 = vmatmul.bf16.gmra.mxu0 %v3260
    %v4835 = vpop.f32.mrf.mxu0
    %v4836 = vadd.f32 %v4823, %v4835
    %v4837 = vpop.f32.mrf.mxu0
    %4838 = vdwg.mxu0
    %4839 = vmatpush.bf16.msra.mxu0 %v4393
    %4840 = vmatpush.bf16.msra.mxu0 %v4389
    %4841 = vmatpush.bf16.msra.mxu0 %v4385
    %4842 = vmatpush.bf16.msra.mxu0 %v4381
    %4843 = vmatpush.bf16.msra.mxu0 %v4377
    %4844 = vmatpush.bf16.msra.mxu0 %v4373
    %4845 = vmatpush.bf16.msra.mxu0 %v4369
    %4846 = vmatpush.bf16.msra.mxu0 %v4365
    %4847 = vmatmul.bf16.gmra.mxu0 %v3261
    %v4848 = vpop.f32.mrf.mxu0
    %v4849 = vadd.f32 %v4836, %v4848
    %v4850 = vpop.f32.mrf.mxu0
    %4851 = vdwg.mxu0
    %4852 = vmatpush.bf16.msra.mxu0 %v4425
    %4853 = vmatpush.bf16.msra.mxu0 %v4421
    %4854 = vmatpush.bf16.msra.mxu0 %v4417
    %4855 = vmatpush.bf16.msra.mxu0 %v4413
    %4856 = vmatpush.bf16.msra.mxu0 %v4409
    %4857 = vmatpush.bf16.msra.mxu0 %v4405
    %4858 = vmatpush.bf16.msra.mxu0 %v4401
    %4859 = vmatpush.bf16.msra.mxu0 %v4397
    %4860 = vmatmul.bf16.gmra.mxu0 %v3262
    %v4861 = vpop.f32.mrf.mxu0
    %v4862 = vadd.f32 %v4849, %v4861
    %v4863 = vpop.f32.mrf.mxu0
    %4864 = vdwg.mxu0
    %4865 = vmatpush.bf16.msra.mxu0 %v4457
    %4866 = vmatpush.bf16.msra.mxu0 %v4453
    %4867 = vmatpush.bf16.msra.mxu0 %v4449
    %4868 = vmatpush.bf16.msra.mxu0 %v4445
    %4869 = vmatpush.bf16.msra.mxu0 %v4441
    %4870 = vmatpush.bf16.msra.mxu0 %v4437
    %4871 = vmatpush.bf16.msra.mxu0 %v4433
    %4872 = vmatpush.bf16.msra.mxu0 %v4429
    %4873 = vmatmul.bf16.gmra.mxu0 %v3263
    %v4874 = vpop.f32.mrf.mxu0
    %v4875 = vadd.f32 %v4862, %v4874
    %v4876 = vpop.f32.mrf.mxu0
    %4877 = vdwg.mxu0
    %4878 = vmatpush.bf16.msra.mxu0 %v4489
    %4879 = vmatpush.bf16.msra.mxu0 %v4485
    %4880 = vmatpush.bf16.msra.mxu0 %v4481
    %4881 = vmatpush.bf16.msra.mxu0 %v4477
    %4882 = vmatpush.bf16.msra.mxu0 %v4473
    %4883 = vmatpush.bf16.msra.mxu0 %v4469
    %4884 = vmatpush.bf16.msra.mxu0 %v4465
    %4885 = vmatpush.bf16.msra.mxu0 %v4461
    %4886 = vmatmul.bf16.gmra.mxu0 %v3264
    %v4887 = vpop.f32.mrf.mxu0
    %v4888 = vadd.f32 %v4875, %v4887
    %v4889 = vpop.f32.mrf.mxu0
    %4890 = vdwg.mxu0
    %4891 = vmatpush.bf16.msra.mxu0 %v4521
    %4892 = vmatpush.bf16.msra.mxu0 %v4517
    %4893 = vmatpush.bf16.msra.mxu0 %v4513
    %4894 = vmatpush.bf16.msra.mxu0 %v4509
    %4895 = vmatpush.bf16.msra.mxu0 %v4505
    %4896 = vmatpush.bf16.msra.mxu0 %v4501
    %4897 = vmatpush.bf16.msra.mxu0 %v4497
    %4898 = vmatpush.bf16.msra.mxu0 %v4493
    %4899 = vmatmul.bf16.gmra.mxu0 %v3265
    %v4900 = vpop.f32.mrf.mxu0
    %v4901 = vadd.f32 %v4888, %v4900
    %v4902 = vpop.f32.mrf.mxu0
    %4903 = vdwg.mxu0
    %4904 = vmatpush.bf16.msra.mxu0 %v4553
    %4905 = vmatpush.bf16.msra.mxu0 %v4549
    %4906 = vmatpush.bf16.msra.mxu0 %v4545
    %4907 = vmatpush.bf16.msra.mxu0 %v4541
    %4908 = vmatpush.bf16.msra.mxu0 %v4537
    %4909 = vmatpush.bf16.msra.mxu0 %v4533
    %4910 = vmatpush.bf16.msra.mxu0 %v4529
    %4911 = vmatpush.bf16.msra.mxu0 %v4525
    %4912 = vmatmul.bf16.gmra.mxu0 %v3266
    %v4913 = vpop.f32.mrf.mxu0
    %v4914 = vadd.f32 %v4901, %v4913
    %v4915 = vpop.f32.mrf.mxu0
    %4916 = vdwg.mxu0
    %4917 = vmatpush.bf16.msra.mxu0 %v4330
    %4918 = vmatpush.bf16.msra.mxu0 %v4326
    %4919 = vmatpush.bf16.msra.mxu0 %v4322
    %4920 = vmatpush.bf16.msra.mxu0 %v4318
    %4921 = vmatpush.bf16.msra.mxu0 %v4314
    %4922 = vmatpush.bf16.msra.mxu0 %v4310
    %4923 = vmatpush.bf16.msra.mxu0 %v4306
    %4924 = vmatpush.bf16.msra.mxu0 %v4302
    %4925 = vmatmul.bf16.gmra.mxu0 %v3259
    %v4926 = vpop.f32.mrf.mxu0
    %v4927 = vadd.f32 %v3526, %v4926
    %v4928 = vpop.f32.mrf.mxu0
    %4929 = vdwg.mxu0
    %4930 = vmatpush.bf16.msra.mxu0 %v4362
    %4931 = vmatpush.bf16.msra.mxu0 %v4358
    %4932 = vmatpush.bf16.msra.mxu0 %v4354
    %4933 = vmatpush.bf16.msra.mxu0 %v4350
    %4934 = vmatpush.bf16.msra.mxu0 %v4346
    %4935 = vmatpush.bf16.msra.mxu0 %v4342
    %4936 = vmatpush.bf16.msra.mxu0 %v4338
    %4937 = vmatpush.bf16.msra.mxu0 %v4334
    %4938 = vmatmul.bf16.gmra.mxu0 %v3260
    %v4939 = vpop.f32.mrf.mxu0
    %v4940 = vadd.f32 %v4927, %v4939
    %v4941 = vpop.f32.mrf.mxu0
    %4942 = vdwg.mxu0
    %4943 = vmatpush.bf16.msra.mxu0 %v4394
    %4944 = vmatpush.bf16.msra.mxu0 %v4390
    %4945 = vmatpush.bf16.msra.mxu0 %v4386
    %4946 = vmatpush.bf16.msra.mxu0 %v4382
    %4947 = vmatpush.bf16.msra.mxu0 %v4378
    %4948 = vmatpush.bf16.msra.mxu0 %v4374
    %4949 = vmatpush.bf16.msra.mxu0 %v4370
    %4950 = vmatpush.bf16.msra.mxu0 %v4366
    %4951 = vmatmul.bf16.gmra.mxu0 %v3261
    %v4952 = vpop.f32.mrf.mxu0
    %v4953 = vadd.f32 %v4940, %v4952
    %v4954 = vpop.f32.mrf.mxu0
    %4955 = vdwg.mxu0
    %4956 = vmatpush.bf16.msra.mxu0 %v4426
    %4957 = vmatpush.bf16.msra.mxu0 %v4422
    %4958 = vmatpush.bf16.msra.mxu0 %v4418
    %4959 = vmatpush.bf16.msra.mxu0 %v4414
    %4960 = vmatpush.bf16.msra.mxu0 %v4410
    %4961 = vmatpush.bf16.msra.mxu0 %v4406
    %4962 = vmatpush.bf16.msra.mxu0 %v4402
    %4963 = vmatpush.bf16.msra.mxu0 %v4398
    %4964 = vmatmul.bf16.gmra.mxu0 %v3262
    %v4965 = vpop.f32.mrf.mxu0
    %v4966 = vadd.f32 %v4953, %v4965
    %v4967 = vpop.f32.mrf.mxu0
    %4968 = vdwg.mxu0
    %4969 = vmatpush.bf16.msra.mxu0 %v4458
    %4970 = vmatpush.bf16.msra.mxu0 %v4454
    %4971 = vmatpush.bf16.msra.mxu0 %v4450
    %4972 = vmatpush.bf16.msra.mxu0 %v4446
    %4973 = vmatpush.bf16.msra.mxu0 %v4442
    %4974 = vmatpush.bf16.msra.mxu0 %v4438
    %4975 = vmatpush.bf16.msra.mxu0 %v4434
    %4976 = vmatpush.bf16.msra.mxu0 %v4430
    %4977 = vmatmul.bf16.gmra.mxu0 %v3263
    %v4978 = vpop.f32.mrf.mxu0
    %v4979 = vadd.f32 %v4966, %v4978
    %v4980 = vpop.f32.mrf.mxu0
    %4981 = vdwg.mxu0
    %4982 = vmatpush.bf16.msra.mxu0 %v4490
    %4983 = vmatpush.bf16.msra.mxu0 %v4486
    %4984 = vmatpush.bf16.msra.mxu0 %v4482
    %4985 = vmatpush.bf16.msra.mxu0 %v4478
    %4986 = vmatpush.bf16.msra.mxu0 %v4474
    %4987 = vmatpush.bf16.msra.mxu0 %v4470
    %4988 = vmatpush.bf16.msra.mxu0 %v4466
    %4989 = vmatpush.bf16.msra.mxu0 %v4462
    %4990 = vmatmul.bf16.gmra.mxu0 %v3264
    %v4991 = vpop.f32.mrf.mxu0
    %v4992 = vadd.f32 %v4979, %v4991
    %v4993 = vpop.f32.mrf.mxu0
    %4994 = vdwg.mxu0
    %4995 = vmatpush.bf16.msra.mxu0 %v4522
    %4996 = vmatpush.bf16.msra.mxu0 %v4518
    %4997 = vmatpush.bf16.msra.mxu0 %v4514
    %4998 = vmatpush.bf16.msra.mxu0 %v4510
    %4999 = vmatpush.bf16.msra.mxu0 %v4506
    %5000 = vmatpush.bf16.msra.mxu0 %v4502
    %5001 = vmatpush.bf16.msra.mxu0 %v4498
    %5002 = vmatpush.bf16.msra.mxu0 %v4494
    %5003 = vmatmul.bf16.gmra.mxu0 %v3265
    %v5004 = vpop.f32.mrf.mxu0
    %v5005 = vadd.f32 %v4992, %v5004
    %v5006 = vpop.f32.mrf.mxu0
    %5007 = vdwg.mxu0
    %5008 = vmatpush.bf16.msra.mxu0 %v4554
    %5009 = vmatpush.bf16.msra.mxu0 %v4550
    %5010 = vmatpush.bf16.msra.mxu0 %v4546
    %5011 = vmatpush.bf16.msra.mxu0 %v4542
    %5012 = vmatpush.bf16.msra.mxu0 %v4538
    %5013 = vmatpush.bf16.msra.mxu0 %v4534
    %5014 = vmatpush.bf16.msra.mxu0 %v4530
    %5015 = vmatpush.bf16.msra.mxu0 %v4526
    %5016 = vmatmul.bf16.gmra.mxu0 %v3266
    %v5017 = vpop.f32.mrf.mxu0
    %v5018 = vadd.f32 %v5005, %v5017
    %v5019 = vpop.f32.mrf.mxu0
    %5020 = vdwg.mxu0
    %5021 = vmatpush.bf16.msra.mxu0 %v4331
    %5022 = vmatpush.bf16.msra.mxu0 %v4327
    %5023 = vmatpush.bf16.msra.mxu0 %v4323
    %5024 = vmatpush.bf16.msra.mxu0 %v4319
    %5025 = vmatpush.bf16.msra.mxu0 %v4315
    %5026 = vmatpush.bf16.msra.mxu0 %v4311
    %5027 = vmatpush.bf16.msra.mxu0 %v4307
    %5028 = vmatpush.bf16.msra.mxu0 %v4303
    %5029 = vmatmul.bf16.gmra.mxu0 %v3259
    %v5030 = vpop.f32.mrf.mxu0
    %v5031 = vadd.f32 %v3527, %v5030
    %v5032 = vpop.f32.mrf.mxu0
    %5033 = vdwg.mxu0
    %5034 = vmatpush.bf16.msra.mxu0 %v4363
    %5035 = vmatpush.bf16.msra.mxu0 %v4359
    %5036 = vmatpush.bf16.msra.mxu0 %v4355
    %5037 = vmatpush.bf16.msra.mxu0 %v4351
    %5038 = vmatpush.bf16.msra.mxu0 %v4347
    %5039 = vmatpush.bf16.msra.mxu0 %v4343
    %5040 = vmatpush.bf16.msra.mxu0 %v4339
    %5041 = vmatpush.bf16.msra.mxu0 %v4335
    %5042 = vmatmul.bf16.gmra.mxu0 %v3260
    %v5043 = vpop.f32.mrf.mxu0
    %v5044 = vadd.f32 %v5031, %v5043
    %v5045 = vpop.f32.mrf.mxu0
    %5046 = vdwg.mxu0
    %5047 = vmatpush.bf16.msra.mxu0 %v4395
    %5048 = vmatpush.bf16.msra.mxu0 %v4391
    %5049 = vmatpush.bf16.msra.mxu0 %v4387
    %5050 = vmatpush.bf16.msra.mxu0 %v4383
    %5051 = vmatpush.bf16.msra.mxu0 %v4379
    %5052 = vmatpush.bf16.msra.mxu0 %v4375
    %5053 = vmatpush.bf16.msra.mxu0 %v4371
    %5054 = vmatpush.bf16.msra.mxu0 %v4367
    %5055 = vmatmul.bf16.gmra.mxu0 %v3261
    %v5056 = vpop.f32.mrf.mxu0
    %v5057 = vadd.f32 %v5044, %v5056
    %v5058 = vpop.f32.mrf.mxu0
    %5059 = vdwg.mxu0
    %5060 = vmatpush.bf16.msra.mxu0 %v4427
    %5061 = vmatpush.bf16.msra.mxu0 %v4423
    %5062 = vmatpush.bf16.msra.mxu0 %v4419
    %5063 = vmatpush.bf16.msra.mxu0 %v4415
    %5064 = vmatpush.bf16.msra.mxu0 %v4411
    %5065 = vmatpush.bf16.msra.mxu0 %v4407
    %5066 = vmatpush.bf16.msra.mxu0 %v4403
    %5067 = vmatpush.bf16.msra.mxu0 %v4399
    %5068 = vmatmul.bf16.gmra.mxu0 %v3262
    %v5069 = vpop.f32.mrf.mxu0
    %v5070 = vadd.f32 %v5057, %v5069
    %v5071 = vpop.f32.mrf.mxu0
    %5072 = vdwg.mxu0
    %5073 = vmatpush.bf16.msra.mxu0 %v4459
    %5074 = vmatpush.bf16.msra.mxu0 %v4455
    %5075 = vmatpush.bf16.msra.mxu0 %v4451
    %5076 = vmatpush.bf16.msra.mxu0 %v4447
    %5077 = vmatpush.bf16.msra.mxu0 %v4443
    %5078 = vmatpush.bf16.msra.mxu0 %v4439
    %5079 = vmatpush.bf16.msra.mxu0 %v4435
    %5080 = vmatpush.bf16.msra.mxu0 %v4431
    %5081 = vmatmul.bf16.gmra.mxu0 %v3263
    %v5082 = vpop.f32.mrf.mxu0
    %v5083 = vadd.f32 %v5070, %v5082
    %v5084 = vpop.f32.mrf.mxu0
    %5085 = vdwg.mxu0
    %5086 = vmatpush.bf16.msra.mxu0 %v4491
    %5087 = vmatpush.bf16.msra.mxu0 %v4487
    %5088 = vmatpush.bf16.msra.mxu0 %v4483
    %5089 = vmatpush.bf16.msra.mxu0 %v4479
    %5090 = vmatpush.bf16.msra.mxu0 %v4475
    %5091 = vmatpush.bf16.msra.mxu0 %v4471
    %5092 = vmatpush.bf16.msra.mxu0 %v4467
    %5093 = vmatpush.bf16.msra.mxu0 %v4463
    %5094 = vmatmul.bf16.gmra.mxu0 %v3264
    %v5095 = vpop.f32.mrf.mxu0
    %v5096 = vadd.f32 %v5083, %v5095
    %v5097 = vpop.f32.mrf.mxu0
    %5098 = vdwg.mxu0
    %5099 = vmatpush.bf16.msra.mxu0 %v4523
    %5100 = vmatpush.bf16.msra.mxu0 %v4519
    %5101 = vmatpush.bf16.msra.mxu0 %v4515
    %5102 = vmatpush.bf16.msra.mxu0 %v4511
    %5103 = vmatpush.bf16.msra.mxu0 %v4507
    %5104 = vmatpush.bf16.msra.mxu0 %v4503
    %5105 = vmatpush.bf16.msra.mxu0 %v4499
    %5106 = vmatpush.bf16.msra.mxu0 %v4495
    %5107 = vmatmul.bf16.gmra.mxu0 %v3265
    %v5108 = vpop.f32.mrf.mxu0
    %v5109 = vadd.f32 %v5096, %v5108
    %v5110 = vpop.f32.mrf.mxu0
    %5111 = vdwg.mxu0
    %5112 = vmatpush.bf16.msra.mxu0 %v4555
    %5113 = vmatpush.bf16.msra.mxu0 %v4551
    %5114 = vmatpush.bf16.msra.mxu0 %v4547
    %5115 = vmatpush.bf16.msra.mxu0 %v4543
    %5116 = vmatpush.bf16.msra.mxu0 %v4539
    %5117 = vmatpush.bf16.msra.mxu0 %v4535
    %5118 = vmatpush.bf16.msra.mxu0 %v4531
    %5119 = vmatpush.bf16.msra.mxu0 %v4527
    %5120 = vmatmul.bf16.gmra.mxu0 %v3266
    %v5121 = vpop.f32.mrf.mxu0
    %v5122 = vadd.f32 %v5109, %v5121
    %v5123 = vpop.f32.mrf.mxu0
    %5124 = vdwg.mxu0
    %5125 = vmatpush.bf16.msra.mxu0 %v4332
    %5126 = vmatpush.bf16.msra.mxu0 %v4328
    %5127 = vmatpush.bf16.msra.mxu0 %v4324
    %5128 = vmatpush.bf16.msra.mxu0 %v4320
    %5129 = vmatpush.bf16.msra.mxu0 %v4316
    %5130 = vmatpush.bf16.msra.mxu0 %v4312
    %5131 = vmatpush.bf16.msra.mxu0 %v4308
    %5132 = vmatpush.bf16.msra.mxu0 %v4304
    %5133 = vmatmul.bf16.gmra.mxu0 %v3259
    %v5134 = vpop.f32.mrf.mxu0
    %v5135 = vadd.f32 %v3528, %v5134
    %v5136 = vpop.f32.mrf.mxu0
    %5137 = vdwg.mxu0
    %5138 = vmatpush.bf16.msra.mxu0 %v4364
    %5139 = vmatpush.bf16.msra.mxu0 %v4360
    %5140 = vmatpush.bf16.msra.mxu0 %v4356
    %5141 = vmatpush.bf16.msra.mxu0 %v4352
    %5142 = vmatpush.bf16.msra.mxu0 %v4348
    %5143 = vmatpush.bf16.msra.mxu0 %v4344
    %5144 = vmatpush.bf16.msra.mxu0 %v4340
    %5145 = vmatpush.bf16.msra.mxu0 %v4336
    %5146 = vmatmul.bf16.gmra.mxu0 %v3260
    %v5147 = vpop.f32.mrf.mxu0
    %v5148 = vadd.f32 %v5135, %v5147
    %v5149 = vpop.f32.mrf.mxu0
    %5150 = vdwg.mxu0
    %5151 = vmatpush.bf16.msra.mxu0 %v4396
    %5152 = vmatpush.bf16.msra.mxu0 %v4392
    %5153 = vmatpush.bf16.msra.mxu0 %v4388
    %5154 = vmatpush.bf16.msra.mxu0 %v4384
    %5155 = vmatpush.bf16.msra.mxu0 %v4380
    %5156 = vmatpush.bf16.msra.mxu0 %v4376
    %5157 = vmatpush.bf16.msra.mxu0 %v4372
    %5158 = vmatpush.bf16.msra.mxu0 %v4368
    %5159 = vmatmul.bf16.gmra.mxu0 %v3261
    %v5160 = vpop.f32.mrf.mxu0
    %v5161 = vadd.f32 %v5148, %v5160
    %v5162 = vpop.f32.mrf.mxu0
    %5163 = vdwg.mxu0
    %5164 = vmatpush.bf16.msra.mxu0 %v4428
    %5165 = vmatpush.bf16.msra.mxu0 %v4424
    %5166 = vmatpush.bf16.msra.mxu0 %v4420
    %5167 = vmatpush.bf16.msra.mxu0 %v4416
    %5168 = vmatpush.bf16.msra.mxu0 %v4412
    %5169 = vmatpush.bf16.msra.mxu0 %v4408
    %5170 = vmatpush.bf16.msra.mxu0 %v4404
    %5171 = vmatpush.bf16.msra.mxu0 %v4400
    %5172 = vmatmul.bf16.gmra.mxu0 %v3262
    %v5173 = vpop.f32.mrf.mxu0
    %v5174 = vadd.f32 %v5161, %v5173
    %v5175 = vpop.f32.mrf.mxu0
    %5176 = vdwg.mxu0
    %5177 = vmatpush.bf16.msra.mxu0 %v4460
    %5178 = vmatpush.bf16.msra.mxu0 %v4456
    %5179 = vmatpush.bf16.msra.mxu0 %v4452
    %5180 = vmatpush.bf16.msra.mxu0 %v4448
    %5181 = vmatpush.bf16.msra.mxu0 %v4444
    %5182 = vmatpush.bf16.msra.mxu0 %v4440
    %5183 = vmatpush.bf16.msra.mxu0 %v4436
    %5184 = vmatpush.bf16.msra.mxu0 %v4432
    %5185 = vmatmul.bf16.gmra.mxu0 %v3263
    %v5186 = vpop.f32.mrf.mxu0
    %v5187 = vadd.f32 %v5174, %v5186
    %v5188 = vpop.f32.mrf.mxu0
    %5189 = vdwg.mxu0
    %5190 = vmatpush.bf16.msra.mxu0 %v4492
    %5191 = vmatpush.bf16.msra.mxu0 %v4488
    %5192 = vmatpush.bf16.msra.mxu0 %v4484
    %5193 = vmatpush.bf16.msra.mxu0 %v4480
    %5194 = vmatpush.bf16.msra.mxu0 %v4476
    %5195 = vmatpush.bf16.msra.mxu0 %v4472
    %5196 = vmatpush.bf16.msra.mxu0 %v4468
    %5197 = vmatpush.bf16.msra.mxu0 %v4464
    %5198 = vmatmul.bf16.gmra.mxu0 %v3264
    %v5199 = vpop.f32.mrf.mxu0
    %v5200 = vadd.f32 %v5187, %v5199
    %v5201 = vpop.f32.mrf.mxu0
    %5202 = vdwg.mxu0
    %5203 = vmatpush.bf16.msra.mxu0 %v4524
    %5204 = vmatpush.bf16.msra.mxu0 %v4520
    %5205 = vmatpush.bf16.msra.mxu0 %v4516
    %5206 = vmatpush.bf16.msra.mxu0 %v4512
    %5207 = vmatpush.bf16.msra.mxu0 %v4508
    %5208 = vmatpush.bf16.msra.mxu0 %v4504
    %5209 = vmatpush.bf16.msra.mxu0 %v4500
    %5210 = vmatpush.bf16.msra.mxu0 %v4496
    %5211 = vmatmul.bf16.gmra.mxu0 %v3265
    %v5212 = vpop.f32.mrf.mxu0
    %v5213 = vadd.f32 %v5200, %v5212
    %v5214 = vpop.f32.mrf.mxu0
    %5215 = vdwg.mxu0
    %5216 = vmatpush.bf16.msra.mxu0 %v4556
    %5217 = vmatpush.bf16.msra.mxu0 %v4552
    %5218 = vmatpush.bf16.msra.mxu0 %v4548
    %5219 = vmatpush.bf16.msra.mxu0 %v4544
    %5220 = vmatpush.bf16.msra.mxu0 %v4540
    %5221 = vmatpush.bf16.msra.mxu0 %v4536
    %5222 = vmatpush.bf16.msra.mxu0 %v4532
    %5223 = vmatpush.bf16.msra.mxu0 %v4528
    %5224 = vmatmul.bf16.gmra.mxu0 %v3266
    %v5225 = vpop.f32.mrf.mxu0
    %v5226 = vadd.f32 %v5213, %v5225
    %v5227 = vpop.f32.mrf.mxu0
    %5228 = vdwg.mxu0
    %v5229 = vmul.f32 %v4914, 0.2
    %v5230 = vmul.f32 %v5018, 0.2
    %v5231 = vmul.f32 %v5122, 0.2
    %v5232 = vmul.f32 %v5226, 0.2
    %v5233 = vmax.f32 %v4914, %v5229
    %v5234 = vmax.f32 %v5018, %v5230
    %v5235 = vmax.f32 %v5122, %v5231
    %v5236 = vmax.f32 %v5226, %v5232
    %v5237 = vpack.c.bf16 %v5233, %v5233
    %v5238 = vpack.c.bf16 %v5234, %v5234
    %v5239 = vpack.c.bf16 %v5235, %v5235
    %v5240 = vpack.c.bf16 %v5236, %v5236
    %v5241 = vld [vmem:[#allocation8] sm:$0xff]
    %v5242 = vld [vmem:[#allocation8 + $0x8] sm:$0xff]
    %v5243 = vld [vmem:[#allocation8 + $0x10] sm:$0xff]
    %v5244 = vld [vmem:[#allocation8 + $0x18] sm:$0xff]
    %v5245 = vld [vmem:[#allocation8 + $0x20] sm:$0xff]
    %v5246 = vld [vmem:[#allocation8 + $0x28] sm:$0xff]
    %v5247 = vld [vmem:[#allocation8 + $0x30] sm:$0xff]
    %v5248 = vld [vmem:[#allocation8 + $0x38] sm:$0xff]
    %v5249 = vld [vmem:[#allocation8 + $0x40] sm:$0xff]
    %v5250 = vld [vmem:[#allocation8 + $0x48] sm:$0xff]
    %v5251 = vld [vmem:[#allocation8 + $0x50] sm:$0xff]
    %v5252 = vld [vmem:[#allocation8 + $0x58] sm:$0xff]
    %v5253 = vld [vmem:[#allocation8 + $0x60] sm:$0xff]
    %v5254 = vld [vmem:[#allocation8 + $0x68] sm:$0xff]
    %v5255 = vld [vmem:[#allocation8 + $0x70] sm:$0xff]
    %v5256 = vld [vmem:[#allocation8 + $0x78] sm:$0xff]
    %v5257 = vld [vmem:[#allocation8 + $0x80] sm:$0xff]
    %v5258 = vld [vmem:[#allocation8 + $0x88] sm:$0xff]
    %v5259 = vld [vmem:[#allocation8 + $0x90] sm:$0xff]
    %v5260 = vld [vmem:[#allocation8 + $0x98] sm:$0xff]
    %v5261 = vld [vmem:[#allocation8 + $0xa0] sm:$0xff]
    %v5262 = vld [vmem:[#allocation8 + $0xa8] sm:$0xff]
    %v5263 = vld [vmem:[#allocation8 + $0xb0] sm:$0xff]
    %v5264 = vld [vmem:[#allocation8 + $0xb8] sm:$0xff]
    %v5265 = vld [vmem:[#allocation8 + $0xc0] sm:$0xff]
    %v5266 = vld [vmem:[#allocation8 + $0xc8] sm:$0xff]
    %v5267 = vld [vmem:[#allocation8 + $0xd0] sm:$0xff]
    %v5268 = vld [vmem:[#allocation8 + $0xd8] sm:$0xff]
    %v5269 = vld [vmem:[#allocation8 + $0xe0] sm:$0xff]
    %v5270 = vld [vmem:[#allocation8 + $0xe8] sm:$0xff]
    %v5271 = vld [vmem:[#allocation8 + $0xf0] sm:$0xff]
    %v5272 = vld [vmem:[#allocation8 + $0xf8] sm:$0xff]
    %v5273 = vld [vmem:[#allocation8 + $0x100] sm:$0xff]
    %v5274 = vld [vmem:[#allocation8 + $0x108] sm:$0xff]
    %v5275 = vld [vmem:[#allocation8 + $0x110] sm:$0xff]
    %v5276 = vld [vmem:[#allocation8 + $0x118] sm:$0xff]
    %v5277 = vld [vmem:[#allocation8 + $0x120] sm:$0xff]
    %v5278 = vld [vmem:[#allocation8 + $0x128] sm:$0xff]
    %v5279 = vld [vmem:[#allocation8 + $0x130] sm:$0xff]
    %v5280 = vld [vmem:[#allocation8 + $0x138] sm:$0xff]
    %v5281 = vld [vmem:[#allocation8 + $0x140] sm:$0xff]
    %v5282 = vld [vmem:[#allocation8 + $0x148] sm:$0xff]
    %v5283 = vld [vmem:[#allocation8 + $0x150] sm:$0xff]
    %v5284 = vld [vmem:[#allocation8 + $0x158] sm:$0xff]
    %v5285 = vld [vmem:[#allocation8 + $0x160] sm:$0xff]
    %v5286 = vld [vmem:[#allocation8 + $0x168] sm:$0xff]
    %v5287 = vld [vmem:[#allocation8 + $0x170] sm:$0xff]
    %v5288 = vld [vmem:[#allocation8 + $0x178] sm:$0xff]
    %v5289 = vld [vmem:[#allocation8 + $0x180] sm:$0xff]
    %v5290 = vld [vmem:[#allocation8 + $0x188] sm:$0xff]
    %v5291 = vld [vmem:[#allocation8 + $0x190] sm:$0xff]
    %v5292 = vld [vmem:[#allocation8 + $0x198] sm:$0xff]
    %v5293 = vld [vmem:[#allocation8 + $0x1a0] sm:$0xff]
    %v5294 = vld [vmem:[#allocation8 + $0x1a8] sm:$0xff]
    %v5295 = vld [vmem:[#allocation8 + $0x1b0] sm:$0xff]
    %v5296 = vld [vmem:[#allocation8 + $0x1b8] sm:$0xff]
    %v5297 = vld [vmem:[#allocation8 + $0x1c0] sm:$0xff]
    %v5298 = vld [vmem:[#allocation8 + $0x1c8] sm:$0xff]
    %v5299 = vld [vmem:[#allocation8 + $0x1d0] sm:$0xff]
    %v5300 = vld [vmem:[#allocation8 + $0x1d8] sm:$0xff]
    %v5301 = vld [vmem:[#allocation8 + $0x1e0] sm:$0xff]
    %v5302 = vld [vmem:[#allocation8 + $0x1e8] sm:$0xff]
    %v5303 = vld [vmem:[#allocation8 + $0x1f0] sm:$0xff]
    %v5304 = vld [vmem:[#allocation8 + $0x1f8] sm:$0xff]
    %v5305 = vld [vmem:[#allocation10] sm:$0x3]
    %v5307 = vperm.slane %v5305, 0
    %v5308 = vperm.slane %v5305, 1
    %v5375 = vunpack.c.l.b16 %v5241
    %v5376 = vunpack.c.h.b16 %v5241
    %v5377 = vunpack.c.l.b16 %v5242
    %v5378 = vunpack.c.h.b16 %v5242
    %v5379 = vunpack.c.l.b16 %v5243
    %v5380 = vunpack.c.h.b16 %v5243
    %v5381 = vunpack.c.l.b16 %v5244
    %v5382 = vunpack.c.h.b16 %v5244
    %v5383 = vunpack.c.l.b16 %v5245
    %v5384 = vunpack.c.h.b16 %v5245
    %v5385 = vunpack.c.l.b16 %v5246
    %v5386 = vunpack.c.h.b16 %v5246
    %v5387 = vunpack.c.l.b16 %v5247
    %v5388 = vunpack.c.h.b16 %v5247
    %v5389 = vunpack.c.l.b16 %v5248
    %v5390 = vunpack.c.h.b16 %v5248
    %v5391 = vunpack.c.l.b16 %v5249
    %v5392 = vunpack.c.h.b16 %v5249
    %v5393 = vunpack.c.l.b16 %v5250
    %v5394 = vunpack.c.h.b16 %v5250
    %v5395 = vunpack.c.l.b16 %v5251
    %v5396 = vunpack.c.h.b16 %v5251
    %v5397 = vunpack.c.l.b16 %v5252
    %v5398 = vunpack.c.h.b16 %v5252
    %v5399 = vunpack.c.l.b16 %v5253
    %v5400 = vunpack.c.h.b16 %v5253
    %v5401 = vunpack.c.l.b16 %v5254
    %v5402 = vunpack.c.h.b16 %v5254
    %v5403 = vunpack.c.l.b16 %v5255
    %v5404 = vunpack.c.h.b16 %v5255
    %v5405 = vunpack.c.l.b16 %v5256
    %v5406 = vunpack.c.h.b16 %v5256
    %v5407 = vunpack.c.l.b16 %v5257
    %v5408 = vunpack.c.h.b16 %v5257
    %v5409 = vunpack.c.l.b16 %v5258
    %v5410 = vunpack.c.h.b16 %v5258
    %v5411 = vunpack.c.l.b16 %v5259
    %v5412 = vunpack.c.h.b16 %v5259
    %v5413 = vunpack.c.l.b16 %v5260
    %v5414 = vunpack.c.h.b16 %v5260
    %v5415 = vunpack.c.l.b16 %v5261
    %v5416 = vunpack.c.h.b16 %v5261
    %v5417 = vunpack.c.l.b16 %v5262
    %v5418 = vunpack.c.h.b16 %v5262
    %v5419 = vunpack.c.l.b16 %v5263
    %v5420 = vunpack.c.h.b16 %v5263
    %v5421 = vunpack.c.l.b16 %v5264
    %v5422 = vunpack.c.h.b16 %v5264
    %v5423 = vunpack.c.l.b16 %v5265
    %v5424 = vunpack.c.h.b16 %v5265
    %v5425 = vunpack.c.l.b16 %v5266
    %v5426 = vunpack.c.h.b16 %v5266
    %v5427 = vunpack.c.l.b16 %v5267
    %v5428 = vunpack.c.h.b16 %v5267
    %v5429 = vunpack.c.l.b16 %v5268
    %v5430 = vunpack.c.h.b16 %v5268
    %v5431 = vunpack.c.l.b16 %v5269
    %v5432 = vunpack.c.h.b16 %v5269
    %v5433 = vunpack.c.l.b16 %v5270
    %v5434 = vunpack.c.h.b16 %v5270
    %v5435 = vunpack.c.l.b16 %v5271
    %v5436 = vunpack.c.h.b16 %v5271
    %v5437 = vunpack.c.l.b16 %v5272
    %v5438 = vunpack.c.h.b16 %v5272
    %v5439 = vunpack.c.l.b16 %v5273
    %v5440 = vunpack.c.h.b16 %v5273
    %v5441 = vunpack.c.l.b16 %v5274
    %v5442 = vunpack.c.h.b16 %v5274
    %v5443 = vunpack.c.l.b16 %v5275
    %v5444 = vunpack.c.h.b16 %v5275
    %v5445 = vunpack.c.l.b16 %v5276
    %v5446 = vunpack.c.h.b16 %v5276
    %v5447 = vunpack.c.l.b16 %v5277
    %v5448 = vunpack.c.h.b16 %v5277
    %v5449 = vunpack.c.l.b16 %v5278
    %v5450 = vunpack.c.h.b16 %v5278
    %v5451 = vunpack.c.l.b16 %v5279
    %v5452 = vunpack.c.h.b16 %v5279
    %v5453 = vunpack.c.l.b16 %v5280
    %v5454 = vunpack.c.h.b16 %v5280
    %v5455 = vunpack.c.l.b16 %v5281
    %v5456 = vunpack.c.h.b16 %v5281
    %v5457 = vunpack.c.l.b16 %v5282
    %v5458 = vunpack.c.h.b16 %v5282
    %v5459 = vunpack.c.l.b16 %v5283
    %v5460 = vunpack.c.h.b16 %v5283
    %v5461 = vunpack.c.l.b16 %v5284
    %v5462 = vunpack.c.h.b16 %v5284
    %v5463 = vunpack.c.l.b16 %v5285
    %v5464 = vunpack.c.h.b16 %v5285
    %v5465 = vunpack.c.l.b16 %v5286
    %v5466 = vunpack.c.h.b16 %v5286
    %v5467 = vunpack.c.l.b16 %v5287
    %v5468 = vunpack.c.h.b16 %v5287
    %v5469 = vunpack.c.l.b16 %v5288
    %v5470 = vunpack.c.h.b16 %v5288
    %v5471 = vunpack.c.l.b16 %v5289
    %v5472 = vunpack.c.h.b16 %v5289
    %v5473 = vunpack.c.l.b16 %v5290
    %v5474 = vunpack.c.h.b16 %v5290
    %v5475 = vunpack.c.l.b16 %v5291
    %v5476 = vunpack.c.h.b16 %v5291
    %v5477 = vunpack.c.l.b16 %v5292
    %v5478 = vunpack.c.h.b16 %v5292
    %v5479 = vunpack.c.l.b16 %v5293
    %v5480 = vunpack.c.h.b16 %v5293
    %v5481 = vunpack.c.l.b16 %v5294
    %v5482 = vunpack.c.h.b16 %v5294
    %v5483 = vunpack.c.l.b16 %v5295
    %v5484 = vunpack.c.h.b16 %v5295
    %v5485 = vunpack.c.l.b16 %v5296
    %v5486 = vunpack.c.h.b16 %v5296
    %v5487 = vunpack.c.l.b16 %v5297
    %v5488 = vunpack.c.h.b16 %v5297
    %v5489 = vunpack.c.l.b16 %v5298
    %v5490 = vunpack.c.h.b16 %v5298
    %v5491 = vunpack.c.l.b16 %v5299
    %v5492 = vunpack.c.h.b16 %v5299
    %v5493 = vunpack.c.l.b16 %v5300
    %v5494 = vunpack.c.h.b16 %v5300
    %v5495 = vunpack.c.l.b16 %v5301
    %v5496 = vunpack.c.h.b16 %v5301
    %v5497 = vunpack.c.l.b16 %v5302
    %v5498 = vunpack.c.h.b16 %v5302
    %v5499 = vunpack.c.l.b16 %v5303
    %v5500 = vunpack.c.h.b16 %v5303
    %v5501 = vunpack.c.l.b16 %v5304
    %v5502 = vunpack.c.h.b16 %v5304
    %v5503 = vpack.c.b16 %v5377, %v5375
    %v5504 = vpack.c.b16 %v5378, %v5376
    %v5505 = vpack.c.b16 %v5381, %v5379
    %v5506 = vpack.c.b16 %v5382, %v5380
    %v5507 = vpack.c.b16 %v5385, %v5383
    %v5508 = vpack.c.b16 %v5386, %v5384
    %v5509 = vpack.c.b16 %v5389, %v5387
    %v5510 = vpack.c.b16 %v5390, %v5388
    %v5511 = vpack.c.b16 %v5393, %v5391
    %v5512 = vpack.c.b16 %v5394, %v5392
    %v5513 = vpack.c.b16 %v5397, %v5395
    %v5514 = vpack.c.b16 %v5398, %v5396
    %v5515 = vpack.c.b16 %v5401, %v5399
    %v5516 = vpack.c.b16 %v5402, %v5400
    %v5517 = vpack.c.b16 %v5405, %v5403
    %v5518 = vpack.c.b16 %v5406, %v5404
    %v5519 = vpack.c.b16 %v5409, %v5407
    %v5520 = vpack.c.b16 %v5410, %v5408
    %v5521 = vpack.c.b16 %v5413, %v5411
    %v5522 = vpack.c.b16 %v5414, %v5412
    %v5523 = vpack.c.b16 %v5417, %v5415
    %v5524 = vpack.c.b16 %v5418, %v5416
    %v5525 = vpack.c.b16 %v5421, %v5419
    %v5526 = vpack.c.b16 %v5422, %v5420
    %v5527 = vpack.c.b16 %v5425, %v5423
    %v5528 = vpack.c.b16 %v5426, %v5424
    %v5529 = vpack.c.b16 %v5429, %v5427
    %v5530 = vpack.c.b16 %v5430, %v5428
    %v5531 = vpack.c.b16 %v5433, %v5431
    %v5532 = vpack.c.b16 %v5434, %v5432
    %v5533 = vpack.c.b16 %v5437, %v5435
    %v5534 = vpack.c.b16 %v5438, %v5436
    %v5535 = vpack.c.b16 %v5441, %v5439
    %v5536 = vpack.c.b16 %v5442, %v5440
    %v5537 = vpack.c.b16 %v5445, %v5443
    %v5538 = vpack.c.b16 %v5446, %v5444
    %v5539 = vpack.c.b16 %v5449, %v5447
    %v5540 = vpack.c.b16 %v5450, %v5448
    %v5541 = vpack.c.b16 %v5453, %v5451
    %v5542 = vpack.c.b16 %v5454, %v5452
    %v5543 = vpack.c.b16 %v5457, %v5455
    %v5544 = vpack.c.b16 %v5458, %v5456
    %v5545 = vpack.c.b16 %v5461, %v5459
    %v5546 = vpack.c.b16 %v5462, %v5460
    %v5547 = vpack.c.b16 %v5465, %v5463
    %v5548 = vpack.c.b16 %v5466, %v5464
    %v5549 = vpack.c.b16 %v5469, %v5467
    %v5550 = vpack.c.b16 %v5470, %v5468
    %v5551 = vpack.c.b16 %v5473, %v5471
    %v5552 = vpack.c.b16 %v5474, %v5472
    %v5553 = vpack.c.b16 %v5477, %v5475
    %v5554 = vpack.c.b16 %v5478, %v5476
    %v5555 = vpack.c.b16 %v5481, %v5479
    %v5556 = vpack.c.b16 %v5482, %v5480
    %v5557 = vpack.c.b16 %v5485, %v5483
    %v5558 = vpack.c.b16 %v5486, %v5484
    %v5559 = vpack.c.b16 %v5489, %v5487
    %v5560 = vpack.c.b16 %v5490, %v5488
    %v5561 = vpack.c.b16 %v5493, %v5491
    %v5562 = vpack.c.b16 %v5494, %v5492
    %v5563 = vpack.c.b16 %v5497, %v5495
    %v5564 = vpack.c.b16 %v5498, %v5496
    %v5565 = vpack.c.b16 %v5501, %v5499
    %v5566 = vpack.c.b16 %v5502, %v5500
    %5631 = vmatpush.bf16.msra.mxu0 %v5517
    %5632 = vmatpush.bf16.msra.mxu0 %v5515
    %5633 = vmatpush.bf16.msra.mxu0 %v5513
    %5634 = vmatpush.bf16.msra.mxu0 %v5511
    %5635 = vmatpush.bf16.msra.mxu0 %v5509
    %5636 = vmatpush.bf16.msra.mxu0 %v5507
    %5637 = vmatpush.bf16.msra.mxu0 %v5505
    %5638 = vmatpush.bf16.msra.mxu0 %v5503
    %5639 = vmatmul.bf16.gmra.mxu0 %v5237
    %v5640 = vpop.f32.mrf.mxu0
    %v5641 = vadd.f32 %v5307, %v5640
    %v5642 = vpop.f32.mrf.mxu0
    %5643 = vdwg.mxu0
    %5644 = vmatpush.bf16.msra.mxu0 %v5533
    %5645 = vmatpush.bf16.msra.mxu0 %v5531
    %5646 = vmatpush.bf16.msra.mxu0 %v5529
    %5647 = vmatpush.bf16.msra.mxu0 %v5527
    %5648 = vmatpush.bf16.msra.mxu0 %v5525
    %5649 = vmatpush.bf16.msra.mxu0 %v5523
    %5650 = vmatpush.bf16.msra.mxu0 %v5521
    %5651 = vmatpush.bf16.msra.mxu0 %v5519
    %5652 = vmatmul.bf16.gmra.mxu0 %v5238
    %v5653 = vpop.f32.mrf.mxu0
    %v5654 = vadd.f32 %v5641, %v5653
    %v5655 = vpop.f32.mrf.mxu0
    %5656 = vdwg.mxu0
    %5657 = vmatpush.bf16.msra.mxu0 %v5549
    %5658 = vmatpush.bf16.msra.mxu0 %v5547
    %5659 = vmatpush.bf16.msra.mxu0 %v5545
    %5660 = vmatpush.bf16.msra.mxu0 %v5543
    %5661 = vmatpush.bf16.msra.mxu0 %v5541
    %5662 = vmatpush.bf16.msra.mxu0 %v5539
    %5663 = vmatpush.bf16.msra.mxu0 %v5537
    %5664 = vmatpush.bf16.msra.mxu0 %v5535
    %5665 = vmatmul.bf16.gmra.mxu0 %v5239
    %v5666 = vpop.f32.mrf.mxu0
    %v5667 = vadd.f32 %v5654, %v5666
    %v5668 = vpop.f32.mrf.mxu0
    %5669 = vdwg.mxu0
    %5670 = vmatpush.bf16.msra.mxu0 %v5565
    %5671 = vmatpush.bf16.msra.mxu0 %v5563
    %5672 = vmatpush.bf16.msra.mxu0 %v5561
    %5673 = vmatpush.bf16.msra.mxu0 %v5559
    %5674 = vmatpush.bf16.msra.mxu0 %v5557
    %5675 = vmatpush.bf16.msra.mxu0 %v5555
    %5676 = vmatpush.bf16.msra.mxu0 %v5553
    %5677 = vmatpush.bf16.msra.mxu0 %v5551
    %5678 = vmatmul.bf16.gmra.mxu0 %v5240
    %v5679 = vpop.f32.mrf.mxu0
    %v5680 = vadd.f32 %v5667, %v5679
    %v5681 = vpop.f32.mrf.mxu0
    %5682 = vdwg.mxu0
    %5683 = vmatpush.bf16.msra.mxu0 %v5518
    %5684 = vmatpush.bf16.msra.mxu0 %v5516
    %5685 = vmatpush.bf16.msra.mxu0 %v5514
    %5686 = vmatpush.bf16.msra.mxu0 %v5512
    %5687 = vmatpush.bf16.msra.mxu0 %v5510
    %5688 = vmatpush.bf16.msra.mxu0 %v5508
    %5689 = vmatpush.bf16.msra.mxu0 %v5506
    %5690 = vmatpush.bf16.msra.mxu0 %v5504
    %5691 = vmatmul.bf16.gmra.mxu0 %v5237
    %v5692 = vpop.f32.mrf.mxu0
    %v5693 = vadd.f32 %v5308, %v5692
    %v5694 = vpop.f32.mrf.mxu0
    %5695 = vdwg.mxu0
    %5696 = vmatpush.bf16.msra.mxu0 %v5534
    %5697 = vmatpush.bf16.msra.mxu0 %v5532
    %5698 = vmatpush.bf16.msra.mxu0 %v5530
    %5699 = vmatpush.bf16.msra.mxu0 %v5528
    %5700 = vmatpush.bf16.msra.mxu0 %v5526
    %5701 = vmatpush.bf16.msra.mxu0 %v5524
    %5702 = vmatpush.bf16.msra.mxu0 %v5522
    %5703 = vmatpush.bf16.msra.mxu0 %v5520
    %5704 = vmatmul.bf16.gmra.mxu0 %v5238
    %v5705 = vpop.f32.mrf.mxu0
    %v5706 = vadd.f32 %v5693, %v5705
    %v5707 = vpop.f32.mrf.mxu0
    %5708 = vdwg.mxu0
    %5709 = vmatpush.bf16.msra.mxu0 %v5550
    %5710 = vmatpush.bf16.msra.mxu0 %v5548
    %5711 = vmatpush.bf16.msra.mxu0 %v5546
    %5712 = vmatpush.bf16.msra.mxu0 %v5544
    %5713 = vmatpush.bf16.msra.mxu0 %v5542
    %5714 = vmatpush.bf16.msra.mxu0 %v5540
    %5715 = vmatpush.bf16.msra.mxu0 %v5538
    %5716 = vmatpush.bf16.msra.mxu0 %v5536
    %5717 = vmatmul.bf16.gmra.mxu0 %v5239
    %v5718 = vpop.f32.mrf.mxu0
    %v5719 = vadd.f32 %v5706, %v5718
    %v5720 = vpop.f32.mrf.mxu0
    %5721 = vdwg.mxu0
    %5722 = vmatpush.bf16.msra.mxu0 %v5566
    %5723 = vmatpush.bf16.msra.mxu0 %v5564
    %5724 = vmatpush.bf16.msra.mxu0 %v5562
    %5725 = vmatpush.bf16.msra.mxu0 %v5560
    %5726 = vmatpush.bf16.msra.mxu0 %v5558
    %5727 = vmatpush.bf16.msra.mxu0 %v5556
    %5728 = vmatpush.bf16.msra.mxu0 %v5554
    %5729 = vmatpush.bf16.msra.mxu0 %v5552
    %5730 = vmatmul.bf16.gmra.mxu0 %v5240
    %v5731 = vpop.f32.mrf.mxu0
    %v5732 = vadd.f32 %v5719, %v5731
    %v5733 = vpop.f32.mrf.mxu0
    %5734 = vdwg.mxu0
    %v5735 = vmul.f32 %v5680, 0.2
    %v5736 = vmul.f32 %v5732, 0.2
    %v5737 = vmax.f32 %v5680, %v5735
    %v5738 = vmax.f32 %v5732, %v5736
    %v5739 = vld [vmem:[#allocation11] sm:$0x3]
    %v5741 = vperm.slane %v5739, 0
    %v5742 = vperm.slane %v5739, 1
    %v5745 = vmul.f32 %v5737, %v5741
    %v5746 = vmul.f32 %v5738, %v5742
    %v5747 = vadd.f32 %v5745, %v5746
    %5748 = vadd.xlane.f32.xlu0 %v5747
    %v5749 = vpop.xlane.xlu0 %5748
    %v5750 = vld [vmem:[#allocation2] sm:$0x1]
    %v5752 = vperm.slane %v5750, 0
    %v5754 = vadd.f32 %v5749, %v5752
    %v5755 = vsub.f32 0.0, %v5754
    %v5756 = vmul.f32 %v5755, 1.442695
    %v5757 = vpow.pop %v5756
    %v5758 = vadd.f32 %v5757, 1.0
    %v5759 = vrcp.pop %v5758
    %v5760 = vmul.f32 %v5758, %v5759
    %v5761 = vsub.f32 1.0, %v5760
    %v5762 = vmul.f32 %v5759, %v5761
    %v5763 = vadd.f32 %v5759, %v5762
    %vm5764 = vweird.f32 %v5758
    %vm5765 = vweird.f32 %v5759
    %vm5766 = vmor %vm5764, %vm5765
    %v5767 = vsel %vm5766, %v5759, %v5763
    %v5768 = vand.u32 2147483647, %v5758
    %vm5769 = vcmp.eq.f32.partialorder %v5768, 8.507059e+37
    %v5770 = vand.u32 %v5758, 2147483648
    %v5771 = vor.u32 1.1754944e-38, %v5770
    %v5772 = vsel %vm5769, %v5771, %v5767
    %v5773 = vmul.f32 1.0, %v5772
    %vm5774 = vcmask 7168
    %5775 = vst.msk [vmem:[%s9] sm:$0xff] %vm5774, %v5773
    // Predicated region
    $region62: #{discriminator_forward.1} parent=1 // pred_check
      _
    $region63: #{discriminator_forward.1} parent=1 // pred_check_branch
      %5777 = sbr.rel (0) target = $region65
    $region64: #{discriminator_forward.1} parent=1 // pred_region
      _
    $region65: #{discriminator_forward.1} parent=1 // pred_fallthru
      _
    // Predicated region
    $region66: #{discriminator_forward.1} parent=1 // pred_check
      _
    $region67: #{discriminator_forward.1} parent=1 // pred_check_branch
      %5779 = sbr.rel (0) target = $region69
    $region68: #{discriminator_forward.1} parent=1 // pred_region
      _
    $region69: #{discriminator_forward.1} parent=1 // pred_fallthru
      _
    %5780 = vsyncpa [#allocation4], 1
    %5781 = vsyncpa [#allocation6], 1
    %5782 = vsyncpa [#allocation9], 1
    %5783 = vsyncpa [#allocation12], 1

</llo_original>
